<compile_context>
chip_gen: v6e
topology: v6e:2x2x1
jax: 0.10.0
libtpu: 0.0.40
codegen_flags: <defaults>
</compile_context>

<pallas_src>
import numpy as np
import jax
import jax.numpy as jnp
from jax.experimental import pallas as pl
from jax.experimental.pallas import tpu as pltpu


# ----------------------------------------------------------------------------
# BlockSpec helpers
# ----------------------------------------------------------------------------
def _batched_spec(shape):
    """Per-subgraph block: leading batch dim squeezed, rest taken whole."""
    nd = len(shape) - 1
    blk = (None,) + tuple(int(s) for s in shape[1:])
    return pl.BlockSpec(blk, lambda b, _n=nd: (b,) + (0,) * _n)


def _const_spec(shape):
    """Whole-array block with a constant index map (stays resident across grid steps)."""
    nd = len(shape)
    return pl.BlockSpec(tuple(int(s) for s in shape), lambda b, _n=nd: (0,) * _n)


# ----------------------------------------------------------------------------
# Fused Pallas kernel: 4 RelGraphConv layers + gather + MLP head (one subgraph per grid step)
# ----------------------------------------------------------------------------
def _make_fused_kernel(num_layers, num_relations, latent_dim, n_nodes, n_pairs, multiply_by):
    latent_dim = tuple(int(f) for f in latent_dim)
    R, N, P = int(num_relations), int(n_nodes), int(n_pairs)
    mul = float(multiply_by)

    def kernel(*refs):
        x_ref, adj_ref, sel_ref = refs[0], refs[1], refs[2]
        layer_refs = refs[3:3 + 4 * num_layers]                 # (w_cat, bias, w1u, w1i) per layer
        b1_ref, w2_ref, b2_ref = refs[3 + 4 * num_layers:3 + 4 * num_layers + 3]
        out_ref = refs[-2]                                      # [P, 128] lane-padded head output
        msgs_ref = refs[-1]                                     # VMEM scratch [R*N, fout_max] bf16

        adj = adj_ref[...]                                      # [N, R*N] bf16
        sel = sel_ref[...]                                      # [2P, N]  f32 (users rows, then items)
        h = x_ref[...]                                          # [N, Fin0_pad] f32

        h1 = jnp.zeros((P, 128), jnp.float32)                   # head pre-activation accumulator
        for l in range(num_layers):                             # static, 4 layers
            w_cat_ref = layer_refs[4 * l + 0]                   # [Fin_l(+pad), (1+R)*fout]
            bias_ref = layer_refs[4 * l + 1]                    # [1, fout]
            w1u_ref = layer_refs[4 * l + 2]                     # [fout, 128]
            w1i_ref = layer_refs[4 * l + 3]                     # [fout, 128]
            fout = latent_dim[l]

            # One matmul gives the self-loop term and all relation messages.
            msgs = jnp.dot(h, w_cat_ref[...], preferred_element_type=jnp.float32)  # [N,(1+R)*fout]

            # Stage relation messages as row slabs -> [R*N, fout] bf16, then ONE deep-K
            # propagation matmul instead of R shallow ones.
            for r in range(R):                                  # static, small (R = 3)
                lo = (1 + r) * fout
                msgs_ref[r * N:(r + 1) * N, :fout] = msgs[:, lo:lo + fout].astype(jnp.bfloat16)
            prop = jnp.dot(adj, msgs_ref[:, :fout],
                           preferred_element_type=jnp.float32)                      # [N, fout]

            h = jnp.tanh(msgs[:, :fout] + bias_ref[...] + prop)

            # Head accumulation right away: no [N, 128] concat buffer, no 32-lane offset stores.
            z = jnp.dot(sel, h, preferred_element_type=jnp.float32)                 # [2P, fout]
            h1 = (h1
                  + jnp.dot(z[:P], w1u_ref[...], preferred_element_type=jnp.float32)
                  + jnp.dot(z[P:], w1i_ref[...], preferred_element_type=jnp.float32))

        h1 = jnp.maximum(h1 + b1_ref[...], 0.0)
        o = jnp.dot(h1, w2_ref[...], preferred_element_type=jnp.float32) + b2_ref[...]
        out_ref[...] = jax.nn.sigmoid(o) * mul                  # only lane 0 is meaningful

    return kernel


# ----------------------------------------------------------------------------
# Wrapper: one pallas_call, grid over the batch of subgraphs
# ----------------------------------------------------------------------------
def frgcn_forward(fused, x, adj, user_idx, item_idx, multiply_by=1.0):
    """x: [B, N, Fin] f32, adj: [B, R, N, N] f32, user_idx/item_idx: [B, P] int32."""
    B, N, fin = (int(s) for s in x.shape)
    R = int(adj.shape[1])
    P = int(user_idx.shape[1])
    latent_dim = fused["latent_dim"]
    num_layers = len(latent_dim)
    fout_max = int(max(latent_dim))
    fin_pad = int(fused["fin_pad"])

    x = x.astype(jnp.float32)
    if fin_pad > fin:                                           # pad K of the first matmul (free, exact)
        x = jnp.pad(x, ((0, 0), (0, 0), (0, fin_pad - fin)))

    # Horizontally stacked per-relation adjacency, bf16 (edge norms are small / exactly representable).
    adj_cat = jnp.reshape(jnp.transpose(adj, (0, 2, 1, 3)), (B, N, R * N)).astype(jnp.bfloat16)

    # Stacked one-hot selection matrix: rows 0..P-1 = user nodes, rows P..2P-1 = item nodes.
    idx = jnp.concatenate([user_idx, item_idx], axis=1)         # [B, 2P]
    sel = jax.nn.one_hot(idx, N, dtype=jnp.float32)             # [B, 2P, N]

    inputs = [x, adj_cat, sel]
    in_specs = [_batched_spec(x.shape), _batched_spec(adj_cat.shape), _batched_spec(sel.shape)]
    for layer in fused["layers"]:
        for name in ("w_cat", "bias", "w1u", "w1i"):
            w = layer[name]
            inputs.append(w)
            in_specs.append(_const_spec(w.shape))
    for name in ("b1", "w2_pad", "b2_pad"):
        w = fused[name]
        inputs.append(w)
        in_specs.append(_const_spec(w.shape))

    # VMEM budget from the actually-resident buffers (per-step blocks + weights + scratch),
    # x2 for double-buffering, clamped to a value safe on v5e/v6e/v7x.
    out_lanes = int(fused["w2_pad"].shape[1])
    per_step = 0
    for i, a in enumerate(inputs):
        nb = int(a.size) * a.dtype.itemsize
        if i < 3:                                               # batched inputs: one subgraph block
            nb //= B
        per_step += nb
    per_step += P * out_lanes * 4                               # output block
    scratch_bytes = R * N * fout_max * 2                        # bf16 message stack
    vmem_limit = int(min(64 << 20, max(16 << 20, 2 * per_step + scratch_bytes + (4 << 20))))

    kernel = _make_fused_kernel(num_layers, R, latent_dim, N, P, multiply_by)
    out = pl.pallas_call(
        kernel,
        grid=(B,),
        out_shape=jax.ShapeDtypeStruct((B, P, out_lanes), jnp.float32),
        in_specs=in_specs,
        out_specs=pl.BlockSpec((None, P, out_lanes), lambda b: (b, 0, 0)),
        scratch_shapes=[pltpu.VMEM((R * N, fout_max), jnp.bfloat16)],
        compiler_params=pltpu.CompilerParams(
            dimension_semantics=("parallel",),                  # shards the batch across v7x's 2 TCs
            vmem_limit_bytes=vmem_limit),
    )(*inputs)
    return out[:, :, 0]                                         # [B, P] predicted ratings


# ----------------------------------------------------------------------------
# One-time parameter preparation (eval-mode weights are static)
# ----------------------------------------------------------------------------
def prepare_params(raw, num_relations):
    """Basis expansion, weight stacking, per-layer lin1 splitting, lane padding — done once."""
    latent_dim = [int(layer["bias"].shape[1]) for layer in raw["convs"]]
    sum_latent = int(sum(latent_dim))
    w1 = raw["w1"]                                              # [2*sum_latent, 128]

    layers = []
    off = 0
    fin_pad = None
    for li, layer in enumerate(raw["convs"]):
        # basis decomposition: W_r = sum_b coeff[r, b] * basis[b]
        w_rel = jnp.einsum("rb,bio->rio", layer["coeff"], layer["basis"])        # [R, Fin, Fout]
        w_cat = jnp.concatenate([layer["w_self"]]
                                + [w_rel[r] for r in range(num_relations)], axis=1)
        fin = int(w_cat.shape[0])
        if li == 0:
            fin_pad = max(8, ((fin + 7) // 8) * 8)              # deepen the tiny K of layer 0
            if fin_pad > fin:
                w_cat = jnp.pad(w_cat, ((0, fin_pad - fin), (0, 0)))
        fout = latent_dim[li]
        layers.append(dict(
            w_cat=w_cat,                                        # [Fin(+pad), (1+R)*Fout]
            bias=layer["bias"],                                 # [1, Fout]
            w1u=w1[off:off + fout],                             # [Fout, 128]  (user half of lin1)
            w1i=w1[sum_latent + off:sum_latent + off + fout],   # [Fout, 128]  (item half of lin1)
        ))
        off += fout

    pad_lanes = 128
    w2, b2 = raw["w2"], raw["b2"]
    return dict(
        layers=layers,
        latent_dim=tuple(latent_dim),
        fin_pad=int(fin_pad),
        b1=raw["b1"],                                                   # [1, 128]
        w2_pad=jnp.pad(w2, ((0, 0), (0, pad_lanes - w2.shape[1]))),     # [128, 128]
        b2_pad=jnp.pad(b2, ((0, 0), (0, pad_lanes - b2.shape[1]))),     # [1, 128]
    )


# ----------------------------------------------------------------------------
# Pure-JAX f32 reference (mirrors the PyTorch forward in eval mode), vmapped over subgraphs
# ----------------------------------------------------------------------------
def _frgcn_reference_single(raw, x, adj, user_idx, item_idx, multiply_by):
    h = x.astype(jnp.float32)
    outs = []
    for layer in raw["convs"]:
        w_rel = jnp.einsum("rb,bio->rio", layer["coeff"], layer["basis"])
        acc = h @ layer["w_self"] + layer["bias"]
        for r in range(adj.shape[0]):
            acc = acc + adj[r] @ (h @ w_rel[r])
        h = jnp.tanh(acc)
        outs.append(h)
    cs = jnp.concatenate(outs, axis=1)
    z = jnp.concatenate([cs[user_idx], cs[item_idx]], axis=1)
    h1 = jax.nn.relu(z @ raw["w1"] + raw["b1"])
    o = h1 @ raw["w2"] + raw["b2"]
    return jax.nn.sigmoid(o)[:, 0] * multiply_by


def frgcn_reference(raw, x, adj, user_idx, item_idx, multiply_by=1.0):
    fn = lambda xb, ab, ub, ib: _frgcn_reference_single(raw, xb, ab, ub, ib, multiply_by)
    return jax.vmap(fn)(x, adj, user_idx, item_idx)


# ----------------------------------------------------------------------------
# Deterministic parameter construction
# ----------------------------------------------------------------------------
def init_params(key, in_feats, latent_dim, num_relations, num_bases):
    convs = []
    fin = in_feats
    for fout in latent_dim:
        key, k1, k2, k3, k4 = jax.random.split(key, 5)
        convs.append(dict(
            basis=jax.random.normal(k1, (num_bases, fin, fout), jnp.float32) * 0.1,
            coeff=jax.random.normal(k2, (num_relations, num_bases), jnp.float32) * 0.5,
            w_self=jax.random.normal(k3, (fin, fout), jnp.float32) * 0.1,
            bias=jax.random.normal(k4, (1, fout), jnp.float32) * 0.01,
        ))
        fin = fout
    hidden = 2 * sum(latent_dim)
    key, k1, k2, k3, k4 = jax.random.split(key, 5)
    return dict(
        convs=convs,
        w1=jax.random.normal(k1, (hidden, 128), jnp.float32) * 0.05,
        b1=jax.random.normal(k2, (1, 128), jnp.float32) * 0.01,
        w2=jax.random.normal(k3, (128, 1), jnp.float32) * 0.05,
        b2=jax.random.normal(k4, (1, 1), jnp.float32) * 0.01,
    )


if __name__ == "__main__":
    in_feats = 4
    latent_dim = [32, 32, 32, 32]
    num_relations = 3
    num_bases = 2
    B = 8             # batch of enclosing subgraphs (fills M / both v7x TensorCores)
    N = 16            # nodes per subgraph
    num_pairs = 4     # user/item pairs per subgraph

    key = jax.random.PRNGKey(0)
    key, kp, kx, ka = jax.random.split(key, 4)

    raw_params = init_params(kp, in_feats, latent_dim, num_relations, num_bases)
    fused_params = prepare_params(raw_params, num_relations)    # one-time, eval-mode

    # node features [B, N, in_feats]
    x = jax.random.normal(kx, (B, N, in_feats), jnp.float32)

    # per-relation dense adjacency [B, R, N, N]; entries are the edge "norm" (edge_mask);
    # eval mode => mask is 1.0 on existing edges; no self edges (self-loop handled by W_self).
    adj = jax.random.bernoulli(ka, 0.3, (B, num_relations, N, N)).astype(jnp.float32)
    adj = adj * (1.0 - jnp.eye(N, dtype=jnp.float32))

    # node labels per subgraph: nodes 0..3 are users (nlabel[:,0]==1), 4..7 items (nlabel[:,1]==1)
    user_idx = jnp.tile(jnp.arange(0, num_pairs, dtype=jnp.int32)[None, :], (B, 1))
    item_idx = jnp.tile(jnp.arange(num_pairs, 2 * num_pairs, dtype=jnp.int32)[None, :], (B, 1))

    out = frgcn_forward(fused_params, x, adj, user_idx, item_idx, multiply_by=1.0)
    out = jax.block_until_ready(out)

    ref = frgcn_reference(raw_params, x, adj, user_idx, item_idx, multiply_by=1.0)
    ref = jax.block_until_ready(ref)

    assert out.shape == (B, num_pairs), out.shape
    assert bool(jnp.all(jnp.isfinite(out)))
    assert bool(jnp.all((out >= 0.0) & (out <= 1.0)))            # sigmoid range (multiply_by=1)
    # adjacency + staged relation messages go through the MXU in bf16 (f32 accumulation),
    # so tolerance vs. the pure-f32 reference is set accordingly.
    assert bool(jnp.allclose(out, ref, atol=2e-2, rtol=2e-2)), (out, ref)
    print("KERNEL_OK")
</pallas_src>

<mosaic_0001>
module attributes {stable_mosaic.version = 11 : i64} {
  func.func @kernel(%arg0: i32, %arg1: memref<1x16x8xf32, #tpu.memory_space<vmem>>, %arg2: memref<1x16x48xbf16, #tpu.memory_space<vmem>>, %arg3: memref<1x8x16xf32, #tpu.memory_space<vmem>>, %arg4: memref<8x128xf32, #tpu.memory_space<vmem>>, %arg5: memref<1x32xf32, #tpu.memory_space<vmem>>, %arg6: memref<32x128xf32, #tpu.memory_space<vmem>>, %arg7: memref<32x128xf32, #tpu.memory_space<vmem>>, %arg8: memref<32x128xf32, #tpu.memory_space<vmem>>, %arg9: memref<1x32xf32, #tpu.memory_space<vmem>>, %arg10: memref<32x128xf32, #tpu.memory_space<vmem>>, %arg11: memref<32x128xf32, #tpu.memory_space<vmem>>, %arg12: memref<32x128xf32, #tpu.memory_space<vmem>>, %arg13: memref<1x32xf32, #tpu.memory_space<vmem>>, %arg14: memref<32x128xf32, #tpu.memory_space<vmem>>, %arg15: memref<32x128xf32, #tpu.memory_space<vmem>>, %arg16: memref<32x128xf32, #tpu.memory_space<vmem>>, %arg17: memref<1x32xf32, #tpu.memory_space<vmem>>, %arg18: memref<32x128xf32, #tpu.memory_space<vmem>>, %arg19: memref<32x128xf32, #tpu.memory_space<vmem>>, %arg20: memref<1x128xf32, #tpu.memory_space<vmem>>, %arg21: memref<128x128xf32, #tpu.memory_space<vmem>>, %arg22: memref<1x128xf32, #tpu.memory_space<vmem>>, %arg23: memref<1x4x128xf32, #tpu.memory_space<vmem>>, %arg24: memref<48x32xbf16, #tpu.memory_space<vmem>>) attributes {dimension_semantics = [#tpu.dimension_semantics<parallel>], iteration_bounds = array<i64: 8>, scalar_prefetch = 0 : i64, scratch_operands = 1 : i64, tpu.core_type = #tpu.core_type<tc>, window_params = [{transform_indices = @transform_0, window_bounds = array<i64: 1, 16, 8>}, {transform_indices = @transform_1, window_bounds = array<i64: 1, 16, 48>}, {transform_indices = @transform_2, window_bounds = array<i64: 1, 8, 16>}, {pipeline_mode = #tpu.pipeline_mode<synchronous>, transform_indices = @transform_3, window_bounds = array<i64: 8, 128>}, {pipeline_mode = #tpu.pipeline_mode<synchronous>, transform_indices = @transform_4, window_bounds = array<i64: 1, 32>}, {pipeline_mode = #tpu.pipeline_mode<synchronous>, transform_indices = @transform_5, window_bounds = array<i64: 32, 128>}, {pipeline_mode = #tpu.pipeline_mode<synchronous>, transform_indices = @transform_6, window_bounds = array<i64: 32, 128>}, {pipeline_mode = #tpu.pipeline_mode<synchronous>, transform_indices = @transform_7, window_bounds = array<i64: 32, 128>}, {pipeline_mode = #tpu.pipeline_mode<synchronous>, transform_indices = @transform_8, window_bounds = array<i64: 1, 32>}, {pipeline_mode = #tpu.pipeline_mode<synchronous>, transform_indices = @transform_9, window_bounds = array<i64: 32, 128>}, {pipeline_mode = #tpu.pipeline_mode<synchronous>, transform_indices = @transform_10, window_bounds = array<i64: 32, 128>}, {pipeline_mode = #tpu.pipeline_mode<synchronous>, transform_indices = @transform_11, window_bounds = array<i64: 32, 128>}, {pipeline_mode = #tpu.pipeline_mode<synchronous>, transform_indices = @transform_12, window_bounds = array<i64: 1, 32>}, {pipeline_mode = #tpu.pipeline_mode<synchronous>, transform_indices = @transform_13, window_bounds = array<i64: 32, 128>}, {pipeline_mode = #tpu.pipeline_mode<synchronous>, transform_indices = @transform_14, window_bounds = array<i64: 32, 128>}, {pipeline_mode = #tpu.pipeline_mode<synchronous>, transform_indices = @transform_15, window_bounds = array<i64: 32, 128>}, {pipeline_mode = #tpu.pipeline_mode<synchronous>, transform_indices = @transform_16, window_bounds = array<i64: 1, 32>}, {pipeline_mode = #tpu.pipeline_mode<synchronous>, transform_indices = @transform_17, window_bounds = array<i64: 32, 128>}, {pipeline_mode = #tpu.pipeline_mode<synchronous>, transform_indices = @transform_18, window_bounds = array<i64: 32, 128>}, {pipeline_mode = #tpu.pipeline_mode<synchronous>, transform_indices = @transform_19, window_bounds = array<i64: 1, 128>}, {pipeline_mode = #tpu.pipeline_mode<synchronous>, transform_indices = @transform_20, window_bounds = array<i64: 128, 128>}, {pipeline_mode = #tpu.pipeline_mode<synchronous>, transform_indices = @transform_21, window_bounds = array<i64: 1, 128>}, {transform_indices = @transform_22, window_bounds = array<i64: 1, 4, 128>}]} {
    %c0 = arith.constant 0 : index
    %c0_0 = arith.constant 0 : index
    %c0_1 = arith.constant 0 : index
    %0 = vector.load %arg2[%c0, %c0_0, %c0_1] : memref<1x16x48xbf16, #tpu.memory_space<vmem>>, vector<1x16x48xbf16>
    %1 = vector.shape_cast %0 : vector<1x16x48xbf16> to vector<16x48xbf16>
    %c0_2 = arith.constant 0 : index
    %c0_3 = arith.constant 0 : index
    %c0_4 = arith.constant 0 : index
    %2 = vector.load %arg3[%c0_2, %c0_3, %c0_4] : memref<1x8x16xf32, #tpu.memory_space<vmem>>, vector<1x8x16xf32>
    %3 = vector.shape_cast %2 : vector<1x8x16xf32> to vector<8x16xf32>
    %c0_5 = arith.constant 0 : index
    %c0_6 = arith.constant 0 : index
    %c0_7 = arith.constant 0 : index
    %4 = vector.load %arg1[%c0_5, %c0_6, %c0_7] : memref<1x16x8xf32, #tpu.memory_space<vmem>>, vector<1x16x8xf32>
    %5 = vector.shape_cast %4 : vector<1x16x8xf32> to vector<16x8xf32>
    %cst = arith.constant 0.000000e+00 : f32
    %6 = vector.broadcast %cst : f32 to vector<4x128xf32>
    %c0_8 = arith.constant 0 : index
    %c0_9 = arith.constant 0 : index
    %7 = vector.load %arg4[%c0_8, %c0_9] : memref<8x128xf32, #tpu.memory_space<vmem>>, vector<8x128xf32>
    %cst_10 = arith.constant dense<0.000000e+00> : vector<16x128xf32>
    %8 = tpu.matmul %5, %7, %cst_10 {dimension_numbers = #tpu.dot_dimension_numbers<[1], [0], [0], [1], [0, 0, 1, 1], [], []>} : vector<16x8xf32>, vector<8x128xf32>, vector<16x128xf32> -> vector<16x128xf32>
    %9 = vector.extract_strided_slice %8 {offsets = [0, 32], sizes = [16, 32], strides = [1, 1]} : vector<16x128xf32> to vector<16x32xf32>
    %10 = arith.truncf %9 : vector<16x32xf32> to vector<16x32xbf16>
    %c0_11 = arith.constant 0 : index
    %c0_12 = arith.constant 0 : index
    %11 = vector.load %arg24[%c0_11, %c0_12] : memref<48x32xbf16, #tpu.memory_space<vmem>>, vector<16x32xbf16>
    tpu.vector_store %arg24[%c0_11, %c0_12], %10 {strides = array<i32>} : memref<48x32xbf16, #tpu.memory_space<vmem>>, vector<16x32xbf16>,
    %12 = vector.extract_strided_slice %8 {offsets = [0, 64], sizes = [16, 32], strides = [1, 1]} : vector<16x128xf32> to vector<16x32xf32>
    %13 = arith.truncf %12 : vector<16x32xf32> to vector<16x32xbf16>
    %c16 = arith.constant 16 : index
    %c0_13 = arith.constant 0 : index
    %14 = vector.load %arg24[%c16, %c0_13] : memref<48x32xbf16, #tpu.memory_space<vmem>>, vector<16x32xbf16>
    tpu.vector_store %arg24[%c16, %c0_13], %13 {strides = array<i32>} : memref<48x32xbf16, #tpu.memory_space<vmem>>, vector<16x32xbf16>,
    %15 = vector.extract_strided_slice %8 {offsets = [0, 96], sizes = [16, 32], strides = [1, 1]} : vector<16x128xf32> to vector<16x32xf32>
    %16 = arith.truncf %15 : vector<16x32xf32> to vector<16x32xbf16>
    %c32 = arith.constant 32 : index
    %c0_14 = arith.constant 0 : index
    %17 = vector.load %arg24[%c32, %c0_14] : memref<48x32xbf16, #tpu.memory_space<vmem>>, vector<16x32xbf16>
    tpu.vector_store %arg24[%c32, %c0_14], %16 {strides = array<i32>} : memref<48x32xbf16, #tpu.memory_space<vmem>>, vector<16x32xbf16>,
    %c0_15 = arith.constant 0 : index
    %c0_16 = arith.constant 0 : index
    %18 = vector.load %arg24[%c0_15, %c0_16] : memref<48x32xbf16, #tpu.memory_space<vmem>>, vector<48x32xbf16>
    %cst_17 = arith.constant dense<0.000000e+00> : vector<16x32xf32>
    %19 = tpu.matmul %1, %18, %cst_17 {dimension_numbers = #tpu.dot_dimension_numbers<[1], [0], [0], [1], [0, 0, 1, 1], [], []>} : vector<16x48xbf16>, vector<48x32xbf16>, vector<16x32xf32> -> vector<16x32xf32>
    %20 = vector.extract_strided_slice %8 {offsets = [0, 0], sizes = [16, 32], strides = [1, 1]} : vector<16x128xf32> to vector<16x32xf32>
    %c0_18 = arith.constant 0 : index
    %c0_19 = arith.constant 0 : index
    %21 = vector.load %arg5[%c0_18, %c0_19] : memref<1x32xf32, #tpu.memory_space<vmem>>, vector<1x32xf32>
    %22 = vector.broadcast %21 : vector<1x32xf32> to vector<16x32xf32>
    %23 = arith.addf %20, %22 : vector<16x32xf32>
    %24 = arith.addf %23, %19 : vector<16x32xf32>
    %25 = math.tanh %24 : vector<16x32xf32>
    %cst_20 = arith.constant dense<0.000000e+00> : vector<8x32xf32>
    %26 = tpu.matmul %3, %25, %cst_20 {dimension_numbers = #tpu.dot_dimension_numbers<[1], [0], [0], [1], [0, 0, 1, 1], [], []>} : vector<8x16xf32>, vector<16x32xf32>, vector<8x32xf32> -> vector<8x32xf32>
    %27 = vector.extract_strided_slice %26 {offsets = [0, 0], sizes = [4, 32], strides = [1, 1]} : vector<8x32xf32> to vector<4x32xf32>
    %c0_21 = arith.constant 0 : index
    %c0_22 = arith.constant 0 : index
    %28 = vector.load %arg6[%c0_21, %c0_22] : memref<32x128xf32, #tpu.memory_space<vmem>>, vector<32x128xf32>
    %cst_23 = arith.constant dense<0.000000e+00> : vector<4x128xf32>
    %29 = tpu.matmul %27, %28, %cst_23 {dimension_numbers = #tpu.dot_dimension_numbers<[1], [0], [0], [1], [0, 0, 1, 1], [], []>} : vector<4x32xf32>, vector<32x128xf32>, vector<4x128xf32> -> vector<4x128xf32>
    %30 = arith.addf %6, %29 : vector<4x128xf32>
    %31 = vector.extract_strided_slice %26 {offsets = [4, 0], sizes = [4, 32], strides = [1, 1]} : vector<8x32xf32> to vector<4x32xf32>
    %c0_24 = arith.constant 0 : index
    %c0_25 = arith.constant 0 : index
    %32 = vector.load %arg7[%c0_24, %c0_25] : memref<32x128xf32, #tpu.memory_space<vmem>>, vector<32x128xf32>
    %cst_26 = arith.constant dense<0.000000e+00> : vector<4x128xf32>
    %33 = tpu.matmul %31, %32, %cst_26 {dimension_numbers = #tpu.dot_dimension_numbers<[1], [0], [0], [1], [0, 0, 1, 1], [], []>} : vector<4x32xf32>, vector<32x128xf32>, vector<4x128xf32> -> vector<4x128xf32>
    %34 = arith.addf %30, %33 : vector<4x128xf32>
    %c0_27 = arith.constant 0 : index
    %c0_28 = arith.constant 0 : index
    %35 = vector.load %arg8[%c0_27, %c0_28] : memref<32x128xf32, #tpu.memory_space<vmem>>, vector<32x128xf32>
    %cst_29 = arith.constant dense<0.000000e+00> : vector<16x128xf32>
    %36 = tpu.matmul %25, %35, %cst_29 {dimension_numbers = #tpu.dot_dimension_numbers<[1], [0], [0], [1], [0, 0, 1, 1], [], []>} : vector<16x32xf32>, vector<32x128xf32>, vector<16x128xf32> -> vector<16x128xf32>
    %37 = vector.extract_strided_slice %36 {offsets = [0, 32], sizes = [16, 32], strides = [1, 1]} : vector<16x128xf32> to vector<16x32xf32>
    %38 = arith.truncf %37 : vector<16x32xf32> to vector<16x32xbf16>
    %c0_30 = arith.constant 0 : index
    %c0_31 = arith.constant 0 : index
    %39 = vector.load %arg24[%c0_30, %c0_31] : memref<48x32xbf16, #tpu.memory_space<vmem>>, vector<16x32xbf16>
    tpu.vector_store %arg24[%c0_30, %c0_31], %38 {strides = array<i32>} : memref<48x32xbf16, #tpu.memory_space<vmem>>, vector<16x32xbf16>,
    %40 = vector.extract_strided_slice %36 {offsets = [0, 64], sizes = [16, 32], strides = [1, 1]} : vector<16x128xf32> to vector<16x32xf32>
    %41 = arith.truncf %40 : vector<16x32xf32> to vector<16x32xbf16>
    %c16_32 = arith.constant 16 : index
    %c0_33 = arith.constant 0 : index
    %42 = vector.load %arg24[%c16_32, %c0_33] : memref<48x32xbf16, #tpu.memory_space<vmem>>, vector<16x32xbf16>
    tpu.vector_store %arg24[%c16_32, %c0_33], %41 {strides = array<i32>} : memref<48x32xbf16, #tpu.memory_space<vmem>>, vector<16x32xbf16>,
    %43 = vector.extract_strided_slice %36 {offsets = [0, 96], sizes = [16, 32], strides = [1, 1]} : vector<16x128xf32> to vector<16x32xf32>
    %44 = arith.truncf %43 : vector<16x32xf32> to vector<16x32xbf16>
    %c32_34 = arith.constant 32 : index
    %c0_35 = arith.constant 0 : index
    %45 = vector.load %arg24[%c32_34, %c0_35] : memref<48x32xbf16, #tpu.memory_space<vmem>>, vector<16x32xbf16>
    tpu.vector_store %arg24[%c32_34, %c0_35], %44 {strides = array<i32>} : memref<48x32xbf16, #tpu.memory_space<vmem>>, vector<16x32xbf16>,
    %c0_36 = arith.constant 0 : index
    %c0_37 = arith.constant 0 : index
    %46 = vector.load %arg24[%c0_36, %c0_37] : memref<48x32xbf16, #tpu.memory_space<vmem>>, vector<48x32xbf16>
    %cst_38 = arith.constant dense<0.000000e+00> : vector<16x32xf32>
    %47 = tpu.matmul %1, %46, %cst_38 {dimension_numbers = #tpu.dot_dimension_numbers<[1], [0], [0], [1], [0, 0, 1, 1], [], []>} : vector<16x48xbf16>, vector<48x32xbf16>, vector<16x32xf32> -> vector<16x32xf32>
    %48 = vector.extract_strided_slice %36 {offsets = [0, 0], sizes = [16, 32], strides = [1, 1]} : vector<16x128xf32> to vector<16x32xf32>
    %c0_39 = arith.constant 0 : index
    %c0_40 = arith.constant 0 : index
    %49 = vector.load %arg9[%c0_39, %c0_40] : memref<1x32xf32, #tpu.memory_space<vmem>>, vector<1x32xf32>
    %50 = vector.broadcast %49 : vector<1x32xf32> to vector<16x32xf32>
    %51 = arith.addf %48, %50 : vector<16x32xf32>
    %52 = arith.addf %51, %47 : vector<16x32xf32>
    %53 = math.tanh %52 : vector<16x32xf32>
    %cst_41 = arith.constant dense<0.000000e+00> : vector<8x32xf32>
    %54 = tpu.matmul %3, %53, %cst_41 {dimension_numbers = #tpu.dot_dimension_numbers<[1], [0], [0], [1], [0, 0, 1, 1], [], []>} : vector<8x16xf32>, vector<16x32xf32>, vector<8x32xf32> -> vector<8x32xf32>
    %55 = vector.extract_strided_slice %54 {offsets = [0, 0], sizes = [4, 32], strides = [1, 1]} : vector<8x32xf32> to vector<4x32xf32>
    %c0_42 = arith.constant 0 : index
    %c0_43 = arith.constant 0 : index
    %56 = vector.load %arg10[%c0_42, %c0_43] : memref<32x128xf32, #tpu.memory_space<vmem>>, vector<32x128xf32>
    %cst_44 = arith.constant dense<0.000000e+00> : vector<4x128xf32>
    %57 = tpu.matmul %55, %56, %cst_44 {dimension_numbers = #tpu.dot_dimension_numbers<[1], [0], [0], [1], [0, 0, 1, 1], [], []>} : vector<4x32xf32>, vector<32x128xf32>, vector<4x128xf32> -> vector<4x128xf32>
    %58 = arith.addf %34, %57 : vector<4x128xf32>
    %59 = vector.extract_strided_slice %54 {offsets = [4, 0], sizes = [4, 32], strides = [1, 1]} : vector<8x32xf32> to vector<4x32xf32>
    %c0_45 = arith.constant 0 : index
    %c0_46 = arith.constant 0 : index
    %60 = vector.load %arg11[%c0_45, %c0_46] : memref<32x128xf32, #tpu.memory_space<vmem>>, vector<32x128xf32>
    %cst_47 = arith.constant dense<0.000000e+00> : vector<4x128xf32>
    %61 = tpu.matmul %59, %60, %cst_47 {dimension_numbers = #tpu.dot_dimension_numbers<[1], [0], [0], [1], [0, 0, 1, 1], [], []>} : vector<4x32xf32>, vector<32x128xf32>, vector<4x128xf32> -> vector<4x128xf32>
    %62 = arith.addf %58, %61 : vector<4x128xf32>
    %c0_48 = arith.constant 0 : index
    %c0_49 = arith.constant 0 : index
    %63 = vector.load %arg12[%c0_48, %c0_49] : memref<32x128xf32, #tpu.memory_space<vmem>>, vector<32x128xf32>
    %cst_50 = arith.constant dense<0.000000e+00> : vector<16x128xf32>
    %64 = tpu.matmul %53, %63, %cst_50 {dimension_numbers = #tpu.dot_dimension_numbers<[1], [0], [0], [1], [0, 0, 1, 1], [], []>} : vector<16x32xf32>, vector<32x128xf32>, vector<16x128xf32> -> vector<16x128xf32>
    %65 = vector.extract_strided_slice %64 {offsets = [0, 32], sizes = [16, 32], strides = [1, 1]} : vector<16x128xf32> to vector<16x32xf32>
    %66 = arith.truncf %65 : vector<16x32xf32> to vector<16x32xbf16>
    %c0_51 = arith.constant 0 : index
    %c0_52 = arith.constant 0 : index
    %67 = vector.load %arg24[%c0_51, %c0_52] : memref<48x32xbf16, #tpu.memory_space<vmem>>, vector<16x32xbf16>
    tpu.vector_store %arg24[%c0_51, %c0_52], %66 {strides = array<i32>} : memref<48x32xbf16, #tpu.memory_space<vmem>>, vector<16x32xbf16>,
    %68 = vector.extract_strided_slice %64 {offsets = [0, 64], sizes = [16, 32], strides = [1, 1]} : vector<16x128xf32> to vector<16x32xf32>
    %69 = arith.truncf %68 : vector<16x32xf32> to vector<16x32xbf16>
    %c16_53 = arith.constant 16 : index
    %c0_54 = arith.constant 0 : index
    %70 = vector.load %arg24[%c16_53, %c0_54] : memref<48x32xbf16, #tpu.memory_space<vmem>>, vector<16x32xbf16>
    tpu.vector_store %arg24[%c16_53, %c0_54], %69 {strides = array<i32>} : memref<48x32xbf16, #tpu.memory_space<vmem>>, vector<16x32xbf16>,
    %71 = vector.extract_strided_slice %64 {offsets = [0, 96], sizes = [16, 32], strides = [1, 1]} : vector<16x128xf32> to vector<16x32xf32>
    %72 = arith.truncf %71 : vector<16x32xf32> to vector<16x32xbf16>
    %c32_55 = arith.constant 32 : index
    %c0_56 = arith.constant 0 : index
    %73 = vector.load %arg24[%c32_55, %c0_56] : memref<48x32xbf16, #tpu.memory_space<vmem>>, vector<16x32xbf16>
    tpu.vector_store %arg24[%c32_55, %c0_56], %72 {strides = array<i32>} : memref<48x32xbf16, #tpu.memory_space<vmem>>, vector<16x32xbf16>,
    %c0_57 = arith.constant 0 : index
    %c0_58 = arith.constant 0 : index
    %74 = vector.load %arg24[%c0_57, %c0_58] : memref<48x32xbf16, #tpu.memory_space<vmem>>, vector<48x32xbf16>
    %cst_59 = arith.constant dense<0.000000e+00> : vector<16x32xf32>
    %75 = tpu.matmul %1, %74, %cst_59 {dimension_numbers = #tpu.dot_dimension_numbers<[1], [0], [0], [1], [0, 0, 1, 1], [], []>} : vector<16x48xbf16>, vector<48x32xbf16>, vector<16x32xf32> -> vector<16x32xf32>
    %76 = vector.extract_strided_slice %64 {offsets = [0, 0], sizes = [16, 32], strides = [1, 1]} : vector<16x128xf32> to vector<16x32xf32>
    %c0_60 = arith.constant 0 : index
    %c0_61 = arith.constant 0 : index
    %77 = vector.load %arg13[%c0_60, %c0_61] : memref<1x32xf32, #tpu.memory_space<vmem>>, vector<1x32xf32>
    %78 = vector.broadcast %77 : vector<1x32xf32> to vector<16x32xf32>
    %79 = arith.addf %76, %78 : vector<16x32xf32>
    %80 = arith.addf %79, %75 : vector<16x32xf32>
    %81 = math.tanh %80 : vector<16x32xf32>
    %cst_62 = arith.constant dense<0.000000e+00> : vector<8x32xf32>
    %82 = tpu.matmul %3, %81, %cst_62 {dimension_numbers = #tpu.dot_dimension_numbers<[1], [0], [0], [1], [0, 0, 1, 1], [], []>} : vector<8x16xf32>, vector<16x32xf32>, vector<8x32xf32> -> vector<8x32xf32>
    %83 = vector.extract_strided_slice %82 {offsets = [0, 0], sizes = [4, 32], strides = [1, 1]} : vector<8x32xf32> to vector<4x32xf32>
    %c0_63 = arith.constant 0 : index
    %c0_64 = arith.constant 0 : index
    %84 = vector.load %arg14[%c0_63, %c0_64] : memref<32x128xf32, #tpu.memory_space<vmem>>, vector<32x128xf32>
    %cst_65 = arith.constant dense<0.000000e+00> : vector<4x128xf32>
    %85 = tpu.matmul %83, %84, %cst_65 {dimension_numbers = #tpu.dot_dimension_numbers<[1], [0], [0], [1], [0, 0, 1, 1], [], []>} : vector<4x32xf32>, vector<32x128xf32>, vector<4x128xf32> -> vector<4x128xf32>
    %86 = arith.addf %62, %85 : vector<4x128xf32>
    %87 = vector.extract_strided_slice %82 {offsets = [4, 0], sizes = [4, 32], strides = [1, 1]} : vector<8x32xf32> to vector<4x32xf32>
    %c0_66 = arith.constant 0 : index
    %c0_67 = arith.constant 0 : index
    %88 = vector.load %arg15[%c0_66, %c0_67] : memref<32x128xf32, #tpu.memory_space<vmem>>, vector<32x128xf32>
    %cst_68 = arith.constant dense<0.000000e+00> : vector<4x128xf32>
    %89 = tpu.matmul %87, %88, %cst_68 {dimension_numbers = #tpu.dot_dimension_numbers<[1], [0], [0], [1], [0, 0, 1, 1], [], []>} : vector<4x32xf32>, vector<32x128xf32>, vector<4x128xf32> -> vector<4x128xf32>
    %90 = arith.addf %86, %89 : vector<4x128xf32>
    %c0_69 = arith.constant 0 : index
    %c0_70 = arith.constant 0 : index
    %91 = vector.load %arg16[%c0_69, %c0_70] : memref<32x128xf32, #tpu.memory_space<vmem>>, vector<32x128xf32>
    %cst_71 = arith.constant dense<0.000000e+00> : vector<16x128xf32>
    %92 = tpu.matmul %81, %91, %cst_71 {dimension_numbers = #tpu.dot_dimension_numbers<[1], [0], [0], [1], [0, 0, 1, 1], [], []>} : vector<16x32xf32>, vector<32x128xf32>, vector<16x128xf32> -> vector<16x128xf32>
    %93 = vector.extract_strided_slice %92 {offsets = [0, 32], sizes = [16, 32], strides = [1, 1]} : vector<16x128xf32> to vector<16x32xf32>
    %94 = arith.truncf %93 : vector<16x32xf32> to vector<16x32xbf16>
    %c0_72 = arith.constant 0 : index
    %c0_73 = arith.constant 0 : index
    %95 = vector.load %arg24[%c0_72, %c0_73] : memref<48x32xbf16, #tpu.memory_space<vmem>>, vector<16x32xbf16>
    tpu.vector_store %arg24[%c0_72, %c0_73], %94 {strides = array<i32>} : memref<48x32xbf16, #tpu.memory_space<vmem>>, vector<16x32xbf16>,
    %96 = vector.extract_strided_slice %92 {offsets = [0, 64], sizes = [16, 32], strides = [1, 1]} : vector<16x128xf32> to vector<16x32xf32>
    %97 = arith.truncf %96 : vector<16x32xf32> to vector<16x32xbf16>
    %c16_74 = arith.constant 16 : index
    %c0_75 = arith.constant 0 : index
    %98 = vector.load %arg24[%c16_74, %c0_75] : memref<48x32xbf16, #tpu.memory_space<vmem>>, vector<16x32xbf16>
    tpu.vector_store %arg24[%c16_74, %c0_75], %97 {strides = array<i32>} : memref<48x32xbf16, #tpu.memory_space<vmem>>, vector<16x32xbf16>,
    %99 = vector.extract_strided_slice %92 {offsets = [0, 96], sizes = [16, 32], strides = [1, 1]} : vector<16x128xf32> to vector<16x32xf32>
    %100 = arith.truncf %99 : vector<16x32xf32> to vector<16x32xbf16>
    %c32_76 = arith.constant 32 : index
    %c0_77 = arith.constant 0 : index
    %101 = vector.load %arg24[%c32_76, %c0_77] : memref<48x32xbf16, #tpu.memory_space<vmem>>, vector<16x32xbf16>
    tpu.vector_store %arg24[%c32_76, %c0_77], %100 {strides = array<i32>} : memref<48x32xbf16, #tpu.memory_space<vmem>>, vector<16x32xbf16>,
    %c0_78 = arith.constant 0 : index
    %c0_79 = arith.constant 0 : index
    %102 = vector.load %arg24[%c0_78, %c0_79] : memref<48x32xbf16, #tpu.memory_space<vmem>>, vector<48x32xbf16>
    %cst_80 = arith.constant dense<0.000000e+00> : vector<16x32xf32>
    %103 = tpu.matmul %1, %102, %cst_80 {dimension_numbers = #tpu.dot_dimension_numbers<[1], [0], [0], [1], [0, 0, 1, 1], [], []>} : vector<16x48xbf16>, vector<48x32xbf16>, vector<16x32xf32> -> vector<16x32xf32>
    %104 = vector.extract_strided_slice %92 {offsets = [0, 0], sizes = [16, 32], strides = [1, 1]} : vector<16x128xf32> to vector<16x32xf32>
    %c0_81 = arith.constant 0 : index
    %c0_82 = arith.constant 0 : index
    %105 = vector.load %arg17[%c0_81, %c0_82] : memref<1x32xf32, #tpu.memory_space<vmem>>, vector<1x32xf32>
    %106 = vector.broadcast %105 : vector<1x32xf32> to vector<16x32xf32>
    %107 = arith.addf %104, %106 : vector<16x32xf32>
    %108 = arith.addf %107, %103 : vector<16x32xf32>
    %109 = math.tanh %108 : vector<16x32xf32>
    %cst_83 = arith.constant dense<0.000000e+00> : vector<8x32xf32>
    %110 = tpu.matmul %3, %109, %cst_83 {dimension_numbers = #tpu.dot_dimension_numbers<[1], [0], [0], [1], [0, 0, 1, 1], [], []>} : vector<8x16xf32>, vector<16x32xf32>, vector<8x32xf32> -> vector<8x32xf32>
    %111 = vector.extract_strided_slice %110 {offsets = [0, 0], sizes = [4, 32], strides = [1, 1]} : vector<8x32xf32> to vector<4x32xf32>
    %c0_84 = arith.constant 0 : index
    %c0_85 = arith.constant 0 : index
    %112 = vector.load %arg18[%c0_84, %c0_85] : memref<32x128xf32, #tpu.memory_space<vmem>>, vector<32x128xf32>
    %cst_86 = arith.constant dense<0.000000e+00> : vector<4x128xf32>
    %113 = tpu.matmul %111, %112, %cst_86 {dimension_numbers = #tpu.dot_dimension_numbers<[1], [0], [0], [1], [0, 0, 1, 1], [], []>} : vector<4x32xf32>, vector<32x128xf32>, vector<4x128xf32> -> vector<4x128xf32>
    %114 = arith.addf %90, %113 : vector<4x128xf32>
    %115 = vector.extract_strided_slice %110 {offsets = [4, 0], sizes = [4, 32], strides = [1, 1]} : vector<8x32xf32> to vector<4x32xf32>
    %c0_87 = arith.constant 0 : index
    %c0_88 = arith.constant 0 : index
    %116 = vector.load %arg19[%c0_87, %c0_88] : memref<32x128xf32, #tpu.memory_space<vmem>>, vector<32x128xf32>
    %cst_89 = arith.constant dense<0.000000e+00> : vector<4x128xf32>
    %117 = tpu.matmul %115, %116, %cst_89 {dimension_numbers = #tpu.dot_dimension_numbers<[1], [0], [0], [1], [0, 0, 1, 1], [], []>} : vector<4x32xf32>, vector<32x128xf32>, vector<4x128xf32> -> vector<4x128xf32>
    %118 = arith.addf %114, %117 : vector<4x128xf32>
    %c0_90 = arith.constant 0 : index
    %c0_91 = arith.constant 0 : index
    %119 = vector.load %arg20[%c0_90, %c0_91] : memref<1x128xf32, #tpu.memory_space<vmem>>, vector<1x128xf32>
    %120 = vector.broadcast %119 : vector<1x128xf32> to vector<4x128xf32>
    %121 = arith.addf %118, %120 : vector<4x128xf32>
    %cst_92 = arith.constant 0.000000e+00 : f32
    %122 = vector.broadcast %cst_92 : f32 to vector<4x128xf32>
    %123 = arith.maximumf %121, %122 : vector<4x128xf32>
    %c0_93 = arith.constant 0 : index
    %c0_94 = arith.constant 0 : index
    %124 = vector.load %arg21[%c0_93, %c0_94] : memref<128x128xf32, #tpu.memory_space<vmem>>, vector<128x128xf32>
    %cst_95 = arith.constant dense<0.000000e+00> : vector<4x128xf32>
    %125 = tpu.matmul %123, %124, %cst_95 {dimension_numbers = #tpu.dot_dimension_numbers<[1], [0], [0], [1], [0, 0, 1, 1], [], []>} : vector<4x128xf32>, vector<128x128xf32>, vector<4x128xf32> -> vector<4x128xf32>
    %c0_96 = arith.constant 0 : index
    %c0_97 = arith.constant 0 : index
    %126 = vector.load %arg22[%c0_96, %c0_97] : memref<1x128xf32, #tpu.memory_space<vmem>>, vector<1x128xf32>
    %127 = vector.broadcast %126 : vector<1x128xf32> to vector<4x128xf32>
    %128 = arith.addf %125, %127 : vector<4x128xf32>
    %129 = arith.negf %128 : vector<4x128xf32>
    %130 = math.exp %129 : vector<4x128xf32>
    %cst_98 = arith.constant 1.000000e+00 : f32
    %131 = vector.broadcast %cst_98 : f32 to vector<4x128xf32>
    %132 = arith.addf %131, %130 : vector<4x128xf32>
    %133 = arith.divf %131, %132 : vector<4x128xf32>
    %cst_99 = arith.constant 1.000000e+00 : f32
    %134 = vector.broadcast %cst_99 : f32 to vector<4x128xf32>
    %135 = arith.mulf %133, %134 : vector<4x128xf32>
    %c0_100 = arith.constant 0 : index
    %c0_101 = arith.constant 0 : index
    %c0_102 = arith.constant 0 : index
    %136 = vector.load %arg23[%c0_100, %c0_101, %c0_102] : memref<1x4x128xf32, #tpu.memory_space<vmem>>, vector<1x4x128xf32>
    %137 = vector.shape_cast %136 : vector<1x4x128xf32> to vector<4x128xf32>
    %138 = vector.shape_cast %135 : vector<4x128xf32> to vector<1x4x128xf32>
    tpu.vector_store %arg23[%c0_100, %c0_101, %c0_102], %138 {strides = array<i32>} : memref<1x4x128xf32, #tpu.memory_space<vmem>>, vector<1x4x128xf32>,
    return
  }
  func.func @transform_0(%arg0: i32) -> (i32, i32, i32) {
    %c0_i32 = arith.constant 0 : i32
    %c0_i32_0 = arith.constant 0 : i32
    %c0_i32_1 = arith.constant 0 : i32
    return %arg0, %c0_i32, %c0_i32_0 : i32, i32, i32
  }
  func.func @transform_1(%arg0: i32) -> (i32, i32, i32) {
    %c0_i32 = arith.constant 0 : i32
    %c0_i32_0 = arith.constant 0 : i32
    %c0_i32_1 = arith.constant 0 : i32
    return %arg0, %c0_i32, %c0_i32_0 : i32, i32, i32
  }
  func.func @transform_2(%arg0: i32) -> (i32, i32, i32) {
    %c0_i32 = arith.constant 0 : i32
    %c0_i32_0 = arith.constant 0 : i32
    %c0_i32_1 = arith.constant 0 : i32
    return %arg0, %c0_i32, %c0_i32_0 : i32, i32, i32
  }
  func.func @transform_3(%arg0: i32) -> (i32, i32) {
    %c0_i32 = arith.constant 0 : i32
    %c0_i32_0 = arith.constant 0 : i32
    %c0_i32_1 = arith.constant 0 : i32
    return %c0_i32, %c0_i32_0 : i32, i32
  }
  func.func @transform_4(%arg0: i32) -> (i32, i32) {
    %c0_i32 = arith.constant 0 : i32
    %c0_i32_0 = arith.constant 0 : i32
    %c0_i32_1 = arith.constant 0 : i32
    return %c0_i32, %c0_i32_0 : i32, i32
  }
  func.func @transform_5(%arg0: i32) -> (i32, i32) {
    %c0_i32 = arith.constant 0 : i32
    %c0_i32_0 = arith.constant 0 : i32
    %c0_i32_1 = arith.constant 0 : i32
    return %c0_i32, %c0_i32_0 : i32, i32
  }
  func.func @transform_6(%arg0: i32) -> (i32, i32) {
    %c0_i32 = arith.constant 0 : i32
    %c0_i32_0 = arith.constant 0 : i32
    %c0_i32_1 = arith.constant 0 : i32
    return %c0_i32, %c0_i32_0 : i32, i32
  }
  func.func @transform_7(%arg0: i32) -> (i32, i32) {
    %c0_i32 = arith.constant 0 : i32
    %c0_i32_0 = arith.constant 0 : i32
    %c0_i32_1 = arith.constant 0 : i32
    return %c0_i32, %c0_i32_0 : i32, i32
  }
  func.func @transform_8(%arg0: i32) -> (i32, i32) {
    %c0_i32 = arith.constant 0 : i32
    %c0_i32_0 = arith.constant 0 : i32
    %c0_i32_1 = arith.constant 0 : i32
    return %c0_i32, %c0_i32_0 : i32, i32
  }
  func.func @transform_9(%arg0: i32) -> (i32, i32) {
    %c0_i32 = arith.constant 0 : i32
    %c0_i32_0 = arith.constant 0 : i32
    %c0_i32_1 = arith.constant 0 : i32
    return %c0_i32, %c0_i32_0 : i32, i32
  }
  func.func @transform_10(%arg0: i32) -> (i32, i32) {
    %c0_i32 = arith.constant 0 : i32
    %c0_i32_0 = arith.constant 0 : i32
    %c0_i32_1 = arith.constant 0 : i32
    return %c0_i32, %c0_i32_0 : i32, i32
  }
  func.func @transform_11(%arg0: i32) -> (i32, i32) {
    %c0_i32 = arith.constant 0 : i32
    %c0_i32_0 = arith.constant 0 : i32
    %c0_i32_1 = arith.constant 0 : i32
    return %c0_i32, %c0_i32_0 : i32, i32
  }
  func.func @transform_12(%arg0: i32) -> (i32, i32) {
    %c0_i32 = arith.constant 0 : i32
    %c0_i32_0 = arith.constant 0 : i32
    %c0_i32_1 = arith.constant 0 : i32
    return %c0_i32, %c0_i32_0 : i32, i32
  }
  func.func @transform_13(%arg0: i32) -> (i32, i32) {
    %c0_i32 = arith.constant 0 : i32
    %c0_i32_0 = arith.constant 0 : i32
    %c0_i32_1 = arith.constant 0 : i32
    return %c0_i32, %c0_i32_0 : i32, i32
  }
  func.func @transform_14(%arg0: i32) -> (i32, i32) {
    %c0_i32 = arith.constant 0 : i32
    %c0_i32_0 = arith.constant 0 : i32
    %c0_i32_1 = arith.constant 0 : i32
    return %c0_i32, %c0_i32_0 : i32, i32
  }
  func.func @transform_15(%arg0: i32) -> (i32, i32) {
    %c0_i32 = arith.constant 0 : i32
    %c0_i32_0 = arith.constant 0 : i32
    %c0_i32_1 = arith.constant 0 : i32
    return %c0_i32, %c0_i32_0 : i32, i32
  }
  func.func @transform_16(%arg0: i32) -> (i32, i32) {
    %c0_i32 = arith.constant 0 : i32
    %c0_i32_0 = arith.constant 0 : i32
    %c0_i32_1 = arith.constant 0 : i32
    return %c0_i32, %c0_i32_0 : i32, i32
  }
  func.func @transform_17(%arg0: i32) -> (i32, i32) {
    %c0_i32 = arith.constant 0 : i32
    %c0_i32_0 = arith.constant 0 : i32
    %c0_i32_1 = arith.constant 0 : i32
    return %c0_i32, %c0_i32_0 : i32, i32
  }
  func.func @transform_18(%arg0: i32) -> (i32, i32) {
    %c0_i32 = arith.constant 0 : i32
    %c0_i32_0 = arith.constant 0 : i32
    %c0_i32_1 = arith.constant 0 : i32
    return %c0_i32, %c0_i32_0 : i32, i32
  }
  func.func @transform_19(%arg0: i32) -> (i32, i32) {
    %c0_i32 = arith.constant 0 : i32
    %c0_i32_0 = arith.constant 0 : i32
    %c0_i32_1 = arith.constant 0 : i32
    return %c0_i32, %c0_i32_0 : i32, i32
  }
  func.func @transform_20(%arg0: i32) -> (i32, i32) {
    %c0_i32 = arith.constant 0 : i32
    %c0_i32_0 = arith.constant 0 : i32
    %c0_i32_1 = arith.constant 0 : i32
    return %c0_i32, %c0_i32_0 : i32, i32
  }
  func.func @transform_21(%arg0: i32) -> (i32, i32) {
    %c0_i32 = arith.constant 0 : i32
    %c0_i32_0 = arith.constant 0 : i32
    %c0_i32_1 = arith.constant 0 : i32
    return %c0_i32, %c0_i32_0 : i32, i32
  }
  func.func @transform_22(%arg0: i32) -> (i32, i32, i32) {
    %c0_i32 = arith.constant 0 : i32
    %c0_i32_0 = arith.constant 0 : i32
    %c0_i32_1 = arith.constant 0 : i32
    return %arg0, %c0_i32, %c0_i32_0 : i32, i32, i32
  }
}

</mosaic_0001>

<llo_original>
// kernel: tpu_custom_call.1
$region0: #{tpu_custom_call.1}
  #allocation0 [shape = 'u32[]', space=smem, size = 0x4, offset = 0x4, fixed_abs, tag = 'smem constant byte address 0x4 - core index']
  #allocation1 [shape = 'u32[144,128]{1,0:T(1,128)}', space=vmem, size = 0x12000, scoped, tag = 'internal scratch']
  #allocation2 [shape = 'bf16[48,32]{1,0:T(8,128)(2,1)}', space=vmem, size = 0x3000, scoped, tag = 'scratch operand']
  %s0 = inlined_call_operand.vmem [shape: f32[8,16,8], index: 0, kind: input, shape index: {}]
  %s1 = inlined_call_operand.vmem [shape: bf16[8,16,48], index: 1, kind: input, shape index: {}]
  %s2 = inlined_call_operand.hbm [shape: f32[8,8,16], index: 2, kind: input, shape index: {}]
  %s3 = inlined_call_operand.hbm [shape: f32[8,128], index: 3, kind: input, shape index: {}]
  %s4 = inlined_call_operand.vmem [shape: f32[1,32], index: 4, kind: input, shape index: {}]
  %s5 = inlined_call_operand.vmem [shape: f32[32,128], index: 5, kind: input, shape index: {}]
  %s6 = inlined_call_operand.hbm [shape: f32[32,128], index: 6, kind: input, shape index: {}]
  %s7 = inlined_call_operand.hbm [shape: f32[32,128], index: 7, kind: input, shape index: {}]
  %s8 = inlined_call_operand.vmem [shape: f32[1,32], index: 8, kind: input, shape index: {}]
  %s9 = inlined_call_operand.hbm [shape: f32[32,128], index: 9, kind: input, shape index: {}]
  %s10 = inlined_call_operand.hbm [shape: f32[32,128], index: 10, kind: input, shape index: {}]
  %s11 = inlined_call_operand.hbm [shape: f32[32,128], index: 11, kind: input, shape index: {}]
  %s12 = inlined_call_operand.vmem [shape: f32[1,32], index: 12, kind: input, shape index: {}]
  %s13 = inlined_call_operand.hbm [shape: f32[32,128], index: 13, kind: input, shape index: {}]
  %s14 = inlined_call_operand.hbm [shape: f32[32,128], index: 14, kind: input, shape index: {}]
  %s15 = inlined_call_operand.hbm [shape: f32[32,128], index: 15, kind: input, shape index: {}]
  %s16 = inlined_call_operand.vmem [shape: f32[1,32], index: 16, kind: input, shape index: {}]
  %s17 = inlined_call_operand.hbm [shape: f32[32,128], index: 17, kind: input, shape index: {}]
  %s18 = inlined_call_operand.hbm [shape: f32[32,128], index: 18, kind: input, shape index: {}]
  %s19 = inlined_call_operand.hbm [shape: f32[1,128], index: 19, kind: input, shape index: {}]
  %s20 = inlined_call_operand.vmem [shape: f32[128,128], index: 20, kind: input, shape index: {}]
  %s21 = inlined_call_operand.hbm [shape: f32[1,128], index: 21, kind: input, shape index: {}]
  %s22 = inlined_call_operand.hbm [shape: f32[8,4,128], index: 22, kind: output, shape index: {}]
  %s23 = sld [smem:[#allocation0]]
  $region177: #{tpu_custom_call.1} parent=0
    _
  %s25 = ssub.s32 1, %s23
  %s26 = scalar_select 0, %s25, %s23
  $region1: #{tpu_custom_call.1} parent=0
    #allocation3 [shape = 'u8[8192]{0}', space=vmem, size = 0x2000, scoped, tag = 'input window, operand 2']
    #allocation4 [shape = 's32[2]{0}', space=sflag, size = 0x8, scoped, tag = 'scoped memory for tpu_custom_call.1']
    #allocation5 [shape = 's32[2]{0}', space=sflag, size = 0x8, scoped, tag = 'scoped memory for tpu_custom_call.1']
    #allocation6 [shape = 'u8[4096]{0}', space=vmem, size = 0x1000, scoped, tag = 'input window, operand 3, single buffered']
    #allocation7 [shape = 's32[1]{0}', space=sflag, size = 0x4, scoped, tag = 'scoped memory for tpu_custom_call.1']
    #allocation8 [shape = 'u8[16384]{0}', space=vmem, size = 0x4000, scoped, tag = 'input window, operand 6, single buffered']
    #allocation9 [shape = 'u8[16384]{0}', space=vmem, size = 0x4000, scoped, tag = 'input window, operand 7, single buffered']
    #allocation10 [shape = 's32[1]{0}', space=sflag, size = 0x4, scoped, tag = 'scoped memory for tpu_custom_call.1']
    #allocation11 [shape = 'u8[16384]{0}', space=vmem, size = 0x4000, scoped, tag = 'input window, operand 9, single buffered']
    #allocation12 [shape = 'u8[16384]{0}', space=vmem, size = 0x4000, scoped, tag = 'input window, operand 10, single buffered']
    #allocation13 [shape = 's32[1]{0}', space=sflag, size = 0x4, scoped, tag = 'scoped memory for tpu_custom_call.1']
    #allocation14 [shape = 'u8[16384]{0}', space=vmem, size = 0x4000, scoped, tag = 'input window, operand 11, single buffered']
    #allocation15 [shape = 'u8[16384]{0}', space=vmem, size = 0x4000, scoped, tag = 'input window, operand 13, single buffered']
    #allocation16 [shape = 's32[1]{0}', space=sflag, size = 0x4, scoped, tag = 'scoped memory for tpu_custom_call.1']
    #allocation17 [shape = 'u8[16384]{0}', space=vmem, size = 0x4000, scoped, tag = 'input window, operand 14, single buffered']
    #allocation18 [shape = 'u8[16384]{0}', space=vmem, size = 0x4000, scoped, tag = 'input window, operand 15, single buffered']
    #allocation19 [shape = 's32[1]{0}', space=sflag, size = 0x4, scoped, tag = 'scoped memory for tpu_custom_call.1']
    #allocation20 [shape = 'u8[16384]{0}', space=vmem, size = 0x4000, scoped, tag = 'input window, operand 17, single buffered']
    #allocation21 [shape = 'u8[16384]{0}', space=vmem, size = 0x4000, scoped, tag = 'input window, operand 18, single buffered']
    #allocation22 [shape = 's32[1]{0}', space=sflag, size = 0x4, scoped, tag = 'scoped memory for tpu_custom_call.1']
    #allocation23 [shape = 'u8[512]{0}', space=vmem, size = 0x400, scoped, tag = 'input window, operand 19, single buffered']
    #allocation24 [shape = 'u8[512]{0}', space=vmem, size = 0x400, scoped, tag = 'input window, operand 21, single buffered']
    #allocation25 [shape = 's32[1]{0}', space=sflag, size = 0x4, scoped, tag = 'scoped memory for tpu_custom_call.1']
    #allocation26 [shape = 'u8[4096]{0}', space=vmem, size = 0x1000, scoped, tag = 'output window, operand 0']
    %27 = vsyncpa [#allocation4], 0
    %s28 = scalar_lea.sflag [#allocation4], 1
    %29 = vsyncpa %s28, 0
    %30 = vsyncpa [#allocation7], 0
    %31 = vsyncpa [#allocation10], 0
    %32 = vsyncpa [#allocation13], 0
    %33 = vsyncpa [#allocation16], 0
    %34 = vsyncpa [#allocation19], 0
    %35 = vsyncpa [#allocation22], 0
    %36 = vsyncpa [#allocation25], 0
    %37 = vsyncpa [#allocation5], 0
    %s38 = scalar_lea.sflag [#allocation5], 1
    %39 = vsyncpa %s38, 0
    loop: start=0, step=1, limit=10
    $region2: #{tpu_custom_call.1} parent=1 // loop_pre_header
      _
    $region3: #{tpu_custom_call.1} parent=1 // loop_header
      %s41 = sphi 0, %s45
      %p42 = scmp.ge.s32.totalorder %s41, 10
      %s51 = sphi 0, %s53
      %s54 = sphi 0, %s51
      %s55 = sphi 0, %s54
      %s71 = sphi 0, %s55
      %s77 = sphi 0, %s79
      %s80 = sphi 0, %s77
      %s81 = sphi 0, %s80
      %s97 = sphi 0, %s81
      %s103 = sphi 0, %s105
      %s106 = sphi 0, %s103
      %s107 = sphi 0, %s106
      %s123 = sphi 0, %s107
      %s127 = sphi 0, %s127
      %s129 = sphi 0, %s127
      %s130 = sphi 0, %s129
      %s144 = sphi 0, %s130
      %s148 = sphi 0, %s148
      %s150 = sphi 0, %s148
      %s151 = sphi 0, %s150
      %s165 = sphi 0, %s151
      %s169 = sphi 0, %s169
      %s171 = sphi 0, %s169
      %s172 = sphi 0, %s171
      %s186 = sphi 0, %s172
      %s190 = sphi 0, %s190
      %s192 = sphi 0, %s190
      %s193 = sphi 0, %s192
      %s207 = sphi 0, %s193
      %s211 = sphi 0, %s211
      %s213 = sphi 0, %s211
      %s214 = sphi 0, %s213
      %s228 = sphi 0, %s214
      %s232 = sphi 0, %s232
      %s234 = sphi 0, %s232
      %s235 = sphi 0, %s234
      %s249 = sphi 0, %s235
      %s253 = sphi 0, %s253
      %s255 = sphi 0, %s253
      %s256 = sphi 0, %s255
      %s270 = sphi 0, %s256
      %s274 = sphi 0, %s274
      %s276 = sphi 0, %s274
      %s277 = sphi 0, %s276
      %s291 = sphi 0, %s277
      %s295 = sphi 0, %s295
      %s297 = sphi 0, %s295
      %s298 = sphi 0, %s297
      %s312 = sphi 0, %s298
      %s316 = sphi 0, %s316
      %s318 = sphi 0, %s316
      %s319 = sphi 0, %s318
      %s333 = sphi 0, %s319
      %s337 = sphi 0, %s337
      %s339 = sphi 0, %s337
      %s340 = sphi 0, %s339
      %s354 = sphi 0, %s340
      %s358 = sphi 0, %s358
      %s360 = sphi 0, %s358
      %s361 = sphi 0, %s360
      %s375 = sphi 0, %s361
      %s379 = sphi 0, %s379
      %s381 = sphi 0, %s379
      %s382 = sphi 0, %s381
      %s396 = sphi 0, %s382
      %s400 = sphi 0, %s400
      %s402 = sphi 0, %s400
      %s403 = sphi 0, %s402
      %s417 = sphi 0, %s403
      %s421 = sphi 0, %s421
      %s423 = sphi 0, %s421
      %s424 = sphi 0, %s423
      %s438 = sphi 0, %s424
      %s442 = sphi 0, %s442
      %s444 = sphi 0, %s442
      %s445 = sphi 0, %s444
      %s459 = sphi 0, %s445
      %s463 = sphi 0, %s463
      %s465 = sphi 0, %s463
      %s466 = sphi 0, %s465
      %s480 = sphi 0, %s466
      %s484 = sphi 0, %s484
      %s486 = sphi 0, %s484
      %s487 = sphi 0, %s486
      %s501 = sphi 0, %s487
      %s505 = sphi 0, %s505
      %s507 = sphi 0, %s505
      %s508 = sphi 0, %s507
      %s522 = sphi 0, %s508
      %s528 = sphi 0, %s530
      %s531 = sphi 0, %s528
      %s532 = sphi 0, %s531
      %s548 = sphi 0, %s532
    $region4: #{tpu_custom_call.1} parent=1 // loop_header_branch
      %44 = sbr.rel (%p42) target = $region8
    $region5: #{tpu_custom_call.1} parent=1 // loop_body
      %s46 = ssub.s32 %s41, 1
      %s47 = ssub.s32 %s41, 2
      %s48 = sadd.s32 %s41, 1
      %s49 = ssub.s32 %s41, %s48
      %p50 = scmp.eq.s32.totalorder %s49, 0
      %s52 = sadd.s32 %s51, 1
      %s53 = scalar_select %p50, %s51, %s52
      %p56 = pneg %p50
      %p57 = scmp.eq.s32.totalorder %s41, 7
      %p58 = por %p56, %p57
      %p59 = scmp.ne.s32.totalorder %s51, %s54
      %p60 = scmp.eq.s32.totalorder %s41, 0
      %p61 = por %p59, %p60
      %p62 = scmp.ne.s32.totalorder %s51, %s54
      %p63 = scmp.eq.s32.totalorder %s46, 7
      %p64 = por %p62, %p63
      %p65 = scmp.ne.s32.totalorder %s54, %s55
      %p66 = scmp.eq.s32.totalorder %s46, 0
      %p67 = por %p65, %p66
      %p68 = scmp.ne.s32.totalorder %s54, %s55
      %p69 = scmp.eq.s32.totalorder %s47, 7
      %p70 = por %p68, %p69
      %p72 = scmp.ne.s32.totalorder %s55, %s71
      %p73 = scmp.eq.s32.totalorder %s47, 0
      %p74 = por %p72, %p73
      %s75 = ssub.s32 %s41, %s48
      %p76 = scmp.eq.s32.totalorder %s75, 0
      %s78 = sadd.s32 %s77, 1
      %s79 = scalar_select %p76, %s77, %s78
      %p82 = pneg %p76
      %p83 = scmp.eq.s32.totalorder %s41, 7
      %p84 = por %p82, %p83
      %p85 = scmp.ne.s32.totalorder %s77, %s80
      %p86 = scmp.eq.s32.totalorder %s41, 0
      %p87 = por %p85, %p86
      %p88 = scmp.ne.s32.totalorder %s77, %s80
      %p89 = scmp.eq.s32.totalorder %s46, 7
      %p90 = por %p88, %p89
      %p91 = scmp.ne.s32.totalorder %s80, %s81
      %p92 = scmp.eq.s32.totalorder %s46, 0
      %p93 = por %p91, %p92
      %p94 = scmp.ne.s32.totalorder %s80, %s81
      %p95 = scmp.eq.s32.totalorder %s47, 7
      %p96 = por %p94, %p95
      %p98 = scmp.ne.s32.totalorder %s81, %s97
      %p99 = scmp.eq.s32.totalorder %s47, 0
      %p100 = por %p98, %p99
      %s101 = ssub.s32 %s41, %s48
      %p102 = scmp.eq.s32.totalorder %s101, 0
      %s104 = sadd.s32 %s103, 1
      %s105 = scalar_select %p102, %s103, %s104
      %p108 = pneg %p102
      %p109 = scmp.eq.s32.totalorder %s41, 7
      %p110 = por %p108, %p109
      %p111 = scmp.ne.s32.totalorder %s103, %s106
      %p112 = scmp.eq.s32.totalorder %s41, 0
      %p113 = por %p111, %p112
      %p114 = scmp.ne.s32.totalorder %s103, %s106
      %p115 = scmp.eq.s32.totalorder %s46, 7
      %p116 = por %p114, %p115
      %p117 = scmp.ne.s32.totalorder %s106, %s107
      %p118 = scmp.eq.s32.totalorder %s46, 0
      %p119 = por %p117, %p118
      %p120 = scmp.ne.s32.totalorder %s106, %s107
      %p121 = scmp.eq.s32.totalorder %s47, 7
      %p122 = por %p120, %p121
      %p124 = scmp.ne.s32.totalorder %s107, %s123
      %p125 = scmp.eq.s32.totalorder %s47, 0
      %p126 = por %p124, %p125
      %s128 = sadd.s32 %s127, 1
      %p131 = scmp.eq.s32.totalorder %s41, 7
      %p132 = scmp.ne.s32.totalorder %s127, %s129
      %p133 = scmp.eq.s32.totalorder %s41, 0
      %p134 = por %p132, %p133
      %p135 = scmp.ne.s32.totalorder %s127, %s129
      %p136 = scmp.eq.s32.totalorder %s46, 7
      %p137 = por %p135, %p136
      %p138 = scmp.ne.s32.totalorder %s129, %s130
      %p139 = scmp.eq.s32.totalorder %s46, 0
      %p140 = por %p138, %p139
      %p141 = scmp.ne.s32.totalorder %s129, %s130
      %p142 = scmp.eq.s32.totalorder %s47, 7
      %p143 = por %p141, %p142
      %p145 = scmp.ne.s32.totalorder %s130, %s144
      %p146 = scmp.eq.s32.totalorder %s47, 0
      %p147 = por %p145, %p146
      %s149 = sadd.s32 %s148, 1
      %p152 = scmp.eq.s32.totalorder %s41, 7
      %p153 = scmp.ne.s32.totalorder %s148, %s150
      %p154 = scmp.eq.s32.totalorder %s41, 0
      %p155 = por %p153, %p154
      %p156 = scmp.ne.s32.totalorder %s148, %s150
      %p157 = scmp.eq.s32.totalorder %s46, 7
      %p158 = por %p156, %p157
      %p159 = scmp.ne.s32.totalorder %s150, %s151
      %p160 = scmp.eq.s32.totalorder %s46, 0
      %p161 = por %p159, %p160
      %p162 = scmp.ne.s32.totalorder %s150, %s151
      %p163 = scmp.eq.s32.totalorder %s47, 7
      %p164 = por %p162, %p163
      %p166 = scmp.ne.s32.totalorder %s151, %s165
      %p167 = scmp.eq.s32.totalorder %s47, 0
      %p168 = por %p166, %p167
      %s170 = sadd.s32 %s169, 1
      %p173 = scmp.eq.s32.totalorder %s41, 7
      %p174 = scmp.ne.s32.totalorder %s169, %s171
      %p175 = scmp.eq.s32.totalorder %s41, 0
      %p176 = por %p174, %p175
      %p177 = scmp.ne.s32.totalorder %s169, %s171
      %p178 = scmp.eq.s32.totalorder %s46, 7
      %p179 = por %p177, %p178
      %p180 = scmp.ne.s32.totalorder %s171, %s172
      %p181 = scmp.eq.s32.totalorder %s46, 0
      %p182 = por %p180, %p181
      %p183 = scmp.ne.s32.totalorder %s171, %s172
      %p184 = scmp.eq.s32.totalorder %s47, 7
      %p185 = por %p183, %p184
      %p187 = scmp.ne.s32.totalorder %s172, %s186
      %p188 = scmp.eq.s32.totalorder %s47, 0
      %p189 = por %p187, %p188
      %s191 = sadd.s32 %s190, 1
      %p194 = scmp.eq.s32.totalorder %s41, 7
      %p195 = scmp.ne.s32.totalorder %s190, %s192
      %p196 = scmp.eq.s32.totalorder %s41, 0
      %p197 = por %p195, %p196
      %p198 = scmp.ne.s32.totalorder %s190, %s192
      %p199 = scmp.eq.s32.totalorder %s46, 7
      %p200 = por %p198, %p199
      %p201 = scmp.ne.s32.totalorder %s192, %s193
      %p202 = scmp.eq.s32.totalorder %s46, 0
      %p203 = por %p201, %p202
      %p204 = scmp.ne.s32.totalorder %s192, %s193
      %p205 = scmp.eq.s32.totalorder %s47, 7
      %p206 = por %p204, %p205
      %p208 = scmp.ne.s32.totalorder %s193, %s207
      %p209 = scmp.eq.s32.totalorder %s47, 0
      %p210 = por %p208, %p209
      %s212 = sadd.s32 %s211, 1
      %p215 = scmp.eq.s32.totalorder %s41, 7
      %p216 = scmp.ne.s32.totalorder %s211, %s213
      %p217 = scmp.eq.s32.totalorder %s41, 0
      %p218 = por %p216, %p217
      %p219 = scmp.ne.s32.totalorder %s211, %s213
      %p220 = scmp.eq.s32.totalorder %s46, 7
      %p221 = por %p219, %p220
      %p222 = scmp.ne.s32.totalorder %s213, %s214
      %p223 = scmp.eq.s32.totalorder %s46, 0
      %p224 = por %p222, %p223
      %p225 = scmp.ne.s32.totalorder %s213, %s214
      %p226 = scmp.eq.s32.totalorder %s47, 7
      %p227 = por %p225, %p226
      %p229 = scmp.ne.s32.totalorder %s214, %s228
      %p230 = scmp.eq.s32.totalorder %s47, 0
      %p231 = por %p229, %p230
      %s233 = sadd.s32 %s232, 1
      %p236 = scmp.eq.s32.totalorder %s41, 7
      %p237 = scmp.ne.s32.totalorder %s232, %s234
      %p238 = scmp.eq.s32.totalorder %s41, 0
      %p239 = por %p237, %p238
      %p240 = scmp.ne.s32.totalorder %s232, %s234
      %p241 = scmp.eq.s32.totalorder %s46, 7
      %p242 = por %p240, %p241
      %p243 = scmp.ne.s32.totalorder %s234, %s235
      %p244 = scmp.eq.s32.totalorder %s46, 0
      %p245 = por %p243, %p244
      %p246 = scmp.ne.s32.totalorder %s234, %s235
      %p247 = scmp.eq.s32.totalorder %s47, 7
      %p248 = por %p246, %p247
      %p250 = scmp.ne.s32.totalorder %s235, %s249
      %p251 = scmp.eq.s32.totalorder %s47, 0
      %p252 = por %p250, %p251
      %s254 = sadd.s32 %s253, 1
      %p257 = scmp.eq.s32.totalorder %s41, 7
      %p258 = scmp.ne.s32.totalorder %s253, %s255
      %p259 = scmp.eq.s32.totalorder %s41, 0
      %p260 = por %p258, %p259
      %p261 = scmp.ne.s32.totalorder %s253, %s255
      %p262 = scmp.eq.s32.totalorder %s46, 7
      %p263 = por %p261, %p262
      %p264 = scmp.ne.s32.totalorder %s255, %s256
      %p265 = scmp.eq.s32.totalorder %s46, 0
      %p266 = por %p264, %p265
      %p267 = scmp.ne.s32.totalorder %s255, %s256
      %p268 = scmp.eq.s32.totalorder %s47, 7
      %p269 = por %p267, %p268
      %p271 = scmp.ne.s32.totalorder %s256, %s270
      %p272 = scmp.eq.s32.totalorder %s47, 0
      %p273 = por %p271, %p272
      %s275 = sadd.s32 %s274, 1
      %p278 = scmp.eq.s32.totalorder %s41, 7
      %p279 = scmp.ne.s32.totalorder %s274, %s276
      %p280 = scmp.eq.s32.totalorder %s41, 0
      %p281 = por %p279, %p280
      %p282 = scmp.ne.s32.totalorder %s274, %s276
      %p283 = scmp.eq.s32.totalorder %s46, 7
      %p284 = por %p282, %p283
      %p285 = scmp.ne.s32.totalorder %s276, %s277
      %p286 = scmp.eq.s32.totalorder %s46, 0
      %p287 = por %p285, %p286
      %p288 = scmp.ne.s32.totalorder %s276, %s277
      %p289 = scmp.eq.s32.totalorder %s47, 7
      %p290 = por %p288, %p289
      %p292 = scmp.ne.s32.totalorder %s277, %s291
      %p293 = scmp.eq.s32.totalorder %s47, 0
      %p294 = por %p292, %p293
      %s296 = sadd.s32 %s295, 1
      %p299 = scmp.eq.s32.totalorder %s41, 7
      %p300 = scmp.ne.s32.totalorder %s295, %s297
      %p301 = scmp.eq.s32.totalorder %s41, 0
      %p302 = por %p300, %p301
      %p303 = scmp.ne.s32.totalorder %s295, %s297
      %p304 = scmp.eq.s32.totalorder %s46, 7
      %p305 = por %p303, %p304
      %p306 = scmp.ne.s32.totalorder %s297, %s298
      %p307 = scmp.eq.s32.totalorder %s46, 0
      %p308 = por %p306, %p307
      %p309 = scmp.ne.s32.totalorder %s297, %s298
      %p310 = scmp.eq.s32.totalorder %s47, 7
      %p311 = por %p309, %p310
      %p313 = scmp.ne.s32.totalorder %s298, %s312
      %p314 = scmp.eq.s32.totalorder %s47, 0
      %p315 = por %p313, %p314
      %s317 = sadd.s32 %s316, 1
      %p320 = scmp.eq.s32.totalorder %s41, 7
      %p321 = scmp.ne.s32.totalorder %s316, %s318
      %p322 = scmp.eq.s32.totalorder %s41, 0
      %p323 = por %p321, %p322
      %p324 = scmp.ne.s32.totalorder %s316, %s318
      %p325 = scmp.eq.s32.totalorder %s46, 7
      %p326 = por %p324, %p325
      %p327 = scmp.ne.s32.totalorder %s318, %s319
      %p328 = scmp.eq.s32.totalorder %s46, 0
      %p329 = por %p327, %p328
      %p330 = scmp.ne.s32.totalorder %s318, %s319
      %p331 = scmp.eq.s32.totalorder %s47, 7
      %p332 = por %p330, %p331
      %p334 = scmp.ne.s32.totalorder %s319, %s333
      %p335 = scmp.eq.s32.totalorder %s47, 0
      %p336 = por %p334, %p335
      %s338 = sadd.s32 %s337, 1
      %p341 = scmp.eq.s32.totalorder %s41, 7
      %p342 = scmp.ne.s32.totalorder %s337, %s339
      %p343 = scmp.eq.s32.totalorder %s41, 0
      %p344 = por %p342, %p343
      %p345 = scmp.ne.s32.totalorder %s337, %s339
      %p346 = scmp.eq.s32.totalorder %s46, 7
      %p347 = por %p345, %p346
      %p348 = scmp.ne.s32.totalorder %s339, %s340
      %p349 = scmp.eq.s32.totalorder %s46, 0
      %p350 = por %p348, %p349
      %p351 = scmp.ne.s32.totalorder %s339, %s340
      %p352 = scmp.eq.s32.totalorder %s47, 7
      %p353 = por %p351, %p352
      %p355 = scmp.ne.s32.totalorder %s340, %s354
      %p356 = scmp.eq.s32.totalorder %s47, 0
      %p357 = por %p355, %p356
      %s359 = sadd.s32 %s358, 1
      %p362 = scmp.eq.s32.totalorder %s41, 7
      %p363 = scmp.ne.s32.totalorder %s358, %s360
      %p364 = scmp.eq.s32.totalorder %s41, 0
      %p365 = por %p363, %p364
      %p366 = scmp.ne.s32.totalorder %s358, %s360
      %p367 = scmp.eq.s32.totalorder %s46, 7
      %p368 = por %p366, %p367
      %p369 = scmp.ne.s32.totalorder %s360, %s361
      %p370 = scmp.eq.s32.totalorder %s46, 0
      %p371 = por %p369, %p370
      %p372 = scmp.ne.s32.totalorder %s360, %s361
      %p373 = scmp.eq.s32.totalorder %s47, 7
      %p374 = por %p372, %p373
      %p376 = scmp.ne.s32.totalorder %s361, %s375
      %p377 = scmp.eq.s32.totalorder %s47, 0
      %p378 = por %p376, %p377
      %s380 = sadd.s32 %s379, 1
      %p383 = scmp.eq.s32.totalorder %s41, 7
      %p384 = scmp.ne.s32.totalorder %s379, %s381
      %p385 = scmp.eq.s32.totalorder %s41, 0
      %p386 = por %p384, %p385
      %p387 = scmp.ne.s32.totalorder %s379, %s381
      %p388 = scmp.eq.s32.totalorder %s46, 7
      %p389 = por %p387, %p388
      %p390 = scmp.ne.s32.totalorder %s381, %s382
      %p391 = scmp.eq.s32.totalorder %s46, 0
      %p392 = por %p390, %p391
      %p393 = scmp.ne.s32.totalorder %s381, %s382
      %p394 = scmp.eq.s32.totalorder %s47, 7
      %p395 = por %p393, %p394
      %p397 = scmp.ne.s32.totalorder %s382, %s396
      %p398 = scmp.eq.s32.totalorder %s47, 0
      %p399 = por %p397, %p398
      %s401 = sadd.s32 %s400, 1
      %p404 = scmp.eq.s32.totalorder %s41, 7
      %p405 = scmp.ne.s32.totalorder %s400, %s402
      %p406 = scmp.eq.s32.totalorder %s41, 0
      %p407 = por %p405, %p406
      %p408 = scmp.ne.s32.totalorder %s400, %s402
      %p409 = scmp.eq.s32.totalorder %s46, 7
      %p410 = por %p408, %p409
      %p411 = scmp.ne.s32.totalorder %s402, %s403
      %p412 = scmp.eq.s32.totalorder %s46, 0
      %p413 = por %p411, %p412
      %p414 = scmp.ne.s32.totalorder %s402, %s403
      %p415 = scmp.eq.s32.totalorder %s47, 7
      %p416 = por %p414, %p415
      %p418 = scmp.ne.s32.totalorder %s403, %s417
      %p419 = scmp.eq.s32.totalorder %s47, 0
      %p420 = por %p418, %p419
      %s422 = sadd.s32 %s421, 1
      %p425 = scmp.eq.s32.totalorder %s41, 7
      %p426 = scmp.ne.s32.totalorder %s421, %s423
      %p427 = scmp.eq.s32.totalorder %s41, 0
      %p428 = por %p426, %p427
      %p429 = scmp.ne.s32.totalorder %s421, %s423
      %p430 = scmp.eq.s32.totalorder %s46, 7
      %p431 = por %p429, %p430
      %p432 = scmp.ne.s32.totalorder %s423, %s424
      %p433 = scmp.eq.s32.totalorder %s46, 0
      %p434 = por %p432, %p433
      %p435 = scmp.ne.s32.totalorder %s423, %s424
      %p436 = scmp.eq.s32.totalorder %s47, 7
      %p437 = por %p435, %p436
      %p439 = scmp.ne.s32.totalorder %s424, %s438
      %p440 = scmp.eq.s32.totalorder %s47, 0
      %p441 = por %p439, %p440
      %s443 = sadd.s32 %s442, 1
      %p446 = scmp.eq.s32.totalorder %s41, 7
      %p447 = scmp.ne.s32.totalorder %s442, %s444
      %p448 = scmp.eq.s32.totalorder %s41, 0
      %p449 = por %p447, %p448
      %p450 = scmp.ne.s32.totalorder %s442, %s444
      %p451 = scmp.eq.s32.totalorder %s46, 7
      %p452 = por %p450, %p451
      %p453 = scmp.ne.s32.totalorder %s444, %s445
      %p454 = scmp.eq.s32.totalorder %s46, 0
      %p455 = por %p453, %p454
      %p456 = scmp.ne.s32.totalorder %s444, %s445
      %p457 = scmp.eq.s32.totalorder %s47, 7
      %p458 = por %p456, %p457
      %p460 = scmp.ne.s32.totalorder %s445, %s459
      %p461 = scmp.eq.s32.totalorder %s47, 0
      %p462 = por %p460, %p461
      %s464 = sadd.s32 %s463, 1
      %p467 = scmp.eq.s32.totalorder %s41, 7
      %p468 = scmp.ne.s32.totalorder %s463, %s465
      %p469 = scmp.eq.s32.totalorder %s41, 0
      %p470 = por %p468, %p469
      %p471 = scmp.ne.s32.totalorder %s463, %s465
      %p472 = scmp.eq.s32.totalorder %s46, 7
      %p473 = por %p471, %p472
      %p474 = scmp.ne.s32.totalorder %s465, %s466
      %p475 = scmp.eq.s32.totalorder %s46, 0
      %p476 = por %p474, %p475
      %p477 = scmp.ne.s32.totalorder %s465, %s466
      %p478 = scmp.eq.s32.totalorder %s47, 7
      %p479 = por %p477, %p478
      %p481 = scmp.ne.s32.totalorder %s466, %s480
      %p482 = scmp.eq.s32.totalorder %s47, 0
      %p483 = por %p481, %p482
      %s485 = sadd.s32 %s484, 1
      %p488 = scmp.eq.s32.totalorder %s41, 7
      %p489 = scmp.ne.s32.totalorder %s484, %s486
      %p490 = scmp.eq.s32.totalorder %s41, 0
      %p491 = por %p489, %p490
      %p492 = scmp.ne.s32.totalorder %s484, %s486
      %p493 = scmp.eq.s32.totalorder %s46, 7
      %p494 = por %p492, %p493
      %p495 = scmp.ne.s32.totalorder %s486, %s487
      %p496 = scmp.eq.s32.totalorder %s46, 0
      %p497 = por %p495, %p496
      %p498 = scmp.ne.s32.totalorder %s486, %s487
      %p499 = scmp.eq.s32.totalorder %s47, 7
      %p500 = por %p498, %p499
      %p502 = scmp.ne.s32.totalorder %s487, %s501
      %p503 = scmp.eq.s32.totalorder %s47, 0
      %p504 = por %p502, %p503
      %s506 = sadd.s32 %s505, 1
      %p509 = scmp.eq.s32.totalorder %s41, 7
      %p510 = scmp.ne.s32.totalorder %s505, %s507
      %p511 = scmp.eq.s32.totalorder %s41, 0
      %p512 = por %p510, %p511
      %p513 = scmp.ne.s32.totalorder %s505, %s507
      %p514 = scmp.eq.s32.totalorder %s46, 7
      %p515 = por %p513, %p514
      %p516 = scmp.ne.s32.totalorder %s507, %s508
      %p517 = scmp.eq.s32.totalorder %s46, 0
      %p518 = por %p516, %p517
      %p519 = scmp.ne.s32.totalorder %s507, %s508
      %p520 = scmp.eq.s32.totalorder %s47, 7
      %p521 = por %p519, %p520
      %p523 = scmp.ne.s32.totalorder %s508, %s522
      %p524 = scmp.eq.s32.totalorder %s47, 0
      %p525 = por %p523, %p524
      %s526 = ssub.s32 %s41, %s48
      %p527 = scmp.eq.s32.totalorder %s526, 0
      %s529 = sadd.s32 %s528, 1
      %s530 = scalar_select %p527, %s528, %s529
      %p533 = pneg %p527
      %p534 = scmp.eq.s32.totalorder %s41, 7
      %p535 = por %p533, %p534
      %p536 = scmp.ne.s32.totalorder %s528, %s531
      %p537 = scmp.eq.s32.totalorder %s41, 0
      %p538 = por %p536, %p537
      %p539 = scmp.ne.s32.totalorder %s528, %s531
      %p540 = scmp.eq.s32.totalorder %s46, 7
      %p541 = por %p539, %p540
      %p542 = scmp.ne.s32.totalorder %s531, %s532
      %p543 = scmp.eq.s32.totalorder %s46, 0
      %p544 = por %p542, %p543
      %p545 = scmp.ne.s32.totalorder %s531, %s532
      %p546 = scmp.eq.s32.totalorder %s47, 7
      %p547 = por %p545, %p546
      %p549 = scmp.ne.s32.totalorder %s532, %s548
      %p550 = scmp.eq.s32.totalorder %s47, 0
      %p551 = por %p549, %p550
      %p552 = scmp.le.s32.totalorder 1, %s41
      %p553 = scmp.lt.s32.totalorder %s41, 9
      %p554 = pnand %p552, %p553
      %p555 = pneg %p554
      // Predicated region
      $region9: #{tpu_custom_call.1} parent=5 // pred_check
        _
      $region10: #{tpu_custom_call.1} parent=5 // pred_check_branch
        %557 = sbr.rel (%p554) target = $region12
      $region11: #{tpu_custom_call.1} parent=5 // pred_region
        %s558 = ssub.s32 %s41, 1
        // Predicated region
        $region13: #{tpu_custom_call.1} parent=11 // pred_check
          %p559 = pneg %p140
        $region14: #{tpu_custom_call.1} parent=11 // pred_check_branch
          %561 = sbr.rel (%p559) target = $region16
        $region15: #{tpu_custom_call.1} parent=11 // pred_region
          %s563 = ssub.s32 128, 128
          %564 = vsyncadd [#allocation7], %s563
          %s566 = sshll.u32 [#allocation6], 4
          %s567 = int_to_ptr.vmem [resolvable:$true] %s566
          %569 = dma.hbm_to_vmem [thread:$0]  %s3, 128, %s567, [#allocation7]
        $region16: #{tpu_custom_call.1} parent=11 // pred_fallthru
          _
        // Predicated region
        $region17: #{tpu_custom_call.1} parent=11 // pred_check
          %p570 = pneg %p161
        $region18: #{tpu_custom_call.1} parent=11 // pred_check_branch
          %572 = sbr.rel (%p570) target = $region20
        $region19: #{tpu_custom_call.1} parent=11 // pred_region
          _
        $region20: #{tpu_custom_call.1} parent=11 // pred_fallthru
          _
        // Predicated region
        $region21: #{tpu_custom_call.1} parent=11 // pred_check
          %p573 = pneg %p182
        $region22: #{tpu_custom_call.1} parent=11 // pred_check_branch
          %575 = sbr.rel (%p573) target = $region24
        $region23: #{tpu_custom_call.1} parent=11 // pred_region
          _
        $region24: #{tpu_custom_call.1} parent=11 // pred_fallthru
          _
        // Predicated region
        $region25: #{tpu_custom_call.1} parent=11 // pred_check
          %p576 = pneg %p203
        $region26: #{tpu_custom_call.1} parent=11 // pred_check_branch
          %578 = sbr.rel (%p576) target = $region28
        $region27: #{tpu_custom_call.1} parent=11 // pred_region
          %s580 = ssub.s32 512, 512
          %581 = vsyncadd [#allocation7], %s580
          %s582 = sshll.u32 [#allocation8], 4
          %s583 = int_to_ptr.vmem [resolvable:$true] %s582
          %588 = dma.hbm_to_vmem [thread:$0]  %s6, 512, %s583, [#allocation7], 128, 128, 8
        $region28: #{tpu_custom_call.1} parent=11 // pred_fallthru
          _
        // Predicated region
        $region29: #{tpu_custom_call.1} parent=11 // pred_check
          %p589 = pneg %p224
        $region30: #{tpu_custom_call.1} parent=11 // pred_check_branch
          %591 = sbr.rel (%p589) target = $region32
        $region31: #{tpu_custom_call.1} parent=11 // pred_region
          %s593 = ssub.s32 512, 512
          %594 = vsyncadd [#allocation10], %s593
          %s595 = sshll.u32 [#allocation9], 4
          %s596 = int_to_ptr.vmem [resolvable:$true] %s595
          %601 = dma.hbm_to_vmem [thread:$0]  %s7, 512, %s596, [#allocation10], 128, 128, 8
        $region32: #{tpu_custom_call.1} parent=11 // pred_fallthru
          _
        // Predicated region
        $region33: #{tpu_custom_call.1} parent=11 // pred_check
          %p602 = pneg %p245
        $region34: #{tpu_custom_call.1} parent=11 // pred_check_branch
          %604 = sbr.rel (%p602) target = $region36
        $region35: #{tpu_custom_call.1} parent=11 // pred_region
          _
        $region36: #{tpu_custom_call.1} parent=11 // pred_fallthru
          _
        // Predicated region
        $region37: #{tpu_custom_call.1} parent=11 // pred_check
          %p605 = pneg %p266
        $region38: #{tpu_custom_call.1} parent=11 // pred_check_branch
          %607 = sbr.rel (%p605) target = $region40
        $region39: #{tpu_custom_call.1} parent=11 // pred_region
          %s609 = ssub.s32 512, 512
          %610 = vsyncadd [#allocation10], %s609
          %s611 = sshll.u32 [#allocation11], 4
          %s612 = int_to_ptr.vmem [resolvable:$true] %s611
          %617 = dma.hbm_to_vmem [thread:$0]  %s9, 512, %s612, [#allocation10], 128, 128, 8
        $region40: #{tpu_custom_call.1} parent=11 // pred_fallthru
          _
        // Predicated region
        $region41: #{tpu_custom_call.1} parent=11 // pred_check
          %p618 = pneg %p287
        $region42: #{tpu_custom_call.1} parent=11 // pred_check_branch
          %620 = sbr.rel (%p618) target = $region44
        $region43: #{tpu_custom_call.1} parent=11 // pred_region
          %s622 = ssub.s32 512, 512
          %623 = vsyncadd [#allocation13], %s622
          %s624 = sshll.u32 [#allocation12], 4
          %s625 = int_to_ptr.vmem [resolvable:$true] %s624
          %630 = dma.hbm_to_vmem [thread:$0]  %s10, 512, %s625, [#allocation13], 128, 128, 8
        $region44: #{tpu_custom_call.1} parent=11 // pred_fallthru
          _
        // Predicated region
        $region45: #{tpu_custom_call.1} parent=11 // pred_check
          %p631 = pneg %p308
        $region46: #{tpu_custom_call.1} parent=11 // pred_check_branch
          %633 = sbr.rel (%p631) target = $region48
        $region47: #{tpu_custom_call.1} parent=11 // pred_region
          %s635 = ssub.s32 512, 512
          %636 = vsyncadd [#allocation13], %s635
          %s637 = sshll.u32 [#allocation14], 4
          %s638 = int_to_ptr.vmem [resolvable:$true] %s637
          %643 = dma.hbm_to_vmem [thread:$0]  %s11, 512, %s638, [#allocation13], 128, 128, 8
        $region48: #{tpu_custom_call.1} parent=11 // pred_fallthru
          _
        // Predicated region
        $region49: #{tpu_custom_call.1} parent=11 // pred_check
          %p644 = pneg %p329
        $region50: #{tpu_custom_call.1} parent=11 // pred_check_branch
          %646 = sbr.rel (%p644) target = $region52
        $region51: #{tpu_custom_call.1} parent=11 // pred_region
          _
        $region52: #{tpu_custom_call.1} parent=11 // pred_fallthru
          _
        // Predicated region
        $region53: #{tpu_custom_call.1} parent=11 // pred_check
          %p647 = pneg %p350
        $region54: #{tpu_custom_call.1} parent=11 // pred_check_branch
          %649 = sbr.rel (%p647) target = $region56
        $region55: #{tpu_custom_call.1} parent=11 // pred_region
          %s651 = ssub.s32 512, 512
          %652 = vsyncadd [#allocation16], %s651
          %s653 = sshll.u32 [#allocation15], 4
          %s654 = int_to_ptr.vmem [resolvable:$true] %s653
          %659 = dma.hbm_to_vmem [thread:$0]  %s13, 512, %s654, [#allocation16], 128, 128, 8
        $region56: #{tpu_custom_call.1} parent=11 // pred_fallthru
          _
        // Predicated region
        $region57: #{tpu_custom_call.1} parent=11 // pred_check
          %p660 = pneg %p371
        $region58: #{tpu_custom_call.1} parent=11 // pred_check_branch
          %662 = sbr.rel (%p660) target = $region60
        $region59: #{tpu_custom_call.1} parent=11 // pred_region
          %s664 = ssub.s32 512, 512
          %665 = vsyncadd [#allocation16], %s664
          %s666 = sshll.u32 [#allocation17], 4
          %s667 = int_to_ptr.vmem [resolvable:$true] %s666
          %672 = dma.hbm_to_vmem [thread:$0]  %s14, 512, %s667, [#allocation16], 128, 128, 8
        $region60: #{tpu_custom_call.1} parent=11 // pred_fallthru
          _
        // Predicated region
        $region61: #{tpu_custom_call.1} parent=11 // pred_check
          %p673 = pneg %p392
        $region62: #{tpu_custom_call.1} parent=11 // pred_check_branch
          %675 = sbr.rel (%p673) target = $region64
        $region63: #{tpu_custom_call.1} parent=11 // pred_region
          %s677 = ssub.s32 512, 512
          %678 = vsyncadd [#allocation19], %s677
          %s679 = sshll.u32 [#allocation18], 4
          %s680 = int_to_ptr.vmem [resolvable:$true] %s679
          %685 = dma.hbm_to_vmem [thread:$0]  %s15, 512, %s680, [#allocation19], 128, 128, 8
        $region64: #{tpu_custom_call.1} parent=11 // pred_fallthru
          _
        // Predicated region
        $region65: #{tpu_custom_call.1} parent=11 // pred_check
          %p686 = pneg %p413
        $region66: #{tpu_custom_call.1} parent=11 // pred_check_branch
          %688 = sbr.rel (%p686) target = $region68
        $region67: #{tpu_custom_call.1} parent=11 // pred_region
          _
        $region68: #{tpu_custom_call.1} parent=11 // pred_fallthru
          _
        // Predicated region
        $region69: #{tpu_custom_call.1} parent=11 // pred_check
          %p689 = pneg %p434
        $region70: #{tpu_custom_call.1} parent=11 // pred_check_branch
          %691 = sbr.rel (%p689) target = $region72
        $region71: #{tpu_custom_call.1} parent=11 // pred_region
          %s693 = ssub.s32 512, 512
          %694 = vsyncadd [#allocation19], %s693
          %s695 = sshll.u32 [#allocation20], 4
          %s696 = int_to_ptr.vmem [resolvable:$true] %s695
          %701 = dma.hbm_to_vmem [thread:$0]  %s17, 512, %s696, [#allocation19], 128, 128, 8
        $region72: #{tpu_custom_call.1} parent=11 // pred_fallthru
          _
        // Predicated region
        $region73: #{tpu_custom_call.1} parent=11 // pred_check
          %p702 = pneg %p455
        $region74: #{tpu_custom_call.1} parent=11 // pred_check_branch
          %704 = sbr.rel (%p702) target = $region76
        $region75: #{tpu_custom_call.1} parent=11 // pred_region
          %s706 = ssub.s32 512, 512
          %707 = vsyncadd [#allocation22], %s706
          %s708 = sshll.u32 [#allocation21], 4
          %s709 = int_to_ptr.vmem [resolvable:$true] %s708
          %714 = dma.hbm_to_vmem [thread:$0]  %s18, 512, %s709, [#allocation22], 128, 128, 8
        $region76: #{tpu_custom_call.1} parent=11 // pred_fallthru
          _
        // Predicated region
        $region77: #{tpu_custom_call.1} parent=11 // pred_check
          %p715 = pneg %p476
        $region78: #{tpu_custom_call.1} parent=11 // pred_check_branch
          %717 = sbr.rel (%p715) target = $region80
        $region79: #{tpu_custom_call.1} parent=11 // pred_region
          %s719 = ssub.s32 16, 16
          %720 = vsyncadd [#allocation22], %s719
          %s722 = sshll.u32 [#allocation23], 4
          %s723 = int_to_ptr.vmem [resolvable:$true] %s722
          %725 = dma.hbm_to_vmem [thread:$0]  %s19, 16, %s723, [#allocation22]
        $region80: #{tpu_custom_call.1} parent=11 // pred_fallthru
          _
        // Predicated region
        $region81: #{tpu_custom_call.1} parent=11 // pred_check
          %p726 = pneg %p497
        $region82: #{tpu_custom_call.1} parent=11 // pred_check_branch
          %728 = sbr.rel (%p726) target = $region84
        $region83: #{tpu_custom_call.1} parent=11 // pred_region
          _
        $region84: #{tpu_custom_call.1} parent=11 // pred_fallthru
          _
        // Predicated region
        $region85: #{tpu_custom_call.1} parent=11 // pred_check
          %p729 = pneg %p518
        $region86: #{tpu_custom_call.1} parent=11 // pred_check_branch
          %731 = sbr.rel (%p729) target = $region88
        $region87: #{tpu_custom_call.1} parent=11 // pred_region
          %s733 = ssub.s32 16, 16
          %734 = vsyncadd [#allocation25], %s733
          %s736 = sshll.u32 [#allocation24], 4
          %s737 = int_to_ptr.vmem [resolvable:$true] %s736
          %739 = dma.hbm_to_vmem [thread:$0]  %s21, 16, %s737, [#allocation25]
        $region88: #{tpu_custom_call.1} parent=11 // pred_fallthru
          _
      $region12: #{tpu_custom_call.1} parent=5 // pred_fallthru
        _
      %p740 = scmp.lt.s32.totalorder %s41, 8
      // Predicated region
      $region89: #{tpu_custom_call.1} parent=5 // pred_check
        %p741 = pneg %p740
      $region90: #{tpu_custom_call.1} parent=5 // pred_check_branch
        %743 = sbr.rel (%p741) target = $region92
      $region91: #{tpu_custom_call.1} parent=5 // pred_region
        // Predicated region
        $region93: #{tpu_custom_call.1} parent=91 // pred_check
          %p744 = pneg %p61
        $region94: #{tpu_custom_call.1} parent=91 // pred_check_branch
          %746 = sbr.rel (%p744) target = $region96
        $region95: #{tpu_custom_call.1} parent=91 // pred_region
          %p747 = scmp.lt.s32.totalorder %s41, 7
          %s748 = scalar_select %p747, %s41, 7
          %s749 = smul.addr %s748, 2
          %s750 = smul.addr %s749, 8
          %s751 = scalar_lea.vmem %s0, %s750
        $region96: #{tpu_custom_call.1} parent=91 // pred_fallthru
          _
        // Predicated region
        $region97: #{tpu_custom_call.1} parent=91 // pred_check
          %p752 = pneg %p87
        $region98: #{tpu_custom_call.1} parent=91 // pred_check_branch
          %754 = sbr.rel (%p752) target = $region100
        $region99: #{tpu_custom_call.1} parent=91 // pred_region
          %p755 = scmp.lt.s32.totalorder %s41, 7
          %s756 = scalar_select %p755, %s41, 7
          %s757 = smul.addr %s756, 2
          %s758 = smul.addr %s757, 4
          %s759 = scalar_lea.vmem %s1, %s758
        $region100: #{tpu_custom_call.1} parent=91 // pred_fallthru
          _
        // Predicated region
        $region101: #{tpu_custom_call.1} parent=91 // pred_check
          %p760 = pneg %p113
        $region102: #{tpu_custom_call.1} parent=91 // pred_check_branch
          %762 = sbr.rel (%p760) target = $region104
        $region103: #{tpu_custom_call.1} parent=91 // pred_region
          %s763 = sand.u32 %s103, 1
          %s764 = scalar_lea.sflag [#allocation4], %s763
          %s765 = sand.u32 %s103, 1
          %s766 = smul.addr %s765, 8
          %s767 = scalar_lea.vmem [#allocation3], %s766
          %s769 = ssub.s32 128, 128
          %770 = vsyncadd %s764, %s769
          %s771 = smul.addr %s41, 128
          %s772 = scalar_lea.hbm %s2, %s771
          %s774 = sshll.u32 %s767, 4
          %s775 = int_to_ptr.vmem [resolvable:$true] %s774
          %777 = dma.hbm_to_vmem [thread:$0]  %s772, 128, %s775, %s764
        $region104: #{tpu_custom_call.1} parent=91 // pred_fallthru
          _
      $region92: #{tpu_custom_call.1} parent=5 // pred_fallthru
        _
      %p778 = scmp.le.s32.totalorder 1, %s41
      %p779 = scmp.lt.s32.totalorder %s41, 9
      %p780 = pnand %p778, %p779
      %p781 = pneg %p780
      // Predicated region
      $region105: #{tpu_custom_call.1} parent=5 // pred_check
        _
      $region106: #{tpu_custom_call.1} parent=5 // pred_check_branch
        %783 = sbr.rel (%p780) target = $region108
      $region107: #{tpu_custom_call.1} parent=5 // pred_region
        %s784 = ssub.s32 %s41, 1
        %s785 = sand.u32 %s106, 1
        %s786 = scalar_lea.sflag [#allocation4], %s785
        %s787 = sand.u32 %s106, 1
        %s788 = smul.addr %s787, 8
        %s789 = scalar_lea.vmem [#allocation3], %s788
        // Predicated region
        $region109: #{tpu_custom_call.1} parent=107 // pred_check
          %p790 = pneg %p119
        $region110: #{tpu_custom_call.1} parent=107 // pred_check_branch
          %792 = sbr.rel (%p790) target = $region112
        $region111: #{tpu_custom_call.1} parent=107 // pred_region
          %793 = dma.done %s786, 128
        $region112: #{tpu_custom_call.1} parent=107 // pred_fallthru
          _
        // Predicated region
        $region113: #{tpu_custom_call.1} parent=107 // pred_check
          %p794 = pneg %p140
        $region114: #{tpu_custom_call.1} parent=107 // pred_check_branch
          %796 = sbr.rel (%p794) target = $region116
        $region115: #{tpu_custom_call.1} parent=107 // pred_region
          %797 = dma.done [#allocation7], 128
        $region116: #{tpu_custom_call.1} parent=107 // pred_fallthru
          _
        // Predicated region
        $region117: #{tpu_custom_call.1} parent=107 // pred_check
          %p798 = pneg %p203
        $region118: #{tpu_custom_call.1} parent=107 // pred_check_branch
          %800 = sbr.rel (%p798) target = $region120
        $region119: #{tpu_custom_call.1} parent=107 // pred_region
          %801 = dma.done [#allocation7], 512
        $region120: #{tpu_custom_call.1} parent=107 // pred_fallthru
          _
        // Predicated region
        $region121: #{tpu_custom_call.1} parent=107 // pred_check
          %p802 = pneg %p224
        $region122: #{tpu_custom_call.1} parent=107 // pred_check_branch
          %804 = sbr.rel (%p802) target = $region124
        $region123: #{tpu_custom_call.1} parent=107 // pred_region
          %805 = dma.done [#allocation10], 512
        $region124: #{tpu_custom_call.1} parent=107 // pred_fallthru
          _
        // Predicated region
        $region125: #{tpu_custom_call.1} parent=107 // pred_check
          %p806 = pneg %p266
        $region126: #{tpu_custom_call.1} parent=107 // pred_check_branch
          %808 = sbr.rel (%p806) target = $region128
        $region127: #{tpu_custom_call.1} parent=107 // pred_region
          %809 = dma.done [#allocation10], 512
        $region128: #{tpu_custom_call.1} parent=107 // pred_fallthru
          _
        // Predicated region
        $region129: #{tpu_custom_call.1} parent=107 // pred_check
          %p810 = pneg %p287
        $region130: #{tpu_custom_call.1} parent=107 // pred_check_branch
          %812 = sbr.rel (%p810) target = $region132
        $region131: #{tpu_custom_call.1} parent=107 // pred_region
          %813 = dma.done [#allocation13], 512
        $region132: #{tpu_custom_call.1} parent=107 // pred_fallthru
          _
        // Predicated region
        $region133: #{tpu_custom_call.1} parent=107 // pred_check
          %p814 = pneg %p308
        $region134: #{tpu_custom_call.1} parent=107 // pred_check_branch
          %816 = sbr.rel (%p814) target = $region136
        $region135: #{tpu_custom_call.1} parent=107 // pred_region
          %817 = dma.done [#allocation13], 512
        $region136: #{tpu_custom_call.1} parent=107 // pred_fallthru
          _
        // Predicated region
        $region137: #{tpu_custom_call.1} parent=107 // pred_check
          %p818 = pneg %p350
        $region138: #{tpu_custom_call.1} parent=107 // pred_check_branch
          %820 = sbr.rel (%p818) target = $region140
        $region139: #{tpu_custom_call.1} parent=107 // pred_region
          %821 = dma.done [#allocation16], 512
        $region140: #{tpu_custom_call.1} parent=107 // pred_fallthru
          _
        // Predicated region
        $region141: #{tpu_custom_call.1} parent=107 // pred_check
          %p822 = pneg %p371
        $region142: #{tpu_custom_call.1} parent=107 // pred_check_branch
          %824 = sbr.rel (%p822) target = $region144
        $region143: #{tpu_custom_call.1} parent=107 // pred_region
          %825 = dma.done [#allocation16], 512
        $region144: #{tpu_custom_call.1} parent=107 // pred_fallthru
          _
        // Predicated region
        $region145: #{tpu_custom_call.1} parent=107 // pred_check
          %p826 = pneg %p392
        $region146: #{tpu_custom_call.1} parent=107 // pred_check_branch
          %828 = sbr.rel (%p826) target = $region148
        $region147: #{tpu_custom_call.1} parent=107 // pred_region
          %829 = dma.done [#allocation19], 512
        $region148: #{tpu_custom_call.1} parent=107 // pred_fallthru
          _
        // Predicated region
        $region149: #{tpu_custom_call.1} parent=107 // pred_check
          %p830 = pneg %p434
        $region150: #{tpu_custom_call.1} parent=107 // pred_check_branch
          %832 = sbr.rel (%p830) target = $region152
        $region151: #{tpu_custom_call.1} parent=107 // pred_region
          %833 = dma.done [#allocation19], 512
        $region152: #{tpu_custom_call.1} parent=107 // pred_fallthru
          _
        // Predicated region
        $region153: #{tpu_custom_call.1} parent=107 // pred_check
          %p834 = pneg %p455
        $region154: #{tpu_custom_call.1} parent=107 // pred_check_branch
          %836 = sbr.rel (%p834) target = $region156
        $region155: #{tpu_custom_call.1} parent=107 // pred_region
          %837 = dma.done [#allocation22], 512
        $region156: #{tpu_custom_call.1} parent=107 // pred_fallthru
          _
        // Predicated region
        $region157: #{tpu_custom_call.1} parent=107 // pred_check
          %p838 = pneg %p476
        $region158: #{tpu_custom_call.1} parent=107 // pred_check_branch
          %840 = sbr.rel (%p838) target = $region160
        $region159: #{tpu_custom_call.1} parent=107 // pred_region
          %841 = dma.done [#allocation22], 16
        $region160: #{tpu_custom_call.1} parent=107 // pred_fallthru
          _
        // Predicated region
        $region161: #{tpu_custom_call.1} parent=107 // pred_check
          %p842 = pneg %p518
        $region162: #{tpu_custom_call.1} parent=107 // pred_check_branch
          %844 = sbr.rel (%p842) target = $region164
        $region163: #{tpu_custom_call.1} parent=107 // pred_region
          %845 = dma.done [#allocation25], 16
        $region164: #{tpu_custom_call.1} parent=107 // pred_fallthru
          _
        %p846 = scmp.lt.s32.totalorder %s46, 7
        %s847 = scalar_select %p846, %s46, 7
        %s848 = smul.addr %s847, 2
        %s849 = smul.addr %s848, 8
        %s850 = scalar_lea.vmem %s0, %s849
        %p851 = pneg %p67
        %p852 = pneg %p64
        %p853 = scmp.lt.s32.totalorder %s46, 7
        %s854 = scalar_select %p853, %s46, 7
        %s855 = smul.addr %s854, 2
        %s856 = smul.addr %s855, 4
        %s857 = scalar_lea.vmem %s1, %s856
        %p858 = pneg %p93
        %p859 = pneg %p90
        %s860 = sand.u32 %s106, 1
        %s861 = scalar_lea.sflag [#allocation4], %s860
        %s862 = sand.u32 %s106, 1
        %s863 = smul.addr %s862, 8
        %s864 = scalar_lea.vmem [#allocation3], %s863
        %p865 = pneg %p119
        %p866 = pneg %p116
        %p867 = pneg %p140
        %p868 = pneg %p137
        %p869 = pneg %p161
        %p870 = pneg %p158
        %p871 = pneg %p182
        %p872 = pneg %p179
        %p873 = pneg %p203
        %p874 = pneg %p200
        %p875 = pneg %p224
        %p876 = pneg %p221
        %p877 = pneg %p245
        %p878 = pneg %p242
        %p879 = pneg %p266
        %p880 = pneg %p263
        %p881 = pneg %p287
        %p882 = pneg %p284
        %p883 = pneg %p308
        %p884 = pneg %p305
        %p885 = pneg %p329
        %p886 = pneg %p326
        %p887 = pneg %p350
        %p888 = pneg %p347
        %p889 = pneg %p371
        %p890 = pneg %p368
        %p891 = pneg %p392
        %p892 = pneg %p389
        %p893 = pneg %p413
        %p894 = pneg %p410
        %p895 = pneg %p434
        %p896 = pneg %p431
        %p897 = pneg %p455
        %p898 = pneg %p452
        %p899 = pneg %p476
        %p900 = pneg %p473
        %p901 = pneg %p497
        %p902 = pneg %p494
        %p903 = pneg %p518
        %p904 = pneg %p515
        %p905 = pneg %p544
        %p906 = pneg %p541
        %s907 = sand.u32 %s531, 1
        %s908 = scalar_lea.sflag [#allocation5], %s907
        %s909 = sand.u32 %s531, 1
        %s910 = smul.addr %s909, 4
        %s911 = scalar_lea.vmem [#allocation26], %s910
        %p912 = scmp.lt.s32.totalorder %s46, 7
        %s913 = scalar_select %p912, %s46, 7
        %s914 = smul.addr %s913, 2
        %s915 = smul.addr %s914, 8
        %s916 = scalar_lea.vmem %s0, %s915
        %p917 = scmp.lt.s32.totalorder %s46, 7
        %s918 = scalar_select %p917, %s46, 7
        %s919 = smul.addr %s918, 2
        %s920 = smul.addr %s919, 4
        %s921 = scalar_lea.vmem %s1, %s920
        %v923 = vld [vmem:[%s921] sm:$0xf]
        %v924 = vld [vmem:[%s921 + $0x4] sm:$0xf]
        %v925 = vld [vmem:[%s789] sm:$0xff]
        %v926 = vld [vmem:[%s916] sm:$0xff]
        %v927 = vld [vmem:[%s916 + $0x8] sm:$0xff]
        %v928 = vld [vmem:[#allocation6] sm:$0xff]
        %vm929 = vcmask 64512
        %v931 = vsel %vm929, %v926, 0
        %v934 = vsel %vm929, %v927, 0
        %936 = vmatprep.subr.mxu0 0.0
        %937 = vmatpush1.msra.mxu0 0.0
        %938 = vmatprep.subr.mxu0 0.0
        %939 = vmatpush1.msra.mxu0 0.0
        %940 = vmatprep.subr.mxu0 0.0
        %941 = vmatpush1.msra.mxu0 0.0
        %942 = vmatprep.subr.mxu0 0.0
        %943 = vmatpush1.msra.mxu0 0.0
        %944 = vmatprep.subr.mxu0 0.0
        %945 = vmatpush1.msra.mxu0 0.0
        %946 = vmatprep.subr.mxu0 0.0
        %947 = vmatpush1.msra.mxu0 0.0
        %948 = vmatprep.subr.mxu0 0.0
        %949 = vmatpush1.msra.mxu0 0.0
        %950 = vmatprep.subr.mxu0 0.0
        %951 = vmatpush1.msra.mxu0 0.0
        %952 = vmatprep.subr.mxu0 0.0
        %953 = vmatpush1.msra.mxu0 0.0
        %954 = vmatprep.subr.mxu0 0.0
        %955 = vmatpush1.msra.mxu0 0.0
        %956 = vmatprep.subr.mxu0 0.0
        %957 = vmatpush1.msra.mxu0 0.0
        %958 = vmatprep.subr.mxu0 0.0
        %959 = vmatpush1.msra.mxu0 0.0
        %960 = vmatprep.subr.mxu0 0.0
        %961 = vmatpush1.msra.mxu0 0.0
        %962 = vmatprep.subr.mxu0 0.0
        %963 = vmatpush1.msra.mxu0 0.0
        %964 = vmatprep.subr.mxu0 0.0
        %965 = vmatpush1.msra.mxu0 0.0
        %966 = vmatprep.subr.mxu0 0.0
        %967 = vmatpush1.msra.mxu0 %v928
        %968 = vmatprep.subr.mxu0 0.0
        %969 = vmatpush2.msra.mxu0 0.0
        %970 = vmatprep.subr.mxu0 0.0
        %971 = vmatpush2.msra.mxu0 0.0
        %972 = vmatprep.subr.mxu0 0.0
        %973 = vmatpush2.msra.mxu0 0.0
        %974 = vmatprep.subr.mxu0 0.0
        %975 = vmatpush2.msra.mxu0 0.0
        %976 = vmatprep.subr.mxu0 0.0
        %977 = vmatpush2.msra.mxu0 0.0
        %978 = vmatprep.subr.mxu0 0.0
        %979 = vmatpush2.msra.mxu0 0.0
        %980 = vmatprep.subr.mxu0 0.0
        %981 = vmatpush2.msra.mxu0 0.0
        %982 = vmatprep.subr.mxu0 0.0
        %983 = vmatpush2.msra.mxu0 0.0
        %984 = vmatprep.subr.mxu0 0.0
        %985 = vmatpush2.msra.mxu0 0.0
        %986 = vmatprep.subr.mxu0 0.0
        %987 = vmatpush2.msra.mxu0 0.0
        %988 = vmatprep.subr.mxu0 0.0
        %989 = vmatpush2.msra.mxu0 0.0
        %990 = vmatprep.subr.mxu0 0.0
        %991 = vmatpush2.msra.mxu0 0.0
        %992 = vmatprep.subr.mxu0 0.0
        %993 = vmatpush2.msra.mxu0 0.0
        %994 = vmatprep.subr.mxu0 0.0
        %995 = vmatpush2.msra.mxu0 0.0
        %996 = vmatprep.subr.mxu0 0.0
        %997 = vmatpush2.msra.mxu0 0.0
        %998 = vmatprep.subr.mxu0 0.0
        %999 = vmatpush2.msra.mxu0 0.0
        %1000 = vmatprep.mubr.f32.mxu0 0.0
        %1001 = vmatmul.mubr.f32.gmra.mxu0 %v931
        %v1002 = vpop.f32.mrf.mxu0
        %v1003 = vadd.f32 0.0, %v1002
        %v1004 = vpop.f32.mrf.mxu0
        %1005 = vmatprep.mubr.f32.mxu0 0.0
        %1006 = vmatmul.mubr.f32.gmra.mxu0 %v934
        %v1007 = vpop.f32.mrf.mxu0
        %v1008 = vadd.f32 0.0, %v1007
        %v1009 = vpop.f32.mrf.mxu0
        %1010 = vdwg.mxu0
        %v1011 = vpack.c.bf16 %v1008, %v1003
        %v1013 = vunpack.c.l.b16 %v1011
        %v1014 = vunpack.c.h.b16 %v1011
        %v1015 = vpack.c.b16 %v1013, %v1013
        %v1016 = vpack.c.b16 %v1014, %v1014
        %1017 = vrot.lane.b32.xlu0 %v1015, 96
        %v1018 = vpop.permute.xlu0 %1017
        %1019 = vrot.lane.b32.xlu0 %v1016, 96
        %v1020 = vpop.permute.xlu0 %1019
        %vm1023 = vcmask 257024
        %1024 = vst.msk [vmem:[#allocation2] sm:$0xf] %vm1023, %v1018
        %1025 = vst.msk [vmem:[#allocation2 + $0x4] sm:$0xf] %vm1023, %v1020
        %1026 = vrot.lane.b32.xlu0 %v1015, 64
        %v1027 = vpop.permute.xlu0 %1026
        %1028 = vrot.lane.b32.xlu0 %v1016, 64
        %v1029 = vpop.permute.xlu0 %1028
        %1032 = vst.msk [vmem:[#allocation2 + $0x8] sm:$0xf] %vm1023, %v1027
        %1033 = vst.msk [vmem:[#allocation2 + $0xc] sm:$0xf] %vm1023, %v1029
        %1034 = vrot.lane.b32.xlu0 %v1015, 32
        %v1035 = vpop.permute.xlu0 %1034
        %1036 = vrot.lane.b32.xlu0 %v1016, 32
        %v1037 = vpop.permute.xlu0 %1036
        %1040 = vst.msk [vmem:[#allocation2 + $0x10] sm:$0xf] %vm1023, %v1035
        %1041 = vst.msk [vmem:[#allocation2 + $0x14] sm:$0xf] %vm1023, %v1037
        %v1042 = vld [vmem:[#allocation2] sm:$0xf]
        %v1043 = vld [vmem:[#allocation2 + $0x4] sm:$0xf]
        %v1044 = vld [vmem:[#allocation2 + $0x8] sm:$0xf]
        %v1045 = vld [vmem:[#allocation2 + $0xc] sm:$0xf]
        %v1046 = vld [vmem:[#allocation2 + $0x10] sm:$0xf]
        %v1047 = vld [vmem:[#allocation2 + $0x14] sm:$0xf]
        %v1050 = vunpack.c.l.b16 %v923
        %v1051 = vunpack.c.l.b16 %v924
        %v1052 = vpack.c.b16 %v1051, %v1050
        %v1059 = vunpack.c.l.b16 %v1042
        %v1060 = vunpack.c.l.b16 %v1043
        %v1061 = vunpack.c.l.b16 %v1044
        %v1062 = vunpack.c.l.b16 %v1045
        %v1063 = vunpack.c.l.b16 %v1046
        %v1064 = vunpack.c.l.b16 %v1047
        %v1065 = vpack.c.b16 %v1060, %v1059
        %v1066 = vpack.c.b16 %v1062, %v1061
        %v1067 = vpack.c.b16 %v1064, %v1063
        %vm1071 = vcmask 392192
        %v1073 = vsel %vm1071, %v1052, 0
        %1075 = vmatprep.subr.bf16.mxu0 0
        %1076 = vmatpush1.bf16.msra.mxu0 0
        %1077 = vmatprep.subr.bf16.mxu0 0
        %1078 = vmatpush1.bf16.msra.mxu0 0
        %1079 = vmatprep.subr.bf16.mxu0 0
        %1080 = vmatpush1.bf16.msra.mxu0 0
        %1081 = vmatprep.subr.bf16.mxu0 0
        %1082 = vmatpush1.bf16.msra.mxu0 0
        %1083 = vmatprep.subr.bf16.mxu0 0
        %1084 = vmatpush1.bf16.msra.mxu0 0
        %1085 = vmatprep.subr.bf16.mxu0 0
        %1086 = vmatpush1.bf16.msra.mxu0 %v1067
        %1087 = vmatprep.subr.bf16.mxu0 0
        %1088 = vmatpush1.bf16.msra.mxu0 %v1066
        %1089 = vmatprep.subr.bf16.mxu0 0
        %1090 = vmatpush1.bf16.msra.mxu0 %v1065
        %1091 = vmatprep.subr.bf16.mxu0 0
        %1092 = vmatpush2.bf16.msra.mxu0 0
        %1093 = vmatprep.subr.bf16.mxu0 0
        %1094 = vmatpush2.bf16.msra.mxu0 0
        %1095 = vmatprep.subr.bf16.mxu0 0
        %1096 = vmatpush2.bf16.msra.mxu0 0
        %1097 = vmatprep.subr.bf16.mxu0 0
        %1098 = vmatpush2.bf16.msra.mxu0 0
        %1099 = vmatprep.subr.bf16.mxu0 0
        %1100 = vmatpush2.bf16.msra.mxu0 0
        %1101 = vmatprep.subr.bf16.mxu0 0
        %1102 = vmatpush2.bf16.msra.mxu0 0
        %1103 = vmatprep.subr.bf16.mxu0 0
        %1104 = vmatpush2.bf16.msra.mxu0 0
        %1105 = vmatprep.subr.bf16.mxu0 0
        %1106 = vmatpush2.bf16.msra.mxu0 0
        %1107 = vmatprep.mubr.bf16.mxu0 0
        %1108 = vmatmul.mubr.bf16.gmra.mxu0 %v1073
        %v1109 = vpop.f32.mrf.mxu0
        %v1110 = vadd.f32 0.0, %v1109
        %v1111 = vpop.f32.mrf.mxu0
        %v1112 = vpop.f32.mrf.mxu0
        %v1113 = vadd.f32 0.0, %v1112
        %v1114 = vpop.f32.mrf.mxu0
        %1115 = vdwg.mxu0
        %v1116 = vld [vmem:[%s4] sm:$0x1]
        %v1118 = vlaneseq
        %v1119 = vshrl.u32 %v1118, 7
        %v1120 = vsub.s32 0, %v1119
        %v1121 = vrot.slane %v1116, %v1120
        %v1123 = vadd.f32 %v1003, %v1121
        %v1124 = vadd.f32 %v1008, %v1121
        %v1125 = vadd.f32 %v1123, %v1110
        %v1126 = vadd.f32 %v1124, %v1113
        %v1127 = vtanh.pop %v1125
        %v1128 = vtanh.pop %v1126
        %vm1129 = vcmask 130048
        %v1131 = vsel %vm1129, %v925, 0
        %1133 = vmatprep.subr.mxu0 0.0
        %1134 = vmatpush1.msra.mxu0 0.0
        %1135 = vmatprep.subr.mxu0 0.0
        %1136 = vmatpush1.msra.mxu0 0.0
        %1137 = vmatprep.subr.mxu0 0.0
        %1138 = vmatpush1.msra.mxu0 0.0
        %1139 = vmatprep.subr.mxu0 0.0
        %1140 = vmatpush1.msra.mxu0 0.0
        %1141 = vmatprep.subr.mxu0 0.0
        %1142 = vmatpush1.msra.mxu0 0.0
        %1143 = vmatprep.subr.mxu0 0.0
        %1144 = vmatpush1.msra.mxu0 0.0
        %1145 = vmatprep.subr.mxu0 0.0
        %1146 = vmatpush1.msra.mxu0 0.0
        %1147 = vmatprep.subr.mxu0 0.0
        %1148 = vmatpush1.msra.mxu0 0.0
        %1149 = vmatprep.subr.mxu0 0.0
        %1150 = vmatpush1.msra.mxu0 0.0
        %1151 = vmatprep.subr.mxu0 0.0
        %1152 = vmatpush1.msra.mxu0 0.0
        %1153 = vmatprep.subr.mxu0 0.0
        %1154 = vmatpush1.msra.mxu0 0.0
        %1155 = vmatprep.subr.mxu0 0.0
        %1156 = vmatpush1.msra.mxu0 0.0
        %1157 = vmatprep.subr.mxu0 0.0
        %1158 = vmatpush1.msra.mxu0 0.0
        %1159 = vmatprep.subr.mxu0 0.0
        %1160 = vmatpush1.msra.mxu0 0.0
        %1161 = vmatprep.subr.mxu0 0.0
        %1162 = vmatpush1.msra.mxu0 %v1128
        %1163 = vmatprep.subr.mxu0 0.0
        %1164 = vmatpush1.msra.mxu0 %v1127
        %1165 = vmatprep.subr.mxu0 0.0
        %1166 = vmatpush2.msra.mxu0 0.0
        %1167 = vmatprep.subr.mxu0 0.0
        %1168 = vmatpush2.msra.mxu0 0.0
        %1169 = vmatprep.subr.mxu0 0.0
        %1170 = vmatpush2.msra.mxu0 0.0
        %1171 = vmatprep.subr.mxu0 0.0
        %1172 = vmatpush2.msra.mxu0 0.0
        %1173 = vmatprep.subr.mxu0 0.0
        %1174 = vmatpush2.msra.mxu0 0.0
        %1175 = vmatprep.subr.mxu0 0.0
        %1176 = vmatpush2.msra.mxu0 0.0
        %1177 = vmatprep.subr.mxu0 0.0
        %1178 = vmatpush2.msra.mxu0 0.0
        %1179 = vmatprep.subr.mxu0 0.0
        %1180 = vmatpush2.msra.mxu0 0.0
        %1181 = vmatprep.subr.mxu0 0.0
        %1182 = vmatpush2.msra.mxu0 0.0
        %1183 = vmatprep.subr.mxu0 0.0
        %1184 = vmatpush2.msra.mxu0 0.0
        %1185 = vmatprep.subr.mxu0 0.0
        %1186 = vmatpush2.msra.mxu0 0.0
        %1187 = vmatprep.subr.mxu0 0.0
        %1188 = vmatpush2.msra.mxu0 0.0
        %1189 = vmatprep.subr.mxu0 0.0
        %1190 = vmatpush2.msra.mxu0 0.0
        %1191 = vmatprep.subr.mxu0 0.0
        %1192 = vmatpush2.msra.mxu0 0.0
        %1193 = vmatprep.subr.mxu0 0.0
        %1194 = vmatpush2.msra.mxu0 0.0
        %1195 = vmatprep.subr.mxu0 0.0
        %1196 = vmatpush2.msra.mxu0 0.0
        %1197 = vmatprep.mubr.f32.mxu0 0.0
        %1198 = vmatmul.mubr.f32.gmra.mxu0 %v1131
        %v1199 = vpop.f32.mrf.mxu0
        %v1200 = vadd.f32 0.0, %v1199
        %v1201 = vpop.f32.mrf.mxu0
        %1202 = vdwg.mxu0
        %v1203 = vld [vmem:[%s5] sm:$0xff]
        %v1204 = vld [vmem:[%s5 + $0x8] sm:$0xff]
        %v1205 = vld [vmem:[%s5 + $0x10] sm:$0xff]
        %v1206 = vld [vmem:[%s5 + $0x18] sm:$0xff]
        %v1207 = vld [vmem:[#allocation8] sm:$0xff]
        %v1208 = vld [vmem:[#allocation8 + $0x8] sm:$0xff]
        %v1209 = vld [vmem:[#allocation8 + $0x10] sm:$0xff]
        %v1210 = vld [vmem:[#allocation8 + $0x18] sm:$0xff]
        %v1212 = vrot.slane %v1200, 4
        %vm1213 = vcmask 261120
        %v1214 = vsel %vm1213, %v1212, 0
        %1216 = vmatprep.subr.mxu0 0.0
        %1217 = vmatpush1.msra.mxu0 0.0
        %1218 = vmatprep.subr.mxu0 0.0
        %1219 = vmatpush1.msra.mxu0 0.0
        %1220 = vmatprep.subr.mxu0 0.0
        %1221 = vmatpush1.msra.mxu0 0.0
        %1222 = vmatprep.subr.mxu0 0.0
        %1223 = vmatpush1.msra.mxu0 0.0
        %1224 = vmatprep.subr.mxu0 0.0
        %1225 = vmatpush1.msra.mxu0 0.0
        %1226 = vmatprep.subr.mxu0 0.0
        %1227 = vmatpush1.msra.mxu0 0.0
        %1228 = vmatprep.subr.mxu0 0.0
        %1229 = vmatpush1.msra.mxu0 0.0
        %1230 = vmatprep.subr.mxu0 0.0
        %1231 = vmatpush1.msra.mxu0 0.0
        %1232 = vmatprep.subr.mxu0 0.0
        %1233 = vmatpush1.msra.mxu0 0.0
        %1234 = vmatprep.subr.mxu0 0.0
        %1235 = vmatpush1.msra.mxu0 0.0
        %1236 = vmatprep.subr.mxu0 0.0
        %1237 = vmatpush1.msra.mxu0 0.0
        %1238 = vmatprep.subr.mxu0 0.0
        %1239 = vmatpush1.msra.mxu0 0.0
        %1240 = vmatprep.subr.mxu0 0.0
        %1241 = vmatpush1.msra.mxu0 %v1210
        %1242 = vmatprep.subr.mxu0 0.0
        %1243 = vmatpush1.msra.mxu0 %v1209
        %1244 = vmatprep.subr.mxu0 0.0
        %1245 = vmatpush1.msra.mxu0 %v1208
        %1246 = vmatprep.subr.mxu0 0.0
        %1247 = vmatpush1.msra.mxu0 %v1207
        %1248 = vmatprep.subr.mxu0 0.0
        %1249 = vmatpush2.msra.mxu0 0.0
        %1250 = vmatprep.subr.mxu0 0.0
        %1251 = vmatpush2.msra.mxu0 0.0
        %1252 = vmatprep.subr.mxu0 0.0
        %1253 = vmatpush2.msra.mxu0 0.0
        %1254 = vmatprep.subr.mxu0 0.0
        %1255 = vmatpush2.msra.mxu0 0.0
        %1256 = vmatprep.subr.mxu0 0.0
        %1257 = vmatpush2.msra.mxu0 0.0
        %1258 = vmatprep.subr.mxu0 0.0
        %1259 = vmatpush2.msra.mxu0 0.0
        %1260 = vmatprep.subr.mxu0 0.0
        %1261 = vmatpush2.msra.mxu0 0.0
        %1262 = vmatprep.subr.mxu0 0.0
        %1263 = vmatpush2.msra.mxu0 0.0
        %1264 = vmatprep.subr.mxu0 0.0
        %1265 = vmatpush2.msra.mxu0 0.0
        %1266 = vmatprep.subr.mxu0 0.0
        %1267 = vmatpush2.msra.mxu0 0.0
        %1268 = vmatprep.subr.mxu0 0.0
        %1269 = vmatpush2.msra.mxu0 0.0
        %1270 = vmatprep.subr.mxu0 0.0
        %1271 = vmatpush2.msra.mxu0 0.0
        %1272 = vmatprep.subr.mxu0 0.0
        %1273 = vmatpush2.msra.mxu0 0.0
        %1274 = vmatprep.subr.mxu0 0.0
        %1275 = vmatpush2.msra.mxu0 0.0
        %1276 = vmatprep.subr.mxu0 0.0
        %1277 = vmatpush2.msra.mxu0 0.0
        %1278 = vmatprep.subr.mxu0 0.0
        %1279 = vmatpush2.msra.mxu0 0.0
        %1280 = vmatprep.mubr.f32.mxu0 0.0
        %1281 = vmatmul.mubr.f32.gmra.mxu0 %v1214
        %v1282 = vpop.f32.mrf.mxu0
        %v1283 = vadd.f32 0.0, %v1282
        %v1284 = vpop.f32.mrf.mxu0
        %1285 = vdwg.mxu0
        %v1286 = vsel %vm1213, %v1200, 0
        %1288 = vmatprep.subr.mxu0 0.0
        %1289 = vmatpush1.msra.mxu0 0.0
        %1290 = vmatprep.subr.mxu0 0.0
        %1291 = vmatpush1.msra.mxu0 0.0
        %1292 = vmatprep.subr.mxu0 0.0
        %1293 = vmatpush1.msra.mxu0 0.0
        %1294 = vmatprep.subr.mxu0 0.0
        %1295 = vmatpush1.msra.mxu0 0.0
        %1296 = vmatprep.subr.mxu0 0.0
        %1297 = vmatpush1.msra.mxu0 0.0
        %1298 = vmatprep.subr.mxu0 0.0
        %1299 = vmatpush1.msra.mxu0 0.0
        %1300 = vmatprep.subr.mxu0 0.0
        %1301 = vmatpush1.msra.mxu0 0.0
        %1302 = vmatprep.subr.mxu0 0.0
        %1303 = vmatpush1.msra.mxu0 0.0
        %1304 = vmatprep.subr.mxu0 0.0
        %1305 = vmatpush1.msra.mxu0 0.0
        %1306 = vmatprep.subr.mxu0 0.0
        %1307 = vmatpush1.msra.mxu0 0.0
        %1308 = vmatprep.subr.mxu0 0.0
        %1309 = vmatpush1.msra.mxu0 0.0
        %1310 = vmatprep.subr.mxu0 0.0
        %1311 = vmatpush1.msra.mxu0 0.0
        %1312 = vmatprep.subr.mxu0 0.0
        %1313 = vmatpush1.msra.mxu0 %v1206
        %1314 = vmatprep.subr.mxu0 0.0
        %1315 = vmatpush1.msra.mxu0 %v1205
        %1316 = vmatprep.subr.mxu0 0.0
        %1317 = vmatpush1.msra.mxu0 %v1204
        %1318 = vmatprep.subr.mxu0 0.0
        %1319 = vmatpush1.msra.mxu0 %v1203
        %1320 = vmatprep.subr.mxu0 0.0
        %1321 = vmatpush2.msra.mxu0 0.0
        %1322 = vmatprep.subr.mxu0 0.0
        %1323 = vmatpush2.msra.mxu0 0.0
        %1324 = vmatprep.subr.mxu0 0.0
        %1325 = vmatpush2.msra.mxu0 0.0
        %1326 = vmatprep.subr.mxu0 0.0
        %1327 = vmatpush2.msra.mxu0 0.0
        %1328 = vmatprep.subr.mxu0 0.0
        %1329 = vmatpush2.msra.mxu0 0.0
        %1330 = vmatprep.subr.mxu0 0.0
        %1331 = vmatpush2.msra.mxu0 0.0
        %1332 = vmatprep.subr.mxu0 0.0
        %1333 = vmatpush2.msra.mxu0 0.0
        %1334 = vmatprep.subr.mxu0 0.0
        %1335 = vmatpush2.msra.mxu0 0.0
        %1336 = vmatprep.subr.mxu0 0.0
        %1337 = vmatpush2.msra.mxu0 0.0
        %1338 = vmatprep.subr.mxu0 0.0
        %1339 = vmatpush2.msra.mxu0 0.0
        %1340 = vmatprep.subr.mxu0 0.0
        %1341 = vmatpush2.msra.mxu0 0.0
        %1342 = vmatprep.subr.mxu0 0.0
        %1343 = vmatpush2.msra.mxu0 0.0
        %1344 = vmatprep.subr.mxu0 0.0
        %1345 = vmatpush2.msra.mxu0 0.0
        %1346 = vmatprep.subr.mxu0 0.0
        %1347 = vmatpush2.msra.mxu0 0.0
        %1348 = vmatprep.subr.mxu0 0.0
        %1349 = vmatpush2.msra.mxu0 0.0
        %1350 = vmatprep.subr.mxu0 0.0
        %1351 = vmatpush2.msra.mxu0 0.0
        %1352 = vmatprep.mubr.f32.mxu0 0.0
        %1353 = vmatmul.mubr.f32.gmra.mxu0 %v1286
        %v1354 = vpop.f32.mrf.mxu0
        %v1355 = vadd.f32 %v1283, %v1354
        %v1356 = vpop.f32.mrf.mxu0
        %1357 = vdwg.mxu0
        %v1358 = vld [vmem:[#allocation9] sm:$0xff]
        %v1359 = vld [vmem:[#allocation9 + $0x8] sm:$0xff]
        %v1360 = vld [vmem:[#allocation9 + $0x10] sm:$0xff]
        %v1361 = vld [vmem:[#allocation9 + $0x18] sm:$0xff]
        %v1363 = vsel %vm1213, %v1127, 0
        %v1366 = vsel %vm1213, %v1128, 0
        %1368 = vmatprep.subr.mxu0 0.0
        %1369 = vmatpush1.msra.mxu0 0.0
        %1370 = vmatprep.subr.mxu0 0.0
        %1371 = vmatpush1.msra.mxu0 0.0
        %1372 = vmatprep.subr.mxu0 0.0
        %1373 = vmatpush1.msra.mxu0 0.0
        %1374 = vmatprep.subr.mxu0 0.0
        %1375 = vmatpush1.msra.mxu0 0.0
        %1376 = vmatprep.subr.mxu0 0.0
        %1377 = vmatpush1.msra.mxu0 0.0
        %1378 = vmatprep.subr.mxu0 0.0
        %1379 = vmatpush1.msra.mxu0 0.0
        %1380 = vmatprep.subr.mxu0 0.0
        %1381 = vmatpush1.msra.mxu0 0.0
        %1382 = vmatprep.subr.mxu0 0.0
        %1383 = vmatpush1.msra.mxu0 0.0
        %1384 = vmatprep.subr.mxu0 0.0
        %1385 = vmatpush1.msra.mxu0 0.0
        %1386 = vmatprep.subr.mxu0 0.0
        %1387 = vmatpush1.msra.mxu0 0.0
        %1388 = vmatprep.subr.mxu0 0.0
        %1389 = vmatpush1.msra.mxu0 0.0
        %1390 = vmatprep.subr.mxu0 0.0
        %1391 = vmatpush1.msra.mxu0 0.0
        %1392 = vmatprep.subr.mxu0 0.0
        %1393 = vmatpush1.msra.mxu0 %v1361
        %1394 = vmatprep.subr.mxu0 0.0
        %1395 = vmatpush1.msra.mxu0 %v1360
        %1396 = vmatprep.subr.mxu0 0.0
        %1397 = vmatpush1.msra.mxu0 %v1359
        %1398 = vmatprep.subr.mxu0 0.0
        %1399 = vmatpush1.msra.mxu0 %v1358
        %1400 = vmatprep.subr.mxu0 0.0
        %1401 = vmatpush2.msra.mxu0 0.0
        %1402 = vmatprep.subr.mxu0 0.0
        %1403 = vmatpush2.msra.mxu0 0.0
        %1404 = vmatprep.subr.mxu0 0.0
        %1405 = vmatpush2.msra.mxu0 0.0
        %1406 = vmatprep.subr.mxu0 0.0
        %1407 = vmatpush2.msra.mxu0 0.0
        %1408 = vmatprep.subr.mxu0 0.0
        %1409 = vmatpush2.msra.mxu0 0.0
        %1410 = vmatprep.subr.mxu0 0.0
        %1411 = vmatpush2.msra.mxu0 0.0
        %1412 = vmatprep.subr.mxu0 0.0
        %1413 = vmatpush2.msra.mxu0 0.0
        %1414 = vmatprep.subr.mxu0 0.0
        %1415 = vmatpush2.msra.mxu0 0.0
        %1416 = vmatprep.subr.mxu0 0.0
        %1417 = vmatpush2.msra.mxu0 0.0
        %1418 = vmatprep.subr.mxu0 0.0
        %1419 = vmatpush2.msra.mxu0 0.0
        %1420 = vmatprep.subr.mxu0 0.0
        %1421 = vmatpush2.msra.mxu0 0.0
        %1422 = vmatprep.subr.mxu0 0.0
        %1423 = vmatpush2.msra.mxu0 0.0
        %1424 = vmatprep.subr.mxu0 0.0
        %1425 = vmatpush2.msra.mxu0 0.0
        %1426 = vmatprep.subr.mxu0 0.0
        %1427 = vmatpush2.msra.mxu0 0.0
        %1428 = vmatprep.subr.mxu0 0.0
        %1429 = vmatpush2.msra.mxu0 0.0
        %1430 = vmatprep.subr.mxu0 0.0
        %1431 = vmatpush2.msra.mxu0 0.0
        %1432 = vmatprep.mubr.f32.mxu0 0.0
        %1433 = vmatmul.mubr.f32.gmra.mxu0 %v1363
        %v1434 = vpop.f32.mrf.mxu0
        %v1435 = vadd.f32 0.0, %v1434
        %v1436 = vpop.f32.mrf.mxu0
        %1437 = vmatprep.mubr.f32.mxu0 0.0
        %1438 = vmatmul.mubr.f32.gmra.mxu0 %v1366
        %v1439 = vpop.f32.mrf.mxu0
        %v1440 = vadd.f32 0.0, %v1439
        %v1441 = vpop.f32.mrf.mxu0
        %1442 = vdwg.mxu0
        %v1443 = vpack.c.bf16 %v1440, %v1435
        %v1445 = vunpack.c.l.b16 %v1443
        %v1446 = vunpack.c.h.b16 %v1443
        %v1447 = vpack.c.b16 %v1445, %v1445
        %v1448 = vpack.c.b16 %v1446, %v1446
        %1449 = vrot.lane.b32.xlu0 %v1447, 96
        %v1450 = vpop.permute.xlu0 %1449
        %1451 = vrot.lane.b32.xlu0 %v1448, 96
        %v1452 = vpop.permute.xlu0 %1451
        %1455 = vst.msk [vmem:[#allocation2] sm:$0xf] %vm1023, %v1450
        %1456 = vst.msk [vmem:[#allocation2 + $0x4] sm:$0xf] %vm1023, %v1452
        %1457 = vrot.lane.b32.xlu0 %v1447, 64
        %v1458 = vpop.permute.xlu0 %1457
        %1459 = vrot.lane.b32.xlu0 %v1448, 64
        %v1460 = vpop.permute.xlu0 %1459
        %1463 = vst.msk [vmem:[#allocation2 + $0x8] sm:$0xf] %vm1023, %v1458
        %1464 = vst.msk [vmem:[#allocation2 + $0xc] sm:$0xf] %vm1023, %v1460
        %1465 = vrot.lane.b32.xlu0 %v1447, 32
        %v1466 = vpop.permute.xlu0 %1465
        %1467 = vrot.lane.b32.xlu0 %v1448, 32
        %v1468 = vpop.permute.xlu0 %1467
        %1471 = vst.msk [vmem:[#allocation2 + $0x10] sm:$0xf] %vm1023, %v1466
        %1472 = vst.msk [vmem:[#allocation2 + $0x14] sm:$0xf] %vm1023, %v1468
        %v1473 = vld [vmem:[#allocation2] sm:$0xf]
        %v1474 = vld [vmem:[#allocation2 + $0x4] sm:$0xf]
        %v1475 = vld [vmem:[#allocation2 + $0x8] sm:$0xf]
        %v1476 = vld [vmem:[#allocation2 + $0xc] sm:$0xf]
        %v1477 = vld [vmem:[#allocation2 + $0x10] sm:$0xf]
        %v1478 = vld [vmem:[#allocation2 + $0x14] sm:$0xf]
        %v1485 = vunpack.c.l.b16 %v1473
        %v1486 = vunpack.c.l.b16 %v1474
        %v1487 = vunpack.c.l.b16 %v1475
        %v1488 = vunpack.c.l.b16 %v1476
        %v1489 = vunpack.c.l.b16 %v1477
        %v1490 = vunpack.c.l.b16 %v1478
        %v1491 = vpack.c.b16 %v1486, %v1485
        %v1492 = vpack.c.b16 %v1488, %v1487
        %v1493 = vpack.c.b16 %v1490, %v1489
        %1497 = vmatprep.subr.bf16.mxu0 0
        %1498 = vmatpush1.bf16.msra.mxu0 0
        %1499 = vmatprep.subr.bf16.mxu0 0
        %1500 = vmatpush1.bf16.msra.mxu0 0
        %1501 = vmatprep.subr.bf16.mxu0 0
        %1502 = vmatpush1.bf16.msra.mxu0 0
        %1503 = vmatprep.subr.bf16.mxu0 0
        %1504 = vmatpush1.bf16.msra.mxu0 0
        %1505 = vmatprep.subr.bf16.mxu0 0
        %1506 = vmatpush1.bf16.msra.mxu0 0
        %1507 = vmatprep.subr.bf16.mxu0 0
        %1508 = vmatpush1.bf16.msra.mxu0 %v1493
        %1509 = vmatprep.subr.bf16.mxu0 0
        %1510 = vmatpush1.bf16.msra.mxu0 %v1492
        %1511 = vmatprep.subr.bf16.mxu0 0
        %1512 = vmatpush1.bf16.msra.mxu0 %v1491
        %1513 = vmatprep.subr.bf16.mxu0 0
        %1514 = vmatpush2.bf16.msra.mxu0 0
        %1515 = vmatprep.subr.bf16.mxu0 0
        %1516 = vmatpush2.bf16.msra.mxu0 0
        %1517 = vmatprep.subr.bf16.mxu0 0
        %1518 = vmatpush2.bf16.msra.mxu0 0
        %1519 = vmatprep.subr.bf16.mxu0 0
        %1520 = vmatpush2.bf16.msra.mxu0 0
        %1521 = vmatprep.subr.bf16.mxu0 0
        %1522 = vmatpush2.bf16.msra.mxu0 0
        %1523 = vmatprep.subr.bf16.mxu0 0
        %1524 = vmatpush2.bf16.msra.mxu0 0
        %1525 = vmatprep.subr.bf16.mxu0 0
        %1526 = vmatpush2.bf16.msra.mxu0 0
        %1527 = vmatprep.subr.bf16.mxu0 0
        %1528 = vmatpush2.bf16.msra.mxu0 0
        %1529 = vmatprep.mubr.bf16.mxu0 0
        %1530 = vmatmul.mubr.bf16.gmra.mxu0 %v1073
        %v1531 = vpop.f32.mrf.mxu0
        %v1532 = vadd.f32 0.0, %v1531
        %v1533 = vpop.f32.mrf.mxu0
        %v1534 = vpop.f32.mrf.mxu0
        %v1535 = vadd.f32 0.0, %v1534
        %v1536 = vpop.f32.mrf.mxu0
        %1537 = vdwg.mxu0
        %v1538 = vld [vmem:[%s8] sm:$0x1]
        %v1540 = vlaneseq
        %v1541 = vshrl.u32 %v1540, 7
        %v1542 = vsub.s32 0, %v1541
        %v1543 = vrot.slane %v1538, %v1542
        %v1545 = vadd.f32 %v1435, %v1543
        %v1546 = vadd.f32 %v1440, %v1543
        %v1547 = vadd.f32 %v1545, %v1532
        %v1548 = vadd.f32 %v1546, %v1535
        %v1549 = vtanh.pop %v1547
        %v1550 = vtanh.pop %v1548
        %1551 = vmatprep.subr.mxu0 0.0
        %1552 = vmatpush1.msra.mxu0 0.0
        %1553 = vmatprep.subr.mxu0 0.0
        %1554 = vmatpush1.msra.mxu0 0.0
        %1555 = vmatprep.subr.mxu0 0.0
        %1556 = vmatpush1.msra.mxu0 0.0
        %1557 = vmatprep.subr.mxu0 0.0
        %1558 = vmatpush1.msra.mxu0 0.0
        %1559 = vmatprep.subr.mxu0 0.0
        %1560 = vmatpush1.msra.mxu0 0.0
        %1561 = vmatprep.subr.mxu0 0.0
        %1562 = vmatpush1.msra.mxu0 0.0
        %1563 = vmatprep.subr.mxu0 0.0
        %1564 = vmatpush1.msra.mxu0 0.0
        %1565 = vmatprep.subr.mxu0 0.0
        %1566 = vmatpush1.msra.mxu0 0.0
        %1567 = vmatprep.subr.mxu0 0.0
        %1568 = vmatpush1.msra.mxu0 0.0
        %1569 = vmatprep.subr.mxu0 0.0
        %1570 = vmatpush1.msra.mxu0 0.0
        %1571 = vmatprep.subr.mxu0 0.0
        %1572 = vmatpush1.msra.mxu0 0.0
        %1573 = vmatprep.subr.mxu0 0.0
        %1574 = vmatpush1.msra.mxu0 0.0
        %1575 = vmatprep.subr.mxu0 0.0
        %1576 = vmatpush1.msra.mxu0 0.0
        %1577 = vmatprep.subr.mxu0 0.0
        %1578 = vmatpush1.msra.mxu0 0.0
        %1579 = vmatprep.subr.mxu0 0.0
        %1580 = vmatpush1.msra.mxu0 %v1550
        %1581 = vmatprep.subr.mxu0 0.0
        %1582 = vmatpush1.msra.mxu0 %v1549
        %1583 = vmatprep.subr.mxu0 0.0
        %1584 = vmatpush2.msra.mxu0 0.0
        %1585 = vmatprep.subr.mxu0 0.0
        %1586 = vmatpush2.msra.mxu0 0.0
        %1587 = vmatprep.subr.mxu0 0.0
        %1588 = vmatpush2.msra.mxu0 0.0
        %1589 = vmatprep.subr.mxu0 0.0
        %1590 = vmatpush2.msra.mxu0 0.0
        %1591 = vmatprep.subr.mxu0 0.0
        %1592 = vmatpush2.msra.mxu0 0.0
        %1593 = vmatprep.subr.mxu0 0.0
        %1594 = vmatpush2.msra.mxu0 0.0
        %1595 = vmatprep.subr.mxu0 0.0
        %1596 = vmatpush2.msra.mxu0 0.0
        %1597 = vmatprep.subr.mxu0 0.0
        %1598 = vmatpush2.msra.mxu0 0.0
        %1599 = vmatprep.subr.mxu0 0.0
        %1600 = vmatpush2.msra.mxu0 0.0
        %1601 = vmatprep.subr.mxu0 0.0
        %1602 = vmatpush2.msra.mxu0 0.0
        %1603 = vmatprep.subr.mxu0 0.0
        %1604 = vmatpush2.msra.mxu0 0.0
        %1605 = vmatprep.subr.mxu0 0.0
        %1606 = vmatpush2.msra.mxu0 0.0
        %1607 = vmatprep.subr.mxu0 0.0
        %1608 = vmatpush2.msra.mxu0 0.0
        %1609 = vmatprep.subr.mxu0 0.0
        %1610 = vmatpush2.msra.mxu0 0.0
        %1611 = vmatprep.subr.mxu0 0.0
        %1612 = vmatpush2.msra.mxu0 0.0
        %1613 = vmatprep.subr.mxu0 0.0
        %1614 = vmatpush2.msra.mxu0 0.0
        %1615 = vmatprep.mubr.f32.mxu0 0.0
        %1616 = vmatmul.mubr.f32.gmra.mxu0 %v1131
        %v1617 = vpop.f32.mrf.mxu0
        %v1618 = vadd.f32 0.0, %v1617
        %v1619 = vpop.f32.mrf.mxu0
        %1620 = vdwg.mxu0
        %v1621 = vld [vmem:[#allocation11] sm:$0xff]
        %v1622 = vld [vmem:[#allocation11 + $0x8] sm:$0xff]
        %v1623 = vld [vmem:[#allocation11 + $0x10] sm:$0xff]
        %v1624 = vld [vmem:[#allocation11 + $0x18] sm:$0xff]
        %v1626 = vsel %vm1213, %v1618, 0
        %1628 = vmatprep.subr.mxu0 0.0
        %1629 = vmatpush1.msra.mxu0 0.0
        %1630 = vmatprep.subr.mxu0 0.0
        %1631 = vmatpush1.msra.mxu0 0.0
        %1632 = vmatprep.subr.mxu0 0.0
        %1633 = vmatpush1.msra.mxu0 0.0
        %1634 = vmatprep.subr.mxu0 0.0
        %1635 = vmatpush1.msra.mxu0 0.0
        %1636 = vmatprep.subr.mxu0 0.0
        %1637 = vmatpush1.msra.mxu0 0.0
        %1638 = vmatprep.subr.mxu0 0.0
        %1639 = vmatpush1.msra.mxu0 0.0
        %1640 = vmatprep.subr.mxu0 0.0
        %1641 = vmatpush1.msra.mxu0 0.0
        %1642 = vmatprep.subr.mxu0 0.0
        %1643 = vmatpush1.msra.mxu0 0.0
        %1644 = vmatprep.subr.mxu0 0.0
        %1645 = vmatpush1.msra.mxu0 0.0
        %1646 = vmatprep.subr.mxu0 0.0
        %1647 = vmatpush1.msra.mxu0 0.0
        %1648 = vmatprep.subr.mxu0 0.0
        %1649 = vmatpush1.msra.mxu0 0.0
        %1650 = vmatprep.subr.mxu0 0.0
        %1651 = vmatpush1.msra.mxu0 0.0
        %1652 = vmatprep.subr.mxu0 0.0
        %1653 = vmatpush1.msra.mxu0 %v1624
        %1654 = vmatprep.subr.mxu0 0.0
        %1655 = vmatpush1.msra.mxu0 %v1623
        %1656 = vmatprep.subr.mxu0 0.0
        %1657 = vmatpush1.msra.mxu0 %v1622
        %1658 = vmatprep.subr.mxu0 0.0
        %1659 = vmatpush1.msra.mxu0 %v1621
        %1660 = vmatprep.subr.mxu0 0.0
        %1661 = vmatpush2.msra.mxu0 0.0
        %1662 = vmatprep.subr.mxu0 0.0
        %1663 = vmatpush2.msra.mxu0 0.0
        %1664 = vmatprep.subr.mxu0 0.0
        %1665 = vmatpush2.msra.mxu0 0.0
        %1666 = vmatprep.subr.mxu0 0.0
        %1667 = vmatpush2.msra.mxu0 0.0
        %1668 = vmatprep.subr.mxu0 0.0
        %1669 = vmatpush2.msra.mxu0 0.0
        %1670 = vmatprep.subr.mxu0 0.0
        %1671 = vmatpush2.msra.mxu0 0.0
        %1672 = vmatprep.subr.mxu0 0.0
        %1673 = vmatpush2.msra.mxu0 0.0
        %1674 = vmatprep.subr.mxu0 0.0
        %1675 = vmatpush2.msra.mxu0 0.0
        %1676 = vmatprep.subr.mxu0 0.0
        %1677 = vmatpush2.msra.mxu0 0.0
        %1678 = vmatprep.subr.mxu0 0.0
        %1679 = vmatpush2.msra.mxu0 0.0
        %1680 = vmatprep.subr.mxu0 0.0
        %1681 = vmatpush2.msra.mxu0 0.0
        %1682 = vmatprep.subr.mxu0 0.0
        %1683 = vmatpush2.msra.mxu0 0.0
        %1684 = vmatprep.subr.mxu0 0.0
        %1685 = vmatpush2.msra.mxu0 0.0
        %1686 = vmatprep.subr.mxu0 0.0
        %1687 = vmatpush2.msra.mxu0 0.0
        %1688 = vmatprep.subr.mxu0 0.0
        %1689 = vmatpush2.msra.mxu0 0.0
        %1690 = vmatprep.subr.mxu0 0.0
        %1691 = vmatpush2.msra.mxu0 0.0
        %1692 = vmatprep.mubr.f32.mxu0 0.0
        %1693 = vmatmul.mubr.f32.gmra.mxu0 %v1626
        %v1694 = vpop.f32.mrf.mxu0
        %v1695 = vadd.f32 0.0, %v1694
        %v1696 = vpop.f32.mrf.mxu0
        %1697 = vdwg.mxu0
        %v1698 = vadd.f32 %v1355, %v1695
        %v1699 = vld [vmem:[#allocation12] sm:$0xff]
        %v1700 = vld [vmem:[#allocation12 + $0x8] sm:$0xff]
        %v1701 = vld [vmem:[#allocation12 + $0x10] sm:$0xff]
        %v1702 = vld [vmem:[#allocation12 + $0x18] sm:$0xff]
        %v1703 = vrot.slane %v1618, 4
        %v1704 = vsel %vm1213, %v1703, 0
        %1706 = vmatprep.subr.mxu0 0.0
        %1707 = vmatpush1.msra.mxu0 0.0
        %1708 = vmatprep.subr.mxu0 0.0
        %1709 = vmatpush1.msra.mxu0 0.0
        %1710 = vmatprep.subr.mxu0 0.0
        %1711 = vmatpush1.msra.mxu0 0.0
        %1712 = vmatprep.subr.mxu0 0.0
        %1713 = vmatpush1.msra.mxu0 0.0
        %1714 = vmatprep.subr.mxu0 0.0
        %1715 = vmatpush1.msra.mxu0 0.0
        %1716 = vmatprep.subr.mxu0 0.0
        %1717 = vmatpush1.msra.mxu0 0.0
        %1718 = vmatprep.subr.mxu0 0.0
        %1719 = vmatpush1.msra.mxu0 0.0
        %1720 = vmatprep.subr.mxu0 0.0
        %1721 = vmatpush1.msra.mxu0 0.0
        %1722 = vmatprep.subr.mxu0 0.0
        %1723 = vmatpush1.msra.mxu0 0.0
        %1724 = vmatprep.subr.mxu0 0.0
        %1725 = vmatpush1.msra.mxu0 0.0
        %1726 = vmatprep.subr.mxu0 0.0
        %1727 = vmatpush1.msra.mxu0 0.0
        %1728 = vmatprep.subr.mxu0 0.0
        %1729 = vmatpush1.msra.mxu0 0.0
        %1730 = vmatprep.subr.mxu0 0.0
        %1731 = vmatpush1.msra.mxu0 %v1702
        %1732 = vmatprep.subr.mxu0 0.0
        %1733 = vmatpush1.msra.mxu0 %v1701
        %1734 = vmatprep.subr.mxu0 0.0
        %1735 = vmatpush1.msra.mxu0 %v1700
        %1736 = vmatprep.subr.mxu0 0.0
        %1737 = vmatpush1.msra.mxu0 %v1699
        %1738 = vmatprep.subr.mxu0 0.0
        %1739 = vmatpush2.msra.mxu0 0.0
        %1740 = vmatprep.subr.mxu0 0.0
        %1741 = vmatpush2.msra.mxu0 0.0
        %1742 = vmatprep.subr.mxu0 0.0
        %1743 = vmatpush2.msra.mxu0 0.0
        %1744 = vmatprep.subr.mxu0 0.0
        %1745 = vmatpush2.msra.mxu0 0.0
        %1746 = vmatprep.subr.mxu0 0.0
        %1747 = vmatpush2.msra.mxu0 0.0
        %1748 = vmatprep.subr.mxu0 0.0
        %1749 = vmatpush2.msra.mxu0 0.0
        %1750 = vmatprep.subr.mxu0 0.0
        %1751 = vmatpush2.msra.mxu0 0.0
        %1752 = vmatprep.subr.mxu0 0.0
        %1753 = vmatpush2.msra.mxu0 0.0
        %1754 = vmatprep.subr.mxu0 0.0
        %1755 = vmatpush2.msra.mxu0 0.0
        %1756 = vmatprep.subr.mxu0 0.0
        %1757 = vmatpush2.msra.mxu0 0.0
        %1758 = vmatprep.subr.mxu0 0.0
        %1759 = vmatpush2.msra.mxu0 0.0
        %1760 = vmatprep.subr.mxu0 0.0
        %1761 = vmatpush2.msra.mxu0 0.0
        %1762 = vmatprep.subr.mxu0 0.0
        %1763 = vmatpush2.msra.mxu0 0.0
        %1764 = vmatprep.subr.mxu0 0.0
        %1765 = vmatpush2.msra.mxu0 0.0
        %1766 = vmatprep.subr.mxu0 0.0
        %1767 = vmatpush2.msra.mxu0 0.0
        %1768 = vmatprep.subr.mxu0 0.0
        %1769 = vmatpush2.msra.mxu0 0.0
        %1770 = vmatprep.mubr.f32.mxu0 0.0
        %1771 = vmatmul.mubr.f32.gmra.mxu0 %v1704
        %v1772 = vpop.f32.mrf.mxu0
        %v1773 = vadd.f32 0.0, %v1772
        %v1774 = vpop.f32.mrf.mxu0
        %1775 = vdwg.mxu0
        %v1776 = vadd.f32 %v1698, %v1773
        %v1777 = vld [vmem:[#allocation14] sm:$0xff]
        %v1778 = vld [vmem:[#allocation14 + $0x8] sm:$0xff]
        %v1779 = vld [vmem:[#allocation14 + $0x10] sm:$0xff]
        %v1780 = vld [vmem:[#allocation14 + $0x18] sm:$0xff]
        %v1782 = vsel %vm1213, %v1549, 0
        %v1785 = vsel %vm1213, %v1550, 0
        %1787 = vmatprep.subr.mxu0 0.0
        %1788 = vmatpush1.msra.mxu0 0.0
        %1789 = vmatprep.subr.mxu0 0.0
        %1790 = vmatpush1.msra.mxu0 0.0
        %1791 = vmatprep.subr.mxu0 0.0
        %1792 = vmatpush1.msra.mxu0 0.0
        %1793 = vmatprep.subr.mxu0 0.0
        %1794 = vmatpush1.msra.mxu0 0.0
        %1795 = vmatprep.subr.mxu0 0.0
        %1796 = vmatpush1.msra.mxu0 0.0
        %1797 = vmatprep.subr.mxu0 0.0
        %1798 = vmatpush1.msra.mxu0 0.0
        %1799 = vmatprep.subr.mxu0 0.0
        %1800 = vmatpush1.msra.mxu0 0.0
        %1801 = vmatprep.subr.mxu0 0.0
        %1802 = vmatpush1.msra.mxu0 0.0
        %1803 = vmatprep.subr.mxu0 0.0
        %1804 = vmatpush1.msra.mxu0 0.0
        %1805 = vmatprep.subr.mxu0 0.0
        %1806 = vmatpush1.msra.mxu0 0.0
        %1807 = vmatprep.subr.mxu0 0.0
        %1808 = vmatpush1.msra.mxu0 0.0
        %1809 = vmatprep.subr.mxu0 0.0
        %1810 = vmatpush1.msra.mxu0 0.0
        %1811 = vmatprep.subr.mxu0 0.0
        %1812 = vmatpush1.msra.mxu0 %v1780
        %1813 = vmatprep.subr.mxu0 0.0
        %1814 = vmatpush1.msra.mxu0 %v1779
        %1815 = vmatprep.subr.mxu0 0.0
        %1816 = vmatpush1.msra.mxu0 %v1778
        %1817 = vmatprep.subr.mxu0 0.0
        %1818 = vmatpush1.msra.mxu0 %v1777
        %1819 = vmatprep.subr.mxu0 0.0
        %1820 = vmatpush2.msra.mxu0 0.0
        %1821 = vmatprep.subr.mxu0 0.0
        %1822 = vmatpush2.msra.mxu0 0.0
        %1823 = vmatprep.subr.mxu0 0.0
        %1824 = vmatpush2.msra.mxu0 0.0
        %1825 = vmatprep.subr.mxu0 0.0
        %1826 = vmatpush2.msra.mxu0 0.0
        %1827 = vmatprep.subr.mxu0 0.0
        %1828 = vmatpush2.msra.mxu0 0.0
        %1829 = vmatprep.subr.mxu0 0.0
        %1830 = vmatpush2.msra.mxu0 0.0
        %1831 = vmatprep.subr.mxu0 0.0
        %1832 = vmatpush2.msra.mxu0 0.0
        %1833 = vmatprep.subr.mxu0 0.0
        %1834 = vmatpush2.msra.mxu0 0.0
        %1835 = vmatprep.subr.mxu0 0.0
        %1836 = vmatpush2.msra.mxu0 0.0
        %1837 = vmatprep.subr.mxu0 0.0
        %1838 = vmatpush2.msra.mxu0 0.0
        %1839 = vmatprep.subr.mxu0 0.0
        %1840 = vmatpush2.msra.mxu0 0.0
        %1841 = vmatprep.subr.mxu0 0.0
        %1842 = vmatpush2.msra.mxu0 0.0
        %1843 = vmatprep.subr.mxu0 0.0
        %1844 = vmatpush2.msra.mxu0 0.0
        %1845 = vmatprep.subr.mxu0 0.0
        %1846 = vmatpush2.msra.mxu0 0.0
        %1847 = vmatprep.subr.mxu0 0.0
        %1848 = vmatpush2.msra.mxu0 0.0
        %1849 = vmatprep.subr.mxu0 0.0
        %1850 = vmatpush2.msra.mxu0 0.0
        %1851 = vmatprep.mubr.f32.mxu0 0.0
        %1852 = vmatmul.mubr.f32.gmra.mxu0 %v1782
        %v1853 = vpop.f32.mrf.mxu0
        %v1854 = vadd.f32 0.0, %v1853
        %v1855 = vpop.f32.mrf.mxu0
        %1856 = vmatprep.mubr.f32.mxu0 0.0
        %1857 = vmatmul.mubr.f32.gmra.mxu0 %v1785
        %v1858 = vpop.f32.mrf.mxu0
        %v1859 = vadd.f32 0.0, %v1858
        %v1860 = vpop.f32.mrf.mxu0
        %1861 = vdwg.mxu0
        %v1862 = vpack.c.bf16 %v1859, %v1854
        %v1864 = vunpack.c.l.b16 %v1862
        %v1865 = vunpack.c.h.b16 %v1862
        %v1866 = vpack.c.b16 %v1864, %v1864
        %v1867 = vpack.c.b16 %v1865, %v1865
        %1868 = vrot.lane.b32.xlu0 %v1866, 96
        %v1869 = vpop.permute.xlu0 %1868
        %1870 = vrot.lane.b32.xlu0 %v1867, 96
        %v1871 = vpop.permute.xlu0 %1870
        %1874 = vst.msk [vmem:[#allocation2] sm:$0xf] %vm1023, %v1869
        %1875 = vst.msk [vmem:[#allocation2 + $0x4] sm:$0xf] %vm1023, %v1871
        %1876 = vrot.lane.b32.xlu0 %v1866, 64
        %v1877 = vpop.permute.xlu0 %1876
        %1878 = vrot.lane.b32.xlu0 %v1867, 64
        %v1879 = vpop.permute.xlu0 %1878
        %1882 = vst.msk [vmem:[#allocation2 + $0x8] sm:$0xf] %vm1023, %v1877
        %1883 = vst.msk [vmem:[#allocation2 + $0xc] sm:$0xf] %vm1023, %v1879
        %1884 = vrot.lane.b32.xlu0 %v1866, 32
        %v1885 = vpop.permute.xlu0 %1884
        %1886 = vrot.lane.b32.xlu0 %v1867, 32
        %v1887 = vpop.permute.xlu0 %1886
        %1890 = vst.msk [vmem:[#allocation2 + $0x10] sm:$0xf] %vm1023, %v1885
        %1891 = vst.msk [vmem:[#allocation2 + $0x14] sm:$0xf] %vm1023, %v1887
        %v1892 = vld [vmem:[#allocation2] sm:$0xf]
        %v1893 = vld [vmem:[#allocation2 + $0x4] sm:$0xf]
        %v1894 = vld [vmem:[#allocation2 + $0x8] sm:$0xf]
        %v1895 = vld [vmem:[#allocation2 + $0xc] sm:$0xf]
        %v1896 = vld [vmem:[#allocation2 + $0x10] sm:$0xf]
        %v1897 = vld [vmem:[#allocation2 + $0x14] sm:$0xf]
        %v1904 = vunpack.c.l.b16 %v1892
        %v1905 = vunpack.c.l.b16 %v1893
        %v1906 = vunpack.c.l.b16 %v1894
        %v1907 = vunpack.c.l.b16 %v1895
        %v1908 = vunpack.c.l.b16 %v1896
        %v1909 = vunpack.c.l.b16 %v1897
        %v1910 = vpack.c.b16 %v1905, %v1904
        %v1911 = vpack.c.b16 %v1907, %v1906
        %v1912 = vpack.c.b16 %v1909, %v1908
        %1916 = vmatprep.subr.bf16.mxu0 0
        %1917 = vmatpush1.bf16.msra.mxu0 0
        %1918 = vmatprep.subr.bf16.mxu0 0
        %1919 = vmatpush1.bf16.msra.mxu0 0
        %1920 = vmatprep.subr.bf16.mxu0 0
        %1921 = vmatpush1.bf16.msra.mxu0 0
        %1922 = vmatprep.subr.bf16.mxu0 0
        %1923 = vmatpush1.bf16.msra.mxu0 0
        %1924 = vmatprep.subr.bf16.mxu0 0
        %1925 = vmatpush1.bf16.msra.mxu0 0
        %1926 = vmatprep.subr.bf16.mxu0 0
        %1927 = vmatpush1.bf16.msra.mxu0 %v1912
        %1928 = vmatprep.subr.bf16.mxu0 0
        %1929 = vmatpush1.bf16.msra.mxu0 %v1911
        %1930 = vmatprep.subr.bf16.mxu0 0
        %1931 = vmatpush1.bf16.msra.mxu0 %v1910
        %1932 = vmatprep.subr.bf16.mxu0 0
        %1933 = vmatpush2.bf16.msra.mxu0 0
        %1934 = vmatprep.subr.bf16.mxu0 0
        %1935 = vmatpush2.bf16.msra.mxu0 0
        %1936 = vmatprep.subr.bf16.mxu0 0
        %1937 = vmatpush2.bf16.msra.mxu0 0
        %1938 = vmatprep.subr.bf16.mxu0 0
        %1939 = vmatpush2.bf16.msra.mxu0 0
        %1940 = vmatprep.subr.bf16.mxu0 0
        %1941 = vmatpush2.bf16.msra.mxu0 0
        %1942 = vmatprep.subr.bf16.mxu0 0
        %1943 = vmatpush2.bf16.msra.mxu0 0
        %1944 = vmatprep.subr.bf16.mxu0 0
        %1945 = vmatpush2.bf16.msra.mxu0 0
        %1946 = vmatprep.subr.bf16.mxu0 0
        %1947 = vmatpush2.bf16.msra.mxu0 0
        %1948 = vmatprep.mubr.bf16.mxu0 0
        %1949 = vmatmul.mubr.bf16.gmra.mxu0 %v1073
        %v1950 = vpop.f32.mrf.mxu0
        %v1951 = vadd.f32 0.0, %v1950
        %v1952 = vpop.f32.mrf.mxu0
        %v1953 = vpop.f32.mrf.mxu0
        %v1954 = vadd.f32 0.0, %v1953
        %v1955 = vpop.f32.mrf.mxu0
        %1956 = vdwg.mxu0
        %v1957 = vld [vmem:[%s12] sm:$0x1]
        %v1959 = vlaneseq
        %v1960 = vshrl.u32 %v1959, 7
        %v1961 = vsub.s32 0, %v1960
        %v1962 = vrot.slane %v1957, %v1961
        %v1964 = vadd.f32 %v1854, %v1962
        %v1965 = vadd.f32 %v1859, %v1962
        %v1966 = vadd.f32 %v1964, %v1951
        %v1967 = vadd.f32 %v1965, %v1954
        %v1968 = vtanh.pop %v1966
        %v1969 = vtanh.pop %v1967
        %1970 = vmatprep.subr.mxu0 0.0
        %1971 = vmatpush1.msra.mxu0 0.0
        %1972 = vmatprep.subr.mxu0 0.0
        %1973 = vmatpush1.msra.mxu0 0.0
        %1974 = vmatprep.subr.mxu0 0.0
        %1975 = vmatpush1.msra.mxu0 0.0
        %1976 = vmatprep.subr.mxu0 0.0
        %1977 = vmatpush1.msra.mxu0 0.0
        %1978 = vmatprep.subr.mxu0 0.0
        %1979 = vmatpush1.msra.mxu0 0.0
        %1980 = vmatprep.subr.mxu0 0.0
        %1981 = vmatpush1.msra.mxu0 0.0
        %1982 = vmatprep.subr.mxu0 0.0
        %1983 = vmatpush1.msra.mxu0 0.0
        %1984 = vmatprep.subr.mxu0 0.0
        %1985 = vmatpush1.msra.mxu0 0.0
        %1986 = vmatprep.subr.mxu0 0.0
        %1987 = vmatpush1.msra.mxu0 0.0
        %1988 = vmatprep.subr.mxu0 0.0
        %1989 = vmatpush1.msra.mxu0 0.0
        %1990 = vmatprep.subr.mxu0 0.0
        %1991 = vmatpush1.msra.mxu0 0.0
        %1992 = vmatprep.subr.mxu0 0.0
        %1993 = vmatpush1.msra.mxu0 0.0
        %1994 = vmatprep.subr.mxu0 0.0
        %1995 = vmatpush1.msra.mxu0 0.0
        %1996 = vmatprep.subr.mxu0 0.0
        %1997 = vmatpush1.msra.mxu0 0.0
        %1998 = vmatprep.subr.mxu0 0.0
        %1999 = vmatpush1.msra.mxu0 %v1969
        %2000 = vmatprep.subr.mxu0 0.0
        %2001 = vmatpush1.msra.mxu0 %v1968
        %2002 = vmatprep.subr.mxu0 0.0
        %2003 = vmatpush2.msra.mxu0 0.0
        %2004 = vmatprep.subr.mxu0 0.0
        %2005 = vmatpush2.msra.mxu0 0.0
        %2006 = vmatprep.subr.mxu0 0.0
        %2007 = vmatpush2.msra.mxu0 0.0
        %2008 = vmatprep.subr.mxu0 0.0
        %2009 = vmatpush2.msra.mxu0 0.0
        %2010 = vmatprep.subr.mxu0 0.0
        %2011 = vmatpush2.msra.mxu0 0.0
        %2012 = vmatprep.subr.mxu0 0.0
        %2013 = vmatpush2.msra.mxu0 0.0
        %2014 = vmatprep.subr.mxu0 0.0
        %2015 = vmatpush2.msra.mxu0 0.0
        %2016 = vmatprep.subr.mxu0 0.0
        %2017 = vmatpush2.msra.mxu0 0.0
        %2018 = vmatprep.subr.mxu0 0.0
        %2019 = vmatpush2.msra.mxu0 0.0
        %2020 = vmatprep.subr.mxu0 0.0
        %2021 = vmatpush2.msra.mxu0 0.0
        %2022 = vmatprep.subr.mxu0 0.0
        %2023 = vmatpush2.msra.mxu0 0.0
        %2024 = vmatprep.subr.mxu0 0.0
        %2025 = vmatpush2.msra.mxu0 0.0
        %2026 = vmatprep.subr.mxu0 0.0
        %2027 = vmatpush2.msra.mxu0 0.0
        %2028 = vmatprep.subr.mxu0 0.0
        %2029 = vmatpush2.msra.mxu0 0.0
        %2030 = vmatprep.subr.mxu0 0.0
        %2031 = vmatpush2.msra.mxu0 0.0
        %2032 = vmatprep.subr.mxu0 0.0
        %2033 = vmatpush2.msra.mxu0 0.0
        %2034 = vmatprep.mubr.f32.mxu0 0.0
        %2035 = vmatmul.mubr.f32.gmra.mxu0 %v1131
        %v2036 = vpop.f32.mrf.mxu0
        %v2037 = vadd.f32 0.0, %v2036
        %v2038 = vpop.f32.mrf.mxu0
        %2039 = vdwg.mxu0
        %v2040 = vld [vmem:[#allocation15] sm:$0xff]
        %v2041 = vld [vmem:[#allocation15 + $0x8] sm:$0xff]
        %v2042 = vld [vmem:[#allocation15 + $0x10] sm:$0xff]
        %v2043 = vld [vmem:[#allocation15 + $0x18] sm:$0xff]
        %v2045 = vsel %vm1213, %v2037, 0
        %2047 = vmatprep.subr.mxu0 0.0
        %2048 = vmatpush1.msra.mxu0 0.0
        %2049 = vmatprep.subr.mxu0 0.0
        %2050 = vmatpush1.msra.mxu0 0.0
        %2051 = vmatprep.subr.mxu0 0.0
        %2052 = vmatpush1.msra.mxu0 0.0
        %2053 = vmatprep.subr.mxu0 0.0
        %2054 = vmatpush1.msra.mxu0 0.0
        %2055 = vmatprep.subr.mxu0 0.0
        %2056 = vmatpush1.msra.mxu0 0.0
        %2057 = vmatprep.subr.mxu0 0.0
        %2058 = vmatpush1.msra.mxu0 0.0
        %2059 = vmatprep.subr.mxu0 0.0
        %2060 = vmatpush1.msra.mxu0 0.0
        %2061 = vmatprep.subr.mxu0 0.0
        %2062 = vmatpush1.msra.mxu0 0.0
        %2063 = vmatprep.subr.mxu0 0.0
        %2064 = vmatpush1.msra.mxu0 0.0
        %2065 = vmatprep.subr.mxu0 0.0
        %2066 = vmatpush1.msra.mxu0 0.0
        %2067 = vmatprep.subr.mxu0 0.0
        %2068 = vmatpush1.msra.mxu0 0.0
        %2069 = vmatprep.subr.mxu0 0.0
        %2070 = vmatpush1.msra.mxu0 0.0
        %2071 = vmatprep.subr.mxu0 0.0
        %2072 = vmatpush1.msra.mxu0 %v2043
        %2073 = vmatprep.subr.mxu0 0.0
        %2074 = vmatpush1.msra.mxu0 %v2042
        %2075 = vmatprep.subr.mxu0 0.0
        %2076 = vmatpush1.msra.mxu0 %v2041
        %2077 = vmatprep.subr.mxu0 0.0
        %2078 = vmatpush1.msra.mxu0 %v2040
        %2079 = vmatprep.subr.mxu0 0.0
        %2080 = vmatpush2.msra.mxu0 0.0
        %2081 = vmatprep.subr.mxu0 0.0
        %2082 = vmatpush2.msra.mxu0 0.0
        %2083 = vmatprep.subr.mxu0 0.0
        %2084 = vmatpush2.msra.mxu0 0.0
        %2085 = vmatprep.subr.mxu0 0.0
        %2086 = vmatpush2.msra.mxu0 0.0
        %2087 = vmatprep.subr.mxu0 0.0
        %2088 = vmatpush2.msra.mxu0 0.0
        %2089 = vmatprep.subr.mxu0 0.0
        %2090 = vmatpush2.msra.mxu0 0.0
        %2091 = vmatprep.subr.mxu0 0.0
        %2092 = vmatpush2.msra.mxu0 0.0
        %2093 = vmatprep.subr.mxu0 0.0
        %2094 = vmatpush2.msra.mxu0 0.0
        %2095 = vmatprep.subr.mxu0 0.0
        %2096 = vmatpush2.msra.mxu0 0.0
        %2097 = vmatprep.subr.mxu0 0.0
        %2098 = vmatpush2.msra.mxu0 0.0
        %2099 = vmatprep.subr.mxu0 0.0
        %2100 = vmatpush2.msra.mxu0 0.0
        %2101 = vmatprep.subr.mxu0 0.0
        %2102 = vmatpush2.msra.mxu0 0.0
        %2103 = vmatprep.subr.mxu0 0.0
        %2104 = vmatpush2.msra.mxu0 0.0
        %2105 = vmatprep.subr.mxu0 0.0
        %2106 = vmatpush2.msra.mxu0 0.0
        %2107 = vmatprep.subr.mxu0 0.0
        %2108 = vmatpush2.msra.mxu0 0.0
        %2109 = vmatprep.subr.mxu0 0.0
        %2110 = vmatpush2.msra.mxu0 0.0
        %2111 = vmatprep.mubr.f32.mxu0 0.0
        %2112 = vmatmul.mubr.f32.gmra.mxu0 %v2045
        %v2113 = vpop.f32.mrf.mxu0
        %v2114 = vadd.f32 0.0, %v2113
        %v2115 = vpop.f32.mrf.mxu0
        %2116 = vdwg.mxu0
        %v2117 = vadd.f32 %v1776, %v2114
        %v2118 = vld [vmem:[#allocation17] sm:$0xff]
        %v2119 = vld [vmem:[#allocation17 + $0x8] sm:$0xff]
        %v2120 = vld [vmem:[#allocation17 + $0x10] sm:$0xff]
        %v2121 = vld [vmem:[#allocation17 + $0x18] sm:$0xff]
        %v2122 = vrot.slane %v2037, 4
        %v2123 = vsel %vm1213, %v2122, 0
        %2125 = vmatprep.subr.mxu0 0.0
        %2126 = vmatpush1.msra.mxu0 0.0
        %2127 = vmatprep.subr.mxu0 0.0
        %2128 = vmatpush1.msra.mxu0 0.0
        %2129 = vmatprep.subr.mxu0 0.0
        %2130 = vmatpush1.msra.mxu0 0.0
        %2131 = vmatprep.subr.mxu0 0.0
        %2132 = vmatpush1.msra.mxu0 0.0
        %2133 = vmatprep.subr.mxu0 0.0
        %2134 = vmatpush1.msra.mxu0 0.0
        %2135 = vmatprep.subr.mxu0 0.0
        %2136 = vmatpush1.msra.mxu0 0.0
        %2137 = vmatprep.subr.mxu0 0.0
        %2138 = vmatpush1.msra.mxu0 0.0
        %2139 = vmatprep.subr.mxu0 0.0
        %2140 = vmatpush1.msra.mxu0 0.0
        %2141 = vmatprep.subr.mxu0 0.0
        %2142 = vmatpush1.msra.mxu0 0.0
        %2143 = vmatprep.subr.mxu0 0.0
        %2144 = vmatpush1.msra.mxu0 0.0
        %2145 = vmatprep.subr.mxu0 0.0
        %2146 = vmatpush1.msra.mxu0 0.0
        %2147 = vmatprep.subr.mxu0 0.0
        %2148 = vmatpush1.msra.mxu0 0.0
        %2149 = vmatprep.subr.mxu0 0.0
        %2150 = vmatpush1.msra.mxu0 %v2121
        %2151 = vmatprep.subr.mxu0 0.0
        %2152 = vmatpush1.msra.mxu0 %v2120
        %2153 = vmatprep.subr.mxu0 0.0
        %2154 = vmatpush1.msra.mxu0 %v2119
        %2155 = vmatprep.subr.mxu0 0.0
        %2156 = vmatpush1.msra.mxu0 %v2118
        %2157 = vmatprep.subr.mxu0 0.0
        %2158 = vmatpush2.msra.mxu0 0.0
        %2159 = vmatprep.subr.mxu0 0.0
        %2160 = vmatpush2.msra.mxu0 0.0
        %2161 = vmatprep.subr.mxu0 0.0
        %2162 = vmatpush2.msra.mxu0 0.0
        %2163 = vmatprep.subr.mxu0 0.0
        %2164 = vmatpush2.msra.mxu0 0.0
        %2165 = vmatprep.subr.mxu0 0.0
        %2166 = vmatpush2.msra.mxu0 0.0
        %2167 = vmatprep.subr.mxu0 0.0
        %2168 = vmatpush2.msra.mxu0 0.0
        %2169 = vmatprep.subr.mxu0 0.0
        %2170 = vmatpush2.msra.mxu0 0.0
        %2171 = vmatprep.subr.mxu0 0.0
        %2172 = vmatpush2.msra.mxu0 0.0
        %2173 = vmatprep.subr.mxu0 0.0
        %2174 = vmatpush2.msra.mxu0 0.0
        %2175 = vmatprep.subr.mxu0 0.0
        %2176 = vmatpush2.msra.mxu0 0.0
        %2177 = vmatprep.subr.mxu0 0.0
        %2178 = vmatpush2.msra.mxu0 0.0
        %2179 = vmatprep.subr.mxu0 0.0
        %2180 = vmatpush2.msra.mxu0 0.0
        %2181 = vmatprep.subr.mxu0 0.0
        %2182 = vmatpush2.msra.mxu0 0.0
        %2183 = vmatprep.subr.mxu0 0.0
        %2184 = vmatpush2.msra.mxu0 0.0
        %2185 = vmatprep.subr.mxu0 0.0
        %2186 = vmatpush2.msra.mxu0 0.0
        %2187 = vmatprep.subr.mxu0 0.0
        %2188 = vmatpush2.msra.mxu0 0.0
        %2189 = vmatprep.mubr.f32.mxu0 0.0
        %2190 = vmatmul.mubr.f32.gmra.mxu0 %v2123
        %v2191 = vpop.f32.mrf.mxu0
        %v2192 = vadd.f32 0.0, %v2191
        %v2193 = vpop.f32.mrf.mxu0
        %2194 = vdwg.mxu0
        %v2195 = vadd.f32 %v2117, %v2192
        %v2196 = vld [vmem:[#allocation18] sm:$0xff]
        %v2197 = vld [vmem:[#allocation18 + $0x8] sm:$0xff]
        %v2198 = vld [vmem:[#allocation18 + $0x10] sm:$0xff]
        %v2199 = vld [vmem:[#allocation18 + $0x18] sm:$0xff]
        %v2201 = vsel %vm1213, %v1968, 0
        %v2204 = vsel %vm1213, %v1969, 0
        %2206 = vmatprep.subr.mxu0 0.0
        %2207 = vmatpush1.msra.mxu0 0.0
        %2208 = vmatprep.subr.mxu0 0.0
        %2209 = vmatpush1.msra.mxu0 0.0
        %2210 = vmatprep.subr.mxu0 0.0
        %2211 = vmatpush1.msra.mxu0 0.0
        %2212 = vmatprep.subr.mxu0 0.0
        %2213 = vmatpush1.msra.mxu0 0.0
        %2214 = vmatprep.subr.mxu0 0.0
        %2215 = vmatpush1.msra.mxu0 0.0
        %2216 = vmatprep.subr.mxu0 0.0
        %2217 = vmatpush1.msra.mxu0 0.0
        %2218 = vmatprep.subr.mxu0 0.0
        %2219 = vmatpush1.msra.mxu0 0.0
        %2220 = vmatprep.subr.mxu0 0.0
        %2221 = vmatpush1.msra.mxu0 0.0
        %2222 = vmatprep.subr.mxu0 0.0
        %2223 = vmatpush1.msra.mxu0 0.0
        %2224 = vmatprep.subr.mxu0 0.0
        %2225 = vmatpush1.msra.mxu0 0.0
        %2226 = vmatprep.subr.mxu0 0.0
        %2227 = vmatpush1.msra.mxu0 0.0
        %2228 = vmatprep.subr.mxu0 0.0
        %2229 = vmatpush1.msra.mxu0 0.0
        %2230 = vmatprep.subr.mxu0 0.0
        %2231 = vmatpush1.msra.mxu0 %v2199
        %2232 = vmatprep.subr.mxu0 0.0
        %2233 = vmatpush1.msra.mxu0 %v2198
        %2234 = vmatprep.subr.mxu0 0.0
        %2235 = vmatpush1.msra.mxu0 %v2197
        %2236 = vmatprep.subr.mxu0 0.0
        %2237 = vmatpush1.msra.mxu0 %v2196
        %2238 = vmatprep.subr.mxu0 0.0
        %2239 = vmatpush2.msra.mxu0 0.0
        %2240 = vmatprep.subr.mxu0 0.0
        %2241 = vmatpush2.msra.mxu0 0.0
        %2242 = vmatprep.subr.mxu0 0.0
        %2243 = vmatpush2.msra.mxu0 0.0
        %2244 = vmatprep.subr.mxu0 0.0
        %2245 = vmatpush2.msra.mxu0 0.0
        %2246 = vmatprep.subr.mxu0 0.0
        %2247 = vmatpush2.msra.mxu0 0.0
        %2248 = vmatprep.subr.mxu0 0.0
        %2249 = vmatpush2.msra.mxu0 0.0
        %2250 = vmatprep.subr.mxu0 0.0
        %2251 = vmatpush2.msra.mxu0 0.0
        %2252 = vmatprep.subr.mxu0 0.0
        %2253 = vmatpush2.msra.mxu0 0.0
        %2254 = vmatprep.subr.mxu0 0.0
        %2255 = vmatpush2.msra.mxu0 0.0
        %2256 = vmatprep.subr.mxu0 0.0
        %2257 = vmatpush2.msra.mxu0 0.0
        %2258 = vmatprep.subr.mxu0 0.0
        %2259 = vmatpush2.msra.mxu0 0.0
        %2260 = vmatprep.subr.mxu0 0.0
        %2261 = vmatpush2.msra.mxu0 0.0
        %2262 = vmatprep.subr.mxu0 0.0
        %2263 = vmatpush2.msra.mxu0 0.0
        %2264 = vmatprep.subr.mxu0 0.0
        %2265 = vmatpush2.msra.mxu0 0.0
        %2266 = vmatprep.subr.mxu0 0.0
        %2267 = vmatpush2.msra.mxu0 0.0
        %2268 = vmatprep.subr.mxu0 0.0
        %2269 = vmatpush2.msra.mxu0 0.0
        %2270 = vmatprep.mubr.f32.mxu0 0.0
        %2271 = vmatmul.mubr.f32.gmra.mxu0 %v2201
        %v2272 = vpop.f32.mrf.mxu0
        %v2273 = vadd.f32 0.0, %v2272
        %v2274 = vpop.f32.mrf.mxu0
        %2275 = vmatprep.mubr.f32.mxu0 0.0
        %2276 = vmatmul.mubr.f32.gmra.mxu0 %v2204
        %v2277 = vpop.f32.mrf.mxu0
        %v2278 = vadd.f32 0.0, %v2277
        %v2279 = vpop.f32.mrf.mxu0
        %2280 = vdwg.mxu0
        %v2281 = vpack.c.bf16 %v2278, %v2273
        %v2283 = vunpack.c.l.b16 %v2281
        %v2284 = vunpack.c.h.b16 %v2281
        %v2285 = vpack.c.b16 %v2283, %v2283
        %v2286 = vpack.c.b16 %v2284, %v2284
        %2287 = vrot.lane.b32.xlu0 %v2285, 96
        %v2288 = vpop.permute.xlu0 %2287
        %2289 = vrot.lane.b32.xlu0 %v2286, 96
        %v2290 = vpop.permute.xlu0 %2289
        %2293 = vst.msk [vmem:[#allocation2] sm:$0xf] %vm1023, %v2288
        %2294 = vst.msk [vmem:[#allocation2 + $0x4] sm:$0xf] %vm1023, %v2290
        %2295 = vrot.lane.b32.xlu0 %v2285, 64
        %v2296 = vpop.permute.xlu0 %2295
        %2297 = vrot.lane.b32.xlu0 %v2286, 64
        %v2298 = vpop.permute.xlu0 %2297
        %2301 = vst.msk [vmem:[#allocation2 + $0x8] sm:$0xf] %vm1023, %v2296
        %2302 = vst.msk [vmem:[#allocation2 + $0xc] sm:$0xf] %vm1023, %v2298
        %2303 = vrot.lane.b32.xlu0 %v2285, 32
        %v2304 = vpop.permute.xlu0 %2303
        %2305 = vrot.lane.b32.xlu0 %v2286, 32
        %v2306 = vpop.permute.xlu0 %2305
        %2309 = vst.msk [vmem:[#allocation2 + $0x10] sm:$0xf] %vm1023, %v2304
        %2310 = vst.msk [vmem:[#allocation2 + $0x14] sm:$0xf] %vm1023, %v2306
        %v2311 = vld [vmem:[#allocation2] sm:$0xf]
        %v2312 = vld [vmem:[#allocation2 + $0x4] sm:$0xf]
        %v2313 = vld [vmem:[#allocation2 + $0x8] sm:$0xf]
        %v2314 = vld [vmem:[#allocation2 + $0xc] sm:$0xf]
        %v2315 = vld [vmem:[#allocation2 + $0x10] sm:$0xf]
        %v2316 = vld [vmem:[#allocation2 + $0x14] sm:$0xf]
        %v2323 = vunpack.c.l.b16 %v2311
        %v2324 = vunpack.c.l.b16 %v2312
        %v2325 = vunpack.c.l.b16 %v2313
        %v2326 = vunpack.c.l.b16 %v2314
        %v2327 = vunpack.c.l.b16 %v2315
        %v2328 = vunpack.c.l.b16 %v2316
        %v2329 = vpack.c.b16 %v2324, %v2323
        %v2330 = vpack.c.b16 %v2326, %v2325
        %v2331 = vpack.c.b16 %v2328, %v2327
        %2335 = vmatprep.subr.bf16.mxu0 0
        %2336 = vmatpush1.bf16.msra.mxu0 0
        %2337 = vmatprep.subr.bf16.mxu0 0
        %2338 = vmatpush1.bf16.msra.mxu0 0
        %2339 = vmatprep.subr.bf16.mxu0 0
        %2340 = vmatpush1.bf16.msra.mxu0 0
        %2341 = vmatprep.subr.bf16.mxu0 0
        %2342 = vmatpush1.bf16.msra.mxu0 0
        %2343 = vmatprep.subr.bf16.mxu0 0
        %2344 = vmatpush1.bf16.msra.mxu0 0
        %2345 = vmatprep.subr.bf16.mxu0 0
        %2346 = vmatpush1.bf16.msra.mxu0 %v2331
        %2347 = vmatprep.subr.bf16.mxu0 0
        %2348 = vmatpush1.bf16.msra.mxu0 %v2330
        %2349 = vmatprep.subr.bf16.mxu0 0
        %2350 = vmatpush1.bf16.msra.mxu0 %v2329
        %2351 = vmatprep.subr.bf16.mxu0 0
        %2352 = vmatpush2.bf16.msra.mxu0 0
        %2353 = vmatprep.subr.bf16.mxu0 0
        %2354 = vmatpush2.bf16.msra.mxu0 0
        %2355 = vmatprep.subr.bf16.mxu0 0
        %2356 = vmatpush2.bf16.msra.mxu0 0
        %2357 = vmatprep.subr.bf16.mxu0 0
        %2358 = vmatpush2.bf16.msra.mxu0 0
        %2359 = vmatprep.subr.bf16.mxu0 0
        %2360 = vmatpush2.bf16.msra.mxu0 0
        %2361 = vmatprep.subr.bf16.mxu0 0
        %2362 = vmatpush2.bf16.msra.mxu0 0
        %2363 = vmatprep.subr.bf16.mxu0 0
        %2364 = vmatpush2.bf16.msra.mxu0 0
        %2365 = vmatprep.subr.bf16.mxu0 0
        %2366 = vmatpush2.bf16.msra.mxu0 0
        %2367 = vmatprep.mubr.bf16.mxu0 0
        %2368 = vmatmul.mubr.bf16.gmra.mxu0 %v1073
        %v2369 = vpop.f32.mrf.mxu0
        %v2370 = vadd.f32 0.0, %v2369
        %v2371 = vpop.f32.mrf.mxu0
        %v2372 = vpop.f32.mrf.mxu0
        %v2373 = vadd.f32 0.0, %v2372
        %v2374 = vpop.f32.mrf.mxu0
        %2375 = vdwg.mxu0
        %v2376 = vld [vmem:[%s16] sm:$0x1]
        %v2378 = vlaneseq
        %v2379 = vshrl.u32 %v2378, 7
        %v2380 = vsub.s32 0, %v2379
        %v2381 = vrot.slane %v2376, %v2380
        %v2383 = vadd.f32 %v2273, %v2381
        %v2384 = vadd.f32 %v2278, %v2381
        %v2385 = vadd.f32 %v2383, %v2370
        %v2386 = vadd.f32 %v2384, %v2373
        %v2387 = vtanh.pop %v2385
        %v2388 = vtanh.pop %v2386
        %2389 = vmatprep.subr.mxu0 0.0
        %2390 = vmatpush1.msra.mxu0 0.0
        %2391 = vmatprep.subr.mxu0 0.0
        %2392 = vmatpush1.msra.mxu0 0.0
        %2393 = vmatprep.subr.mxu0 0.0
        %2394 = vmatpush1.msra.mxu0 0.0
        %2395 = vmatprep.subr.mxu0 0.0
        %2396 = vmatpush1.msra.mxu0 0.0
        %2397 = vmatprep.subr.mxu0 0.0
        %2398 = vmatpush1.msra.mxu0 0.0
        %2399 = vmatprep.subr.mxu0 0.0
        %2400 = vmatpush1.msra.mxu0 0.0
        %2401 = vmatprep.subr.mxu0 0.0
        %2402 = vmatpush1.msra.mxu0 0.0
        %2403 = vmatprep.subr.mxu0 0.0
        %2404 = vmatpush1.msra.mxu0 0.0
        %2405 = vmatprep.subr.mxu0 0.0
        %2406 = vmatpush1.msra.mxu0 0.0
        %2407 = vmatprep.subr.mxu0 0.0
        %2408 = vmatpush1.msra.mxu0 0.0
        %2409 = vmatprep.subr.mxu0 0.0
        %2410 = vmatpush1.msra.mxu0 0.0
        %2411 = vmatprep.subr.mxu0 0.0
        %2412 = vmatpush1.msra.mxu0 0.0
        %2413 = vmatprep.subr.mxu0 0.0
        %2414 = vmatpush1.msra.mxu0 0.0
        %2415 = vmatprep.subr.mxu0 0.0
        %2416 = vmatpush1.msra.mxu0 0.0
        %2417 = vmatprep.subr.mxu0 0.0
        %2418 = vmatpush1.msra.mxu0 %v2388
        %2419 = vmatprep.subr.mxu0 0.0
        %2420 = vmatpush1.msra.mxu0 %v2387
        %2421 = vmatprep.subr.mxu0 0.0
        %2422 = vmatpush2.msra.mxu0 0.0
        %2423 = vmatprep.subr.mxu0 0.0
        %2424 = vmatpush2.msra.mxu0 0.0
        %2425 = vmatprep.subr.mxu0 0.0
        %2426 = vmatpush2.msra.mxu0 0.0
        %2427 = vmatprep.subr.mxu0 0.0
        %2428 = vmatpush2.msra.mxu0 0.0
        %2429 = vmatprep.subr.mxu0 0.0
        %2430 = vmatpush2.msra.mxu0 0.0
        %2431 = vmatprep.subr.mxu0 0.0
        %2432 = vmatpush2.msra.mxu0 0.0
        %2433 = vmatprep.subr.mxu0 0.0
        %2434 = vmatpush2.msra.mxu0 0.0
        %2435 = vmatprep.subr.mxu0 0.0
        %2436 = vmatpush2.msra.mxu0 0.0
        %2437 = vmatprep.subr.mxu0 0.0
        %2438 = vmatpush2.msra.mxu0 0.0
        %2439 = vmatprep.subr.mxu0 0.0
        %2440 = vmatpush2.msra.mxu0 0.0
        %2441 = vmatprep.subr.mxu0 0.0
        %2442 = vmatpush2.msra.mxu0 0.0
        %2443 = vmatprep.subr.mxu0 0.0
        %2444 = vmatpush2.msra.mxu0 0.0
        %2445 = vmatprep.subr.mxu0 0.0
        %2446 = vmatpush2.msra.mxu0 0.0
        %2447 = vmatprep.subr.mxu0 0.0
        %2448 = vmatpush2.msra.mxu0 0.0
        %2449 = vmatprep.subr.mxu0 0.0
        %2450 = vmatpush2.msra.mxu0 0.0
        %2451 = vmatprep.subr.mxu0 0.0
        %2452 = vmatpush2.msra.mxu0 0.0
        %2453 = vmatprep.mubr.f32.mxu0 0.0
        %2454 = vmatmul.mubr.f32.gmra.mxu0 %v1131
        %v2455 = vpop.f32.mrf.mxu0
        %v2456 = vadd.f32 0.0, %v2455
        %v2457 = vpop.f32.mrf.mxu0
        %2458 = vdwg.mxu0
        %v2459 = vld [vmem:[#allocation20] sm:$0xff]
        %v2460 = vld [vmem:[#allocation20 + $0x8] sm:$0xff]
        %v2461 = vld [vmem:[#allocation20 + $0x10] sm:$0xff]
        %v2462 = vld [vmem:[#allocation20 + $0x18] sm:$0xff]
        %v2464 = vsel %vm1213, %v2456, 0
        %2466 = vmatprep.subr.mxu0 0.0
        %2467 = vmatpush1.msra.mxu0 0.0
        %2468 = vmatprep.subr.mxu0 0.0
        %2469 = vmatpush1.msra.mxu0 0.0
        %2470 = vmatprep.subr.mxu0 0.0
        %2471 = vmatpush1.msra.mxu0 0.0
        %2472 = vmatprep.subr.mxu0 0.0
        %2473 = vmatpush1.msra.mxu0 0.0
        %2474 = vmatprep.subr.mxu0 0.0
        %2475 = vmatpush1.msra.mxu0 0.0
        %2476 = vmatprep.subr.mxu0 0.0
        %2477 = vmatpush1.msra.mxu0 0.0
        %2478 = vmatprep.subr.mxu0 0.0
        %2479 = vmatpush1.msra.mxu0 0.0
        %2480 = vmatprep.subr.mxu0 0.0
        %2481 = vmatpush1.msra.mxu0 0.0
        %2482 = vmatprep.subr.mxu0 0.0
        %2483 = vmatpush1.msra.mxu0 0.0
        %2484 = vmatprep.subr.mxu0 0.0
        %2485 = vmatpush1.msra.mxu0 0.0
        %2486 = vmatprep.subr.mxu0 0.0
        %2487 = vmatpush1.msra.mxu0 0.0
        %2488 = vmatprep.subr.mxu0 0.0
        %2489 = vmatpush1.msra.mxu0 0.0
        %2490 = vmatprep.subr.mxu0 0.0
        %2491 = vmatpush1.msra.mxu0 %v2462
        %2492 = vmatprep.subr.mxu0 0.0
        %2493 = vmatpush1.msra.mxu0 %v2461
        %2494 = vmatprep.subr.mxu0 0.0
        %2495 = vmatpush1.msra.mxu0 %v2460
        %2496 = vmatprep.subr.mxu0 0.0
        %2497 = vmatpush1.msra.mxu0 %v2459
        %2498 = vmatprep.subr.mxu0 0.0
        %2499 = vmatpush2.msra.mxu0 0.0
        %2500 = vmatprep.subr.mxu0 0.0
        %2501 = vmatpush2.msra.mxu0 0.0
        %2502 = vmatprep.subr.mxu0 0.0
        %2503 = vmatpush2.msra.mxu0 0.0
        %2504 = vmatprep.subr.mxu0 0.0
        %2505 = vmatpush2.msra.mxu0 0.0
        %2506 = vmatprep.subr.mxu0 0.0
        %2507 = vmatpush2.msra.mxu0 0.0
        %2508 = vmatprep.subr.mxu0 0.0
        %2509 = vmatpush2.msra.mxu0 0.0
        %2510 = vmatprep.subr.mxu0 0.0
        %2511 = vmatpush2.msra.mxu0 0.0
        %2512 = vmatprep.subr.mxu0 0.0
        %2513 = vmatpush2.msra.mxu0 0.0
        %2514 = vmatprep.subr.mxu0 0.0
        %2515 = vmatpush2.msra.mxu0 0.0
        %2516 = vmatprep.subr.mxu0 0.0
        %2517 = vmatpush2.msra.mxu0 0.0
        %2518 = vmatprep.subr.mxu0 0.0
        %2519 = vmatpush2.msra.mxu0 0.0
        %2520 = vmatprep.subr.mxu0 0.0
        %2521 = vmatpush2.msra.mxu0 0.0
        %2522 = vmatprep.subr.mxu0 0.0
        %2523 = vmatpush2.msra.mxu0 0.0
        %2524 = vmatprep.subr.mxu0 0.0
        %2525 = vmatpush2.msra.mxu0 0.0
        %2526 = vmatprep.subr.mxu0 0.0
        %2527 = vmatpush2.msra.mxu0 0.0
        %2528 = vmatprep.subr.mxu0 0.0
        %2529 = vmatpush2.msra.mxu0 0.0
        %2530 = vmatprep.mubr.f32.mxu0 0.0
        %2531 = vmatmul.mubr.f32.gmra.mxu0 %v2464
        %v2532 = vpop.f32.mrf.mxu0
        %v2533 = vadd.f32 0.0, %v2532
        %v2534 = vpop.f32.mrf.mxu0
        %2535 = vdwg.mxu0
        %v2536 = vadd.f32 %v2195, %v2533
        %v2537 = vld [vmem:[#allocation21] sm:$0xff]
        %v2538 = vld [vmem:[#allocation21 + $0x8] sm:$0xff]
        %v2539 = vld [vmem:[#allocation21 + $0x10] sm:$0xff]
        %v2540 = vld [vmem:[#allocation21 + $0x18] sm:$0xff]
        %v2541 = vrot.slane %v2456, 4
        %v2542 = vsel %vm1213, %v2541, 0
        %2544 = vmatprep.subr.mxu0 0.0
        %2545 = vmatpush1.msra.mxu0 0.0
        %2546 = vmatprep.subr.mxu0 0.0
        %2547 = vmatpush1.msra.mxu0 0.0
        %2548 = vmatprep.subr.mxu0 0.0
        %2549 = vmatpush1.msra.mxu0 0.0
        %2550 = vmatprep.subr.mxu0 0.0
        %2551 = vmatpush1.msra.mxu0 0.0
        %2552 = vmatprep.subr.mxu0 0.0
        %2553 = vmatpush1.msra.mxu0 0.0
        %2554 = vmatprep.subr.mxu0 0.0
        %2555 = vmatpush1.msra.mxu0 0.0
        %2556 = vmatprep.subr.mxu0 0.0
        %2557 = vmatpush1.msra.mxu0 0.0
        %2558 = vmatprep.subr.mxu0 0.0
        %2559 = vmatpush1.msra.mxu0 0.0
        %2560 = vmatprep.subr.mxu0 0.0
        %2561 = vmatpush1.msra.mxu0 0.0
        %2562 = vmatprep.subr.mxu0 0.0
        %2563 = vmatpush1.msra.mxu0 0.0
        %2564 = vmatprep.subr.mxu0 0.0
        %2565 = vmatpush1.msra.mxu0 0.0
        %2566 = vmatprep.subr.mxu0 0.0
        %2567 = vmatpush1.msra.mxu0 0.0
        %2568 = vmatprep.subr.mxu0 0.0
        %2569 = vmatpush1.msra.mxu0 %v2540
        %2570 = vmatprep.subr.mxu0 0.0
        %2571 = vmatpush1.msra.mxu0 %v2539
        %2572 = vmatprep.subr.mxu0 0.0
        %2573 = vmatpush1.msra.mxu0 %v2538
        %2574 = vmatprep.subr.mxu0 0.0
        %2575 = vmatpush1.msra.mxu0 %v2537
        %2576 = vmatprep.subr.mxu0 0.0
        %2577 = vmatpush2.msra.mxu0 0.0
        %2578 = vmatprep.subr.mxu0 0.0
        %2579 = vmatpush2.msra.mxu0 0.0
        %2580 = vmatprep.subr.mxu0 0.0
        %2581 = vmatpush2.msra.mxu0 0.0
        %2582 = vmatprep.subr.mxu0 0.0
        %2583 = vmatpush2.msra.mxu0 0.0
        %2584 = vmatprep.subr.mxu0 0.0
        %2585 = vmatpush2.msra.mxu0 0.0
        %2586 = vmatprep.subr.mxu0 0.0
        %2587 = vmatpush2.msra.mxu0 0.0
        %2588 = vmatprep.subr.mxu0 0.0
        %2589 = vmatpush2.msra.mxu0 0.0
        %2590 = vmatprep.subr.mxu0 0.0
        %2591 = vmatpush2.msra.mxu0 0.0
        %2592 = vmatprep.subr.mxu0 0.0
        %2593 = vmatpush2.msra.mxu0 0.0
        %2594 = vmatprep.subr.mxu0 0.0
        %2595 = vmatpush2.msra.mxu0 0.0
        %2596 = vmatprep.subr.mxu0 0.0
        %2597 = vmatpush2.msra.mxu0 0.0
        %2598 = vmatprep.subr.mxu0 0.0
        %2599 = vmatpush2.msra.mxu0 0.0
        %2600 = vmatprep.subr.mxu0 0.0
        %2601 = vmatpush2.msra.mxu0 0.0
        %2602 = vmatprep.subr.mxu0 0.0
        %2603 = vmatpush2.msra.mxu0 0.0
        %2604 = vmatprep.subr.mxu0 0.0
        %2605 = vmatpush2.msra.mxu0 0.0
        %2606 = vmatprep.subr.mxu0 0.0
        %2607 = vmatpush2.msra.mxu0 0.0
        %2608 = vmatprep.mubr.f32.mxu0 0.0
        %2609 = vmatmul.mubr.f32.gmra.mxu0 %v2542
        %v2610 = vpop.f32.mrf.mxu0
        %v2611 = vadd.f32 0.0, %v2610
        %v2612 = vpop.f32.mrf.mxu0
        %2613 = vdwg.mxu0
        %v2614 = vadd.f32 %v2536, %v2611
        %v2615 = vld [vmem:[#allocation23] sm:$0x1]
        %v2617 = vlaneseq
        %v2618 = vshrl.u32 %v2617, 7
        %v2619 = vsub.s32 0, %v2618
        %v2620 = vrot.slane %v2615, %v2619
        %v2622 = vadd.f32 %v2614, %v2620
        %v2623 = vmax.f32 %v2622, 0.0
        %v2624 = vld [vmem:[%s20] sm:$0xff]
        %v2625 = vld [vmem:[%s20 + $0x8] sm:$0xff]
        %v2626 = vld [vmem:[%s20 + $0x10] sm:$0xff]
        %v2627 = vld [vmem:[%s20 + $0x18] sm:$0xff]
        %v2628 = vld [vmem:[%s20 + $0x20] sm:$0xff]
        %v2629 = vld [vmem:[%s20 + $0x28] sm:$0xff]
        %v2630 = vld [vmem:[%s20 + $0x30] sm:$0xff]
        %v2631 = vld [vmem:[%s20 + $0x38] sm:$0xff]
        %v2632 = vld [vmem:[%s20 + $0x40] sm:$0xff]
        %v2633 = vld [vmem:[%s20 + $0x48] sm:$0xff]
        %v2634 = vld [vmem:[%s20 + $0x50] sm:$0xff]
        %v2635 = vld [vmem:[%s20 + $0x58] sm:$0xff]
        %v2636 = vld [vmem:[%s20 + $0x60] sm:$0xff]
        %v2637 = vld [vmem:[%s20 + $0x68] sm:$0xff]
        %v2638 = vld [vmem:[%s20 + $0x70] sm:$0xff]
        %v2639 = vld [vmem:[%s20 + $0x78] sm:$0xff]
        %v2640 = vld [vmem:[#allocation24] sm:$0x1]
        %v2642 = vlaneseq
        %v2643 = vshrl.u32 %v2642, 7
        %v2644 = vsub.s32 0, %v2643
        %v2645 = vrot.slane %v2640, %v2644
        %2647 = vmatprep.subr.mxu0 0.0
        %2648 = vmatpush1.msra.mxu0 %v2639
        %2649 = vmatprep.subr.mxu0 0.0
        %2650 = vmatpush1.msra.mxu0 %v2638
        %2651 = vmatprep.subr.mxu0 0.0
        %2652 = vmatpush1.msra.mxu0 %v2637
        %2653 = vmatprep.subr.mxu0 0.0
        %2654 = vmatpush1.msra.mxu0 %v2636
        %2655 = vmatprep.subr.mxu0 0.0
        %2656 = vmatpush1.msra.mxu0 %v2635
        %2657 = vmatprep.subr.mxu0 0.0
        %2658 = vmatpush1.msra.mxu0 %v2634
        %2659 = vmatprep.subr.mxu0 0.0
        %2660 = vmatpush1.msra.mxu0 %v2633
        %2661 = vmatprep.subr.mxu0 0.0
        %2662 = vmatpush1.msra.mxu0 %v2632
        %2663 = vmatprep.subr.mxu0 0.0
        %2664 = vmatpush1.msra.mxu0 %v2631
        %2665 = vmatprep.subr.mxu0 0.0
        %2666 = vmatpush1.msra.mxu0 %v2630
        %2667 = vmatprep.subr.mxu0 0.0
        %2668 = vmatpush1.msra.mxu0 %v2629
        %2669 = vmatprep.subr.mxu0 0.0
        %2670 = vmatpush1.msra.mxu0 %v2628
        %2671 = vmatprep.subr.mxu0 0.0
        %2672 = vmatpush1.msra.mxu0 %v2627
        %2673 = vmatprep.subr.mxu0 0.0
        %2674 = vmatpush1.msra.mxu0 %v2626
        %2675 = vmatprep.subr.mxu0 0.0
        %2676 = vmatpush1.msra.mxu0 %v2625
        %2677 = vmatprep.subr.mxu0 0.0
        %2678 = vmatpush1.msra.mxu0 %v2624
        %2679 = vmatprep.subr.mxu0 0.0
        %2680 = vmatpush2.msra.mxu0 0.0
        %2681 = vmatprep.subr.mxu0 0.0
        %2682 = vmatpush2.msra.mxu0 0.0
        %2683 = vmatprep.subr.mxu0 0.0
        %2684 = vmatpush2.msra.mxu0 0.0
        %2685 = vmatprep.subr.mxu0 0.0
        %2686 = vmatpush2.msra.mxu0 0.0
        %2687 = vmatprep.subr.mxu0 0.0
        %2688 = vmatpush2.msra.mxu0 0.0
        %2689 = vmatprep.subr.mxu0 0.0
        %2690 = vmatpush2.msra.mxu0 0.0
        %2691 = vmatprep.subr.mxu0 0.0
        %2692 = vmatpush2.msra.mxu0 0.0
        %2693 = vmatprep.subr.mxu0 0.0
        %2694 = vmatpush2.msra.mxu0 0.0
        %2695 = vmatprep.subr.mxu0 0.0
        %2696 = vmatpush2.msra.mxu0 0.0
        %2697 = vmatprep.subr.mxu0 0.0
        %2698 = vmatpush2.msra.mxu0 0.0
        %2699 = vmatprep.subr.mxu0 0.0
        %2700 = vmatpush2.msra.mxu0 0.0
        %2701 = vmatprep.subr.mxu0 0.0
        %2702 = vmatpush2.msra.mxu0 0.0
        %2703 = vmatprep.subr.mxu0 0.0
        %2704 = vmatpush2.msra.mxu0 0.0
        %2705 = vmatprep.subr.mxu0 0.0
        %2706 = vmatpush2.msra.mxu0 0.0
        %2707 = vmatprep.subr.mxu0 0.0
        %2708 = vmatpush2.msra.mxu0 0.0
        %2709 = vmatprep.subr.mxu0 0.0
        %2710 = vmatpush2.msra.mxu0 0.0
        %2711 = vmatprep.mubr.f32.mxu0 0.0
        %2712 = vmatmul.mubr.f32.gmra.mxu0 %v2623
        %v2713 = vpop.f32.mrf.mxu0
        %v2714 = vadd.f32 %v2645, %v2713
        %v2715 = vpop.f32.mrf.mxu0
        %2716 = vdwg.mxu0
        %v2717 = vxor.u32 %v2714, 2147483648
        %v2718 = vmul.f32 %v2717, 1.442695
        %v2719 = vpow.pop %v2718
        %v2720 = vadd.f32 %v2719, 1.0
        %v2721 = vrcp.pop %v2720
        %v2722 = vmul.f32 1.0, %v2721
        %2723 = vst [vmem:[%s911] sm:$0xf] %v2722
        %s2724 = sand.u32 %s531, 1
        %s2725 = scalar_lea.sflag [#allocation5], %s2724
        %s2726 = sand.u32 %s531, 1
        %s2727 = smul.addr %s2726, 4
        %s2728 = scalar_lea.vmem [#allocation26], %s2727
        // Predicated region
        $region165: #{tpu_custom_call.1} parent=107 // pred_check
          %p2729 = pneg %p541
        $region166: #{tpu_custom_call.1} parent=107 // pred_check_branch
          %2731 = sbr.rel (%p2729) target = $region168
        $region167: #{tpu_custom_call.1} parent=107 // pred_region
          %s2733 = ssub.s32 64, 64
          %2734 = vsyncadd %s2725, %s2733
          %s2735 = smul.addr %s46, 64
          %s2736 = scalar_lea.hbm %s22, %s2735
          %s2738 = sshll.u32 %s2728, 4
          %s2739 = int_to_ptr.vmem [resolvable:$true] %s2738
          %2741 = dma.vmem_to_hbm [thread:$0]  %s2739, 64, %s2736, %s2725
        $region168: #{tpu_custom_call.1} parent=107 // pred_fallthru
          _
      $region108: #{tpu_custom_call.1} parent=5 // pred_fallthru
        _
      %p2742 = scmp.le.s32.totalorder 2, %s41
      // Predicated region
      $region169: #{tpu_custom_call.1} parent=5 // pred_check
        %p2743 = pneg %p2742
      $region170: #{tpu_custom_call.1} parent=5 // pred_check_branch
        %2745 = sbr.rel (%p2743) target = $region172
      $region171: #{tpu_custom_call.1} parent=5 // pred_region
        %s2746 = ssub.s32 %s41, 2
        // Predicated region
        $region173: #{tpu_custom_call.1} parent=171 // pred_check
          %p2747 = pneg %p547
        $region174: #{tpu_custom_call.1} parent=171 // pred_check_branch
          %2749 = sbr.rel (%p2747) target = $region176
        $region175: #{tpu_custom_call.1} parent=171 // pred_region
          %s2750 = sand.u32 %s532, 1
          %s2751 = scalar_lea.sflag [#allocation5], %s2750
          %s2752 = sand.u32 %s532, 1
          %s2753 = smul.addr %s2752, 4
          %s2754 = scalar_lea.vmem [#allocation26], %s2753
          %2755 = dma.done %s2751, 64
        $region176: #{tpu_custom_call.1} parent=171 // pred_fallthru
          _
      $region172: #{tpu_custom_call.1} parent=5 // pred_fallthru
        _
    $region6: #{tpu_custom_call.1} parent=1 // loop_footer
      %s45 = sadd.s32 1, %s41
    $region7: #{tpu_custom_call.1} parent=1 // loop_footer_branch
      %40 = sbr.rel target = $region3
    $region8: #{tpu_custom_call.1} parent=1 // loop_exit
      _
    %2756 = vsyncpa [#allocation4], 1
    %s2757 = scalar_lea.sflag [#allocation4], 1
    %2758 = vsyncpa %s2757, 1
    %2759 = vsyncpa [#allocation7], 1
    %2760 = vsyncpa [#allocation10], 1
    %2761 = vsyncpa [#allocation13], 1
    %2762 = vsyncpa [#allocation16], 1
    %2763 = vsyncpa [#allocation19], 1
    %2764 = vsyncpa [#allocation22], 1
    %2765 = vsyncpa [#allocation25], 1
    %2766 = vsyncpa [#allocation5], 1
    %s2767 = scalar_lea.sflag [#allocation5], 1
    %2768 = vsyncpa %s2767, 1

</llo_original>
